<compile_context>
chip_gen: v5e
topology: v5e:2x2
jax: 0.10.0
libtpu: 0.0.40
codegen_flags: <defaults>
</compile_context>

<pallas_src>
import functools

import jax
import jax.numpy as jnp
from jax import lax
from jax.experimental import pallas as pl
from jax.experimental.pallas import tpu as pltpu


# ----------------------------------------------------------------------------
# small helpers
# ----------------------------------------------------------------------------
def _round_up(x, m):
    return ((x + m - 1) // m) * m


def _spec(shape, index_map, buffers=None):
    """BlockSpec with optional pipeline_mode=pl.Buffered(n) (graceful fallback)."""
    if buffers is not None and hasattr(pl, "Buffered"):
        return pl.BlockSpec(shape, index_map, pipeline_mode=pl.Buffered(buffers))
    return pl.BlockSpec(shape, index_map)


def _pad_2d(a, rows, cols):
    a = jnp.asarray(a, jnp.float32)
    return jnp.pad(a, ((0, rows - a.shape[0]), (0, cols - a.shape[1])))


# ----------------------------------------------------------------------------
# Tiled Linear kernel:  y = x @ W^T + b    (bf16 MXU operands, f32 accumulate)
# Used for the hoisted LSTM input projection and for the final fc layer.
# ----------------------------------------------------------------------------
def _linear_kernel(x_ref, w_ref, b_ref, o_ref):
    acc = jnp.dot(x_ref[...].astype(jnp.bfloat16), w_ref[...],
                  preferred_element_type=jnp.float32)
    o_ref[...] = (acc + b_ref[...]).astype(o_ref.dtype)


def linear(x, w, b, *, out_dtype=jnp.float32, block_rows=256, block_cols=512):
    """x: (N, K) f32, w: (O, K), b: (O,) -> (N, O) in out_dtype.

    Tiled over rows (and over O when O is large) so VMEM stays bounded on
    v5e (16 MiB default scoped limit) and v7x (64 MiB physical).
    """
    N, K = x.shape
    O = w.shape[0]
    w_t = jnp.asarray(w, jnp.bfloat16).T               # (K, O) bf16 MXU operand
    b2 = jnp.asarray(b, jnp.float32).reshape(1, O)

    # row tiling
    if N <= block_rows:
        bn, Np = N, N
    else:
        bn = block_rows                                 # multiple of 8
        Np = _round_up(N, bn)
    xp = x if Np == N else jnp.pad(x, ((0, Np - N), (0, 0)))

    # output-column tiling (only when O is large and divisible)
    bo = block_cols if (O > block_cols and O % block_cols == 0) else O
    tiled_o = bo != O
    inv_buf = None if tiled_o else 1                    # weight/bias invariant?

    yp = pl.pallas_call(
        _linear_kernel,
        grid_spec=pltpu.PrefetchScalarGridSpec(
            num_scalar_prefetch=0,
            grid=(Np // bn, O // bo),
            in_specs=[
                pl.BlockSpec((bn, K), lambda i, j: (i, 0)),          # x rows
                _spec((K, bo), lambda i, j: (0, j), buffers=inv_buf),  # W^T
                _spec((1, bo), lambda i, j: (0, j), buffers=inv_buf),  # bias
            ],
            out_specs=pl.BlockSpec((bn, bo), lambda i, j: (i, j)),
        ),
        out_shape=jax.ShapeDtypeStruct((Np, O), out_dtype),
        compiler_params=pltpu.CompilerParams(
            dimension_semantics=("parallel", "parallel"),
            vmem_limit_bytes=32 * 1024 * 1024),
    )(xp, w_t, b2)
    return yp if Np == N else yp[:N]


# ----------------------------------------------------------------------------
# Pallas kernel: LSTM recurrence, chunked in time (and optionally split in B).
# Grid = (num_batch_blocks, Tp // Tc); state lives in VMEM scratch and is
# carried across the (sequential) time axis.  Per step only h @ W_hh^T is
# computed on the MXU; the input projection arrives precomputed (bf16) in g_ref.
# ----------------------------------------------------------------------------
def _lstm_recurrent_kernel(g_ref, h0_ref, c0_ref, whh_ref,
                           out_ref, hT_ref, cT_ref,
                           h_sc, c_sc, *, t_valid, time_chunk, mask_tail):
    c_idx = pl.program_id(1)
    Hp = h_sc.shape[-1]

    @pl.when(c_idx == 0)
    def _():
        h_sc[...] = h0_ref[...]
        c_sc[...] = c0_ref[...]

    def step(i, carry):
        # gates: (B, 4Hp) = precomputed input projection + recurrent matmul
        gates = g_ref[i].astype(jnp.float32) + jnp.dot(
            h_sc[...].astype(jnp.bfloat16), whh_ref[...],
            preferred_element_type=jnp.float32)

        # Hp is a multiple of 128 -> every gate slice / store is lane-dense.
        i_g = jax.nn.sigmoid(gates[:, 0 * Hp:1 * Hp])
        f_g = jax.nn.sigmoid(gates[:, 1 * Hp:2 * Hp])
        g_g = jnp.tanh(gates[:, 2 * Hp:3 * Hp])
        o_g = jax.nn.sigmoid(gates[:, 3 * Hp:4 * Hp])

        c_new = f_g * c_sc[...] + i_g * g_g
        h_new = o_g * jnp.tanh(c_new)

        if mask_tail:
            # T was padded up to a multiple of Tc; do not advance state on
            # padded tail steps (output rows there are sliced away outside).
            keep = (c_idx * time_chunk + i) < t_valid
            c_sc[...] = jnp.where(keep, c_new, c_sc[...])
            h_sc[...] = jnp.where(keep, h_new, h_sc[...])
        else:
            c_sc[...] = c_new
            h_sc[...] = h_new

        out_ref[i] = h_new.astype(out_ref.dtype)
        return carry

    # Capped unroll: keeps LLO scheduling visibility without blowing vregs.
    lax.fori_loop(0, time_chunk, step, 0, unroll=min(8, time_chunk))

    # Final states: write once, on the last time chunk only.
    @pl.when(c_idx == pl.num_programs(1) - 1)
    def _():
        hT_ref[...] = h_sc[...].astype(hT_ref.dtype)
        cT_ref[...] = c_sc[...].astype(cT_ref.dtype)


def lstm_layer(x_tm, h0p, c0p, w_ih, w_hh, b_ih, b_hh, *,
               H, Hp, Bblk, time_chunk=32):
    """One LSTM layer, operating in padded (lane/sublane aligned) space.

    x_tm : (T, Bp, Fin)  time-major, batch already padded to Bp (mult of 8)
    h0p,c0p: (Bp, Hp)    zero-padded initial states
    w_ih : (4H, in), w_hh: (4H, H), b_ih/b_hh: (4H,)  (unpadded PyTorch layout)
    returns (out (T, Bp, Hp) f32, hT (Bp, Hp), cT (Bp, Hp))
    """
    T, Bp, Fin = x_tm.shape

    # --- pad weights PER GATE so gate boundaries land on multiples of Hp -----
    def pad_gate_rows(w):                                   # (4H, K) -> (4Hp, K)
        w = jnp.asarray(w, jnp.float32)
        K = w.shape[-1]
        return jnp.pad(w.reshape(4, H, K),
                       ((0, 0), (0, Hp - H), (0, 0))).reshape(4 * Hp, K)

    w_ih_p = pad_gate_rows(w_ih)
    if w_ih_p.shape[1] != Fin:                               # layer>0: in dim H->Hp
        w_ih_p = jnp.pad(w_ih_p, ((0, 0), (0, Fin - w_ih_p.shape[1])))
    w_hh_p = jnp.pad(pad_gate_rows(w_hh), ((0, 0), (0, Hp - H)))   # (4Hp, Hp)

    bias = jnp.asarray(b_ih, jnp.float32) + jnp.asarray(b_hh, jnp.float32)
    bias_p = jnp.pad(bias.reshape(4, H), ((0, 0), (0, Hp - H))).reshape(4 * Hp)

    # --- 1) hoisted input projection over all timesteps (one big MXU matmul),
    #        gate tensor stored in bf16 to halve the dominant HBM stream. ------
    g = linear(x_tm.reshape(T * Bp, Fin), w_ih_p, bias_p,
               out_dtype=jnp.bfloat16).reshape(T, Bp, 4 * Hp)

    # --- 2) sequential recurrence, chunked over time (pad T, mask tail). -----
    Tc = min(time_chunk, T)
    Tp = _round_up(T, Tc)
    if Tp != T:
        g = jnp.pad(g, ((0, Tp - T), (0, 0), (0, 0)))

    whh_t = w_hh_p.T.astype(jnp.bfloat16)                    # (Hp, 4Hp)
    nb = Bp // Bblk

    kernel = functools.partial(_lstm_recurrent_kernel,
                               t_valid=T, time_chunk=Tc, mask_tail=(Tp != T))

    grid_spec = pltpu.PrefetchScalarGridSpec(
        num_scalar_prefetch=0,
        grid=(nb, Tp // Tc),
        in_specs=[
            pl.BlockSpec((Tc, Bblk, 4 * Hp), lambda b, c: (c, b, 0)),  # gates
            pl.BlockSpec((Bblk, Hp), lambda b, c: (b, 0)),             # h0
            pl.BlockSpec((Bblk, Hp), lambda b, c: (b, 0)),             # c0
            _spec((Hp, 4 * Hp), lambda b, c: (0, 0), buffers=1),       # W_hh^T
        ],
        out_specs=[
            pl.BlockSpec((Tc, Bblk, Hp), lambda b, c: (c, b, 0)),      # h chunk
            pl.BlockSpec((Bblk, Hp), lambda b, c: (b, 0)),             # h_T
            pl.BlockSpec((Bblk, Hp), lambda b, c: (b, 0)),             # c_T
        ],
        scratch_shapes=[
            pltpu.VMEM((Bblk, Hp), jnp.float32),                       # h state
            pltpu.VMEM((Bblk, Hp), jnp.float32),                       # c state
        ],
    )

    out_p, hT, cT = pl.pallas_call(
        kernel,
        grid_spec=grid_spec,
        out_shape=(
            jax.ShapeDtypeStruct((Tp, Bp, Hp), jnp.float32),
            jax.ShapeDtypeStruct((Bp, Hp), jnp.float32),
            jax.ShapeDtypeStruct((Bp, Hp), jnp.float32),
        ),
        compiler_params=pltpu.CompilerParams(
            dimension_semantics=("parallel", "arbitrary"),   # batch || , time seq
            vmem_limit_bytes=32 * 1024 * 1024),
    )(g, h0p, c0p, whh_t)
    return out_p[:T], hT, cT


# ----------------------------------------------------------------------------
# Full module forward (mirrors the PyTorch LSTM module's forward).
# ----------------------------------------------------------------------------
def lstm_module_forward(params, x_bt, hidden_state, *,
                        time_chunk=32, num_batch_blocks=1):
    """x_bt: (B, T, input_size) batch-first; hidden_state = (h0, c0), each
    (num_layers, B, H).  Returns (output (B*T, input_size), (h_n, c_n)).

    num_batch_blocks: set to 2 on v7x (2 TensorCores/chip) when B >= 16 to
    megacore-shard the recurrence; keep 1 on v5e/v6e (single TC) to avoid
    serializing extra time chunks.
    """
    h0_all, c0_all = hidden_state
    B, T, _ = x_bt.shape
    H = h0_all.shape[-1]

    Hp = _round_up(H, 128)                       # lane-aligned hidden size
    Bp = _round_up(B, 8 * num_batch_blocks)      # sublane-aligned batch
    Bblk = Bp // num_batch_blocks

    # TODO(synk): fold these two layout transposes into the recurrent kernel's
    # BlockSpecs (read/write (B, T, .) order directly) to save two HBM passes.
    x_tm = jnp.transpose(x_bt, (1, 0, 2))        # -> time-major (T, B, F)
    if Bp != B:
        x_tm = jnp.pad(x_tm, ((0, 0), (0, Bp - B), (0, 0)))

    h_finals, c_finals = [], []
    layer_in = x_tm                               # (T, Bp, Fin)
    for l, lp in enumerate(params["lstm"]):
        h0p = _pad_2d(h0_all[l], Bp, Hp)
        c0p = _pad_2d(c0_all[l], Bp, Hp)
        layer_out, hT, cT = lstm_layer(layer_in, h0p, c0p,
                                       lp["w_ih"], lp["w_hh"],
                                       lp["b_ih"], lp["b_hh"],
                                       H=H, Hp=Hp, Bblk=Bblk,
                                       time_chunk=time_chunk)
        # Inter-layer dropout omitted (p=0.0 -> identity, eval mode).
        h_finals.append(hT[:B, :H])
        c_finals.append(cT[:B, :H])
        layer_in = layer_out                      # stay in padded (T, Bp, Hp)

    # output.contiguous().view(-1, hidden_size) with batch_first ordering:
    out_bt = jnp.transpose(layer_in[:, :B, :H], (1, 0, 2))   # (B, T, H)
    flat = out_bt.reshape(B * T, H)

    # Dropout(p=0.0) is identity; final fc as a tiled Pallas matmul.
    out = linear(flat, params["fc"]["w"], params["fc"]["b"])

    h_n = jnp.stack(h_finals, axis=0)
    c_n = jnp.stack(c_finals, axis=0)
    return out, (h_n, c_n)


# ----------------------------------------------------------------------------
# Pure-JAX reference (for a loose correctness check; bf16 MXU path deviates
# slightly from exact f32).
# ----------------------------------------------------------------------------
def _reference_forward(params, x_bt, hidden_state):
    h0_all, c0_all = hidden_state
    B, T, _ = x_bt.shape
    H = h0_all.shape[-1]
    layer_in = x_bt
    h_fin, c_fin = [], []
    for l, lp in enumerate(params["lstm"]):
        h, c = h0_all[l], c0_all[l]
        outs = []
        for t in range(T):
            gates = (layer_in[:, t, :] @ lp["w_ih"].T + lp["b_ih"]
                     + h @ lp["w_hh"].T + lp["b_hh"])
            i_g = jax.nn.sigmoid(gates[:, 0 * H:1 * H])
            f_g = jax.nn.sigmoid(gates[:, 1 * H:2 * H])
            g_g = jnp.tanh(gates[:, 2 * H:3 * H])
            o_g = jax.nn.sigmoid(gates[:, 3 * H:4 * H])
            c = f_g * c + i_g * g_g
            h = o_g * jnp.tanh(c)
            outs.append(h)
        layer_in = jnp.stack(outs, axis=1)
        h_fin.append(h)
        c_fin.append(c)
    flat = layer_in.reshape(B * T, H)
    out = flat @ params["fc"]["w"].T + params["fc"]["b"]
    return out, (jnp.stack(h_fin), jnp.stack(c_fin))


# ----------------------------------------------------------------------------
# Deterministic parameter initialization (PyTorch-style U(-1/sqrt(H), 1/sqrt(H))).
# ----------------------------------------------------------------------------
def init_params(key, input_size, hidden_size, num_layers):
    bound = 1.0 / (hidden_size ** 0.5)
    layers = []
    for l in range(num_layers):
        in_f = input_size if l == 0 else hidden_size
        key, k1, k2, k3, k4 = jax.random.split(key, 5)
        layers.append({
            "w_ih": jax.random.uniform(k1, (4 * hidden_size, in_f),
                                       jnp.float32, -bound, bound),
            "w_hh": jax.random.uniform(k2, (4 * hidden_size, hidden_size),
                                       jnp.float32, -bound, bound),
            "b_ih": jax.random.uniform(k3, (4 * hidden_size,),
                                       jnp.float32, -bound, bound),
            "b_hh": jax.random.uniform(k4, (4 * hidden_size,),
                                       jnp.float32, -bound, bound),
        })
    key, k1, k2 = jax.random.split(key, 3)
    fc = {
        "w": jax.random.uniform(k1, (input_size, hidden_size),
                                jnp.float32, -bound, bound),
        "b": jax.random.uniform(k2, (input_size,),
                                jnp.float32, -bound, bound),
    }
    return {"lstm": layers, "fc": fc}


if __name__ == "__main__":
    # Small shapes consistent with the module.
    B, T = 2, 8
    INPUT_SIZE, HIDDEN_SIZE, NUM_LAYERS = 16, 32, 2

    key = jax.random.PRNGKey(0)
    kp, kx, kh, kc = jax.random.split(key, 4)

    params = init_params(kp, INPUT_SIZE, HIDDEN_SIZE, NUM_LAYERS)
    x = jax.random.normal(kx, (B, T, INPUT_SIZE), jnp.float32)
    h0 = jax.random.normal(kh, (NUM_LAYERS, B, HIDDEN_SIZE), jnp.float32)
    c0 = jax.random.normal(kc, (NUM_LAYERS, B, HIDDEN_SIZE), jnp.float32)

    fwd = jax.jit(functools.partial(lstm_module_forward, params))
    out, (h_n, c_n) = fwd(x, (h0, c0))
    jax.block_until_ready((out, h_n, c_n))

    assert out.shape == (B * T, INPUT_SIZE)
    assert h_n.shape == (NUM_LAYERS, B, HIDDEN_SIZE)
    assert c_n.shape == (NUM_LAYERS, B, HIDDEN_SIZE)

    # Loose numerical check vs. pure-JAX f32 reference (bf16 MXU tolerance).
    ref_out, (ref_h, ref_c) = _reference_forward(params, x, (h0, c0))
    tol = 1e-1
    assert float(jnp.max(jnp.abs(out - ref_out))) < tol
    assert float(jnp.max(jnp.abs(h_n - ref_h))) < tol
    assert float(jnp.max(jnp.abs(c_n - ref_c))) < tol

    print("KERNEL_OK")
</pallas_src>

<mosaic_0001>
module attributes {stable_mosaic.version = 11 : i64} {
  func.func @_linear_kernel(%arg0: i32, %arg1: i32, %arg2: memref<64x16xf32, #tpu.memory_space<vmem>>, %arg3: memref<16x512xbf16, #tpu.memory_space<vmem>>, %arg4: memref<1x512xf32, #tpu.memory_space<vmem>>, %arg5: memref<64x512xbf16, #tpu.memory_space<vmem>>) attributes {dimension_semantics = [#tpu.dimension_semantics<parallel>, #tpu.dimension_semantics<parallel>], iteration_bounds = array<i64: 1, 1>, scalar_prefetch = 0 : i64, scratch_operands = 0 : i64, tpu.core_type = #tpu.core_type<tc>, window_params = [{transform_indices = @transform_0, window_bounds = array<i64: 64, 16>}, {pipeline_mode = #tpu.pipeline_mode<synchronous>, transform_indices = @transform_1, window_bounds = array<i64: 16, 512>}, {pipeline_mode = #tpu.pipeline_mode<synchronous>, transform_indices = @transform_2, window_bounds = array<i64: 1, 512>}, {transform_indices = @transform_3, window_bounds = array<i64: 64, 512>}]} {
    %c0 = arith.constant 0 : index
    %c0_0 = arith.constant 0 : index
    %0 = vector.load %arg2[%c0, %c0_0] : memref<64x16xf32, #tpu.memory_space<vmem>>, vector<64x16xf32>
    %1 = arith.truncf %0 : vector<64x16xf32> to vector<64x16xbf16>
    %c0_1 = arith.constant 0 : index
    %c0_2 = arith.constant 0 : index
    %2 = vector.load %arg3[%c0_1, %c0_2] : memref<16x512xbf16, #tpu.memory_space<vmem>>, vector<16x512xbf16>
    %cst = arith.constant dense<0.000000e+00> : vector<64x512xf32>
    %3 = tpu.matmul %1, %2, %cst {dimension_numbers = #tpu.dot_dimension_numbers<[1], [0], [0], [1], [0, 0, 1, 1], [], []>} : vector<64x16xbf16>, vector<16x512xbf16>, vector<64x512xf32> -> vector<64x512xf32>
    %c0_3 = arith.constant 0 : index
    %c0_4 = arith.constant 0 : index
    %4 = vector.load %arg4[%c0_3, %c0_4] : memref<1x512xf32, #tpu.memory_space<vmem>>, vector<1x512xf32>
    %5 = vector.broadcast %4 : vector<1x512xf32> to vector<64x512xf32>
    %6 = arith.addf %3, %5 : vector<64x512xf32>
    %7 = arith.truncf %6 : vector<64x512xf32> to vector<64x512xbf16>
    %c0_5 = arith.constant 0 : index
    %c0_6 = arith.constant 0 : index
    %8 = vector.load %arg5[%c0_5, %c0_6] : memref<64x512xbf16, #tpu.memory_space<vmem>>, vector<64x512xbf16>
    tpu.vector_store %arg5[%c0_5, %c0_6], %7 {strides = array<i32>} : memref<64x512xbf16, #tpu.memory_space<vmem>>, vector<64x512xbf16>,
    return
  }
  func.func @transform_0(%arg0: i32, %arg1: i32) -> (i32, i32) {
    %c0_i32 = arith.constant 0 : i32
    %c0_i32_0 = arith.constant 0 : i32
    return %arg0, %c0_i32 : i32, i32
  }
  func.func @transform_1(%arg0: i32, %arg1: i32) -> (i32, i32) {
    %c0_i32 = arith.constant 0 : i32
    %c0_i32_0 = arith.constant 0 : i32
    return %c0_i32, %arg1 : i32, i32
  }
  func.func @transform_2(%arg0: i32, %arg1: i32) -> (i32, i32) {
    %c0_i32 = arith.constant 0 : i32
    %c0_i32_0 = arith.constant 0 : i32
    return %c0_i32, %arg1 : i32, i32
  }
  func.func @transform_3(%arg0: i32, %arg1: i32) -> (i32, i32) {
    %c0_i32 = arith.constant 0 : i32
    return %arg0, %arg1 : i32, i32
  }
}

module attributes {stable_mosaic.version = 11 : i64} {
  func.func @_linear_kernel(%arg0: i32, %arg1: i32, %arg2: memref<16x32xf32, #tpu.memory_space<vmem>>, %arg3: memref<32x16xbf16, #tpu.memory_space<vmem>>, %arg4: memref<1x16xf32, #tpu.memory_space<vmem>>, %arg5: memref<16x16xf32, #tpu.memory_space<vmem>>) attributes {dimension_semantics = [#tpu.dimension_semantics<parallel>, #tpu.dimension_semantics<parallel>], iteration_bounds = array<i64: 1, 1>, scalar_prefetch = 0 : i64, scratch_operands = 0 : i64, tpu.core_type = #tpu.core_type<tc>, window_params = [{transform_indices = @transform_0, window_bounds = array<i64: 16, 32>}, {pipeline_mode = #tpu.pipeline_mode<synchronous>, transform_indices = @transform_1, window_bounds = array<i64: 32, 16>}, {pipeline_mode = #tpu.pipeline_mode<synchronous>, transform_indices = @transform_2, window_bounds = array<i64: 1, 16>}, {transform_indices = @transform_3, window_bounds = array<i64: 16, 16>}]} {
    %c0 = arith.constant 0 : index
    %c0_0 = arith.constant 0 : index
    %0 = vector.load %arg2[%c0, %c0_0] : memref<16x32xf32, #tpu.memory_space<vmem>>, vector<16x32xf32>
    %1 = arith.truncf %0 : vector<16x32xf32> to vector<16x32xbf16>
    %c0_1 = arith.constant 0 : index
    %c0_2 = arith.constant 0 : index
    %2 = vector.load %arg3[%c0_1, %c0_2] : memref<32x16xbf16, #tpu.memory_space<vmem>>, vector<32x16xbf16>
    %cst = arith.constant dense<0.000000e+00> : vector<16x16xf32>
    %3 = tpu.matmul %1, %2, %cst {dimension_numbers = #tpu.dot_dimension_numbers<[1], [0], [0], [1], [0, 0, 1, 1], [], []>} : vector<16x32xbf16>, vector<32x16xbf16>, vector<16x16xf32> -> vector<16x16xf32>
    %c0_3 = arith.constant 0 : index
    %c0_4 = arith.constant 0 : index
    %4 = vector.load %arg4[%c0_3, %c0_4] : memref<1x16xf32, #tpu.memory_space<vmem>>, vector<1x16xf32>
    %5 = vector.broadcast %4 : vector<1x16xf32> to vector<16x16xf32>
    %6 = arith.addf %3, %5 : vector<16x16xf32>
    %c0_5 = arith.constant 0 : index
    %c0_6 = arith.constant 0 : index
    %7 = vector.load %arg5[%c0_5, %c0_6] : memref<16x16xf32, #tpu.memory_space<vmem>>, vector<16x16xf32>
    tpu.vector_store %arg5[%c0_5, %c0_6], %6 {strides = array<i32>} : memref<16x16xf32, #tpu.memory_space<vmem>>, vector<16x16xf32>,
    return
  }
  func.func @transform_0(%arg0: i32, %arg1: i32) -> (i32, i32) {
    %c0_i32 = arith.constant 0 : i32
    %c0_i32_0 = arith.constant 0 : i32
    return %arg0, %c0_i32 : i32, i32
  }
  func.func @transform_1(%arg0: i32, %arg1: i32) -> (i32, i32) {
    %c0_i32 = arith.constant 0 : i32
    %c0_i32_0 = arith.constant 0 : i32
    return %c0_i32, %arg1 : i32, i32
  }
  func.func @transform_2(%arg0: i32, %arg1: i32) -> (i32, i32) {
    %c0_i32 = arith.constant 0 : i32
    %c0_i32_0 = arith.constant 0 : i32
    return %c0_i32, %arg1 : i32, i32
  }
  func.func @transform_3(%arg0: i32, %arg1: i32) -> (i32, i32) {
    %c0_i32 = arith.constant 0 : i32
    return %arg0, %arg1 : i32, i32
  }
}

module attributes {stable_mosaic.version = 11 : i64} {
  func.func @_linear_kernel(%arg0: i32, %arg1: i32, %arg2: memref<64x128xf32, #tpu.memory_space<vmem>>, %arg3: memref<128x512xbf16, #tpu.memory_space<vmem>>, %arg4: memref<1x512xf32, #tpu.memory_space<vmem>>, %arg5: memref<64x512xbf16, #tpu.memory_space<vmem>>) attributes {dimension_semantics = [#tpu.dimension_semantics<parallel>, #tpu.dimension_semantics<parallel>], iteration_bounds = array<i64: 1, 1>, scalar_prefetch = 0 : i64, scratch_operands = 0 : i64, tpu.core_type = #tpu.core_type<tc>, window_params = [{transform_indices = @transform_0, window_bounds = array<i64: 64, 128>}, {pipeline_mode = #tpu.pipeline_mode<synchronous>, transform_indices = @transform_1, window_bounds = array<i64: 128, 512>}, {pipeline_mode = #tpu.pipeline_mode<synchronous>, transform_indices = @transform_2, window_bounds = array<i64: 1, 512>}, {transform_indices = @transform_3, window_bounds = array<i64: 64, 512>}]} {
    %c0 = arith.constant 0 : index
    %c0_0 = arith.constant 0 : index
    %0 = vector.load %arg2[%c0, %c0_0] : memref<64x128xf32, #tpu.memory_space<vmem>>, vector<64x128xf32>
    %1 = arith.truncf %0 : vector<64x128xf32> to vector<64x128xbf16>
    %c0_1 = arith.constant 0 : index
    %c0_2 = arith.constant 0 : index
    %2 = vector.load %arg3[%c0_1, %c0_2] : memref<128x512xbf16, #tpu.memory_space<vmem>>, vector<128x512xbf16>
    %cst = arith.constant dense<0.000000e+00> : vector<64x512xf32>
    %3 = tpu.matmul %1, %2, %cst {dimension_numbers = #tpu.dot_dimension_numbers<[1], [0], [0], [1], [0, 0, 1, 1], [], []>} : vector<64x128xbf16>, vector<128x512xbf16>, vector<64x512xf32> -> vector<64x512xf32>
    %c0_3 = arith.constant 0 : index
    %c0_4 = arith.constant 0 : index
    %4 = vector.load %arg4[%c0_3, %c0_4] : memref<1x512xf32, #tpu.memory_space<vmem>>, vector<1x512xf32>
    %5 = vector.broadcast %4 : vector<1x512xf32> to vector<64x512xf32>
    %6 = arith.addf %3, %5 : vector<64x512xf32>
    %7 = arith.truncf %6 : vector<64x512xf32> to vector<64x512xbf16>
    %c0_5 = arith.constant 0 : index
    %c0_6 = arith.constant 0 : index
    %8 = vector.load %arg5[%c0_5, %c0_6] : memref<64x512xbf16, #tpu.memory_space<vmem>>, vector<64x512xbf16>
    tpu.vector_store %arg5[%c0_5, %c0_6], %7 {strides = array<i32>} : memref<64x512xbf16, #tpu.memory_space<vmem>>, vector<64x512xbf16>,
    return
  }
  func.func @transform_0(%arg0: i32, %arg1: i32) -> (i32, i32) {
    %c0_i32 = arith.constant 0 : i32
    %c0_i32_0 = arith.constant 0 : i32
    return %arg0, %c0_i32 : i32, i32
  }
  func.func @transform_1(%arg0: i32, %arg1: i32) -> (i32, i32) {
    %c0_i32 = arith.constant 0 : i32
    %c0_i32_0 = arith.constant 0 : i32
    return %c0_i32, %arg1 : i32, i32
  }
  func.func @transform_2(%arg0: i32, %arg1: i32) -> (i32, i32) {
    %c0_i32 = arith.constant 0 : i32
    %c0_i32_0 = arith.constant 0 : i32
    return %c0_i32, %arg1 : i32, i32
  }
  func.func @transform_3(%arg0: i32, %arg1: i32) -> (i32, i32) {
    %c0_i32 = arith.constant 0 : i32
    return %arg0, %arg1 : i32, i32
  }
}

module attributes {stable_mosaic.version = 11 : i64} {
  func.func @_lstm_recurrent_kernel(%arg0: i32, %arg1: i32, %arg2: memref<8x8x512xbf16, #tpu.memory_space<vmem>>, %arg3: memref<8x128xf32, #tpu.memory_space<vmem>>, %arg4: memref<8x128xf32, #tpu.memory_space<vmem>>, %arg5: memref<128x512xbf16, #tpu.memory_space<vmem>>, %arg6: memref<8x8x128xf32, #tpu.memory_space<vmem>>, %arg7: memref<8x128xf32, #tpu.memory_space<vmem>>, %arg8: memref<8x128xf32, #tpu.memory_space<vmem>>, %arg9: memref<8x128xf32, #tpu.memory_space<vmem>>, %arg10: memref<8x128xf32, #tpu.memory_space<vmem>>) attributes {dimension_semantics = [#tpu.dimension_semantics<parallel>, #tpu.dimension_semantics<arbitrary>], iteration_bounds = array<i64: 1, 1>, scalar_prefetch = 0 : i64, scratch_operands = 2 : i64, tpu.core_type = #tpu.core_type<tc>, window_params = [{transform_indices = @transform_0, window_bounds = array<i64: 8, 8, 512>}, {transform_indices = @transform_1, window_bounds = array<i64: 8, 128>}, {transform_indices = @transform_2, window_bounds = array<i64: 8, 128>}, {pipeline_mode = #tpu.pipeline_mode<synchronous>, transform_indices = @transform_3, window_bounds = array<i64: 128, 512>}, {transform_indices = @transform_4, window_bounds = array<i64: 8, 8, 128>}, {transform_indices = @transform_5, window_bounds = array<i64: 8, 128>}, {transform_indices = @transform_6, window_bounds = array<i64: 8, 128>}]} {
    %c0_i32 = arith.constant 0 : i32
    %0 = arith.cmpi eq, %arg1, %c0_i32 : i32
    %1 = arith.extui %0 : i1 to i32
    %c0_i32_0 = arith.constant 0 : i32
    %2 = arith.cmpi ne, %1, %c0_i32_0 : i32
    scf.if %2 {
      %c0_146 = arith.constant 0 : index
      %c0_147 = arith.constant 0 : index
      %334 = vector.load %arg3[%c0_146, %c0_147] : memref<8x128xf32, #tpu.memory_space<vmem>>, vector<8x128xf32>
      %c0_148 = arith.constant 0 : index
      %c0_149 = arith.constant 0 : index
      %335 = vector.load %arg9[%c0_148, %c0_149] : memref<8x128xf32, #tpu.memory_space<vmem>>, vector<8x128xf32>
      tpu.vector_store %arg9[%c0_148, %c0_149], %334 {strides = array<i32>} : memref<8x128xf32, #tpu.memory_space<vmem>>, vector<8x128xf32>,
      %c0_150 = arith.constant 0 : index
      %c0_151 = arith.constant 0 : index
      %336 = vector.load %arg4[%c0_150, %c0_151] : memref<8x128xf32, #tpu.memory_space<vmem>>, vector<8x128xf32>
      %c0_152 = arith.constant 0 : index
      %c0_153 = arith.constant 0 : index
      %337 = vector.load %arg10[%c0_152, %c0_153] : memref<8x128xf32, #tpu.memory_space<vmem>>, vector<8x128xf32>
      tpu.vector_store %arg10[%c0_152, %c0_153], %336 {strides = array<i32>} : memref<8x128xf32, #tpu.memory_space<vmem>>, vector<8x128xf32>,
    } else {
    }
    %c0_i32_1 = arith.constant 0 : i32
    %3 = arith.index_cast %c0_i32_1 : i32 to index
    %c0 = arith.constant 0 : index
    %c0_2 = arith.constant 0 : index
    %4 = vector.load %arg2[%3, %c0, %c0_2] : memref<8x8x512xbf16, #tpu.memory_space<vmem>>, vector<1x8x512xbf16>
    %5 = vector.shape_cast %4 : vector<1x8x512xbf16> to vector<8x512xbf16>
    %6 = arith.extf %5 : vector<8x512xbf16> to vector<8x512xf32>
    %c0_3 = arith.constant 0 : index
    %c0_4 = arith.constant 0 : index
    %7 = vector.load %arg9[%c0_3, %c0_4] : memref<8x128xf32, #tpu.memory_space<vmem>>, vector<8x128xf32>
    %8 = arith.truncf %7 : vector<8x128xf32> to vector<8x128xbf16>
    %c0_5 = arith.constant 0 : index
    %c0_6 = arith.constant 0 : index
    %9 = vector.load %arg5[%c0_5, %c0_6] : memref<128x512xbf16, #tpu.memory_space<vmem>>, vector<128x512xbf16>
    %cst = arith.constant dense<0.000000e+00> : vector<8x512xf32>
    %10 = tpu.matmul %8, %9, %cst {dimension_numbers = #tpu.dot_dimension_numbers<[1], [0], [0], [1], [0, 0, 1, 1], [], []>} : vector<8x128xbf16>, vector<128x512xbf16>, vector<8x512xf32> -> vector<8x512xf32>
    %11 = arith.addf %6, %10 : vector<8x512xf32>
    %12 = vector.extract_strided_slice %11 {offsets = [0, 0], sizes = [8, 128], strides = [1, 1]} : vector<8x512xf32> to vector<8x128xf32>
    %13 = arith.negf %12 : vector<8x128xf32>
    %14 = math.exp %13 : vector<8x128xf32>
    %cst_7 = arith.constant 1.000000e+00 : f32
    %15 = vector.broadcast %cst_7 : f32 to vector<8x128xf32>
    %16 = arith.addf %15, %14 : vector<8x128xf32>
    %17 = arith.divf %15, %16 : vector<8x128xf32>
    %18 = vector.extract_strided_slice %11 {offsets = [0, 128], sizes = [8, 128], strides = [1, 1]} : vector<8x512xf32> to vector<8x128xf32>
    %19 = arith.negf %18 : vector<8x128xf32>
    %20 = math.exp %19 : vector<8x128xf32>
    %cst_8 = arith.constant 1.000000e+00 : f32
    %21 = vector.broadcast %cst_8 : f32 to vector<8x128xf32>
    %22 = arith.addf %21, %20 : vector<8x128xf32>
    %23 = arith.divf %21, %22 : vector<8x128xf32>
    %24 = vector.extract_strided_slice %11 {offsets = [0, 256], sizes = [8, 128], strides = [1, 1]} : vector<8x512xf32> to vector<8x128xf32>
    %25 = math.tanh %24 : vector<8x128xf32>
    %26 = vector.extract_strided_slice %11 {offsets = [0, 384], sizes = [8, 128], strides = [1, 1]} : vector<8x512xf32> to vector<8x128xf32>
    %27 = arith.negf %26 : vector<8x128xf32>
    %28 = math.exp %27 : vector<8x128xf32>
    %cst_9 = arith.constant 1.000000e+00 : f32
    %29 = vector.broadcast %cst_9 : f32 to vector<8x128xf32>
    %30 = arith.addf %29, %28 : vector<8x128xf32>
    %31 = arith.divf %29, %30 : vector<8x128xf32>
    %c0_10 = arith.constant 0 : index
    %c0_11 = arith.constant 0 : index
    %32 = vector.load %arg10[%c0_10, %c0_11] : memref<8x128xf32, #tpu.memory_space<vmem>>, vector<8x128xf32>
    %33 = arith.mulf %23, %32 : vector<8x128xf32>
    %34 = arith.mulf %17, %25 : vector<8x128xf32>
    %35 = arith.addf %33, %34 : vector<8x128xf32>
    %36 = math.tanh %35 : vector<8x128xf32>
    %37 = arith.mulf %31, %36 : vector<8x128xf32>
    %c0_12 = arith.constant 0 : index
    %c0_13 = arith.constant 0 : index
    %38 = vector.load %arg10[%c0_12, %c0_13] : memref<8x128xf32, #tpu.memory_space<vmem>>, vector<8x128xf32>
    tpu.vector_store %arg10[%c0_12, %c0_13], %35 {strides = array<i32>} : memref<8x128xf32, #tpu.memory_space<vmem>>, vector<8x128xf32>,
    %c0_14 = arith.constant 0 : index
    %c0_15 = arith.constant 0 : index
    %39 = vector.load %arg9[%c0_14, %c0_15] : memref<8x128xf32, #tpu.memory_space<vmem>>, vector<8x128xf32>
    tpu.vector_store %arg9[%c0_14, %c0_15], %37 {strides = array<i32>} : memref<8x128xf32, #tpu.memory_space<vmem>>, vector<8x128xf32>,
    %40 = arith.index_cast %c0_i32_1 : i32 to index
    %c0_16 = arith.constant 0 : index
    %c0_17 = arith.constant 0 : index
    %41 = vector.load %arg6[%40, %c0_16, %c0_17] : memref<8x8x128xf32, #tpu.memory_space<vmem>>, vector<1x8x128xf32>
    %42 = vector.shape_cast %41 : vector<1x8x128xf32> to vector<8x128xf32>
    %43 = vector.shape_cast %37 : vector<8x128xf32> to vector<1x8x128xf32>
    tpu.vector_store %arg6[%40, %c0_16, %c0_17], %43 {strides = array<i32>} : memref<8x8x128xf32, #tpu.memory_space<vmem>>, vector<1x8x128xf32>,
    %c1_i32 = arith.constant 1 : i32
    %44 = arith.index_cast %c1_i32 : i32 to index
    %c0_18 = arith.constant 0 : index
    %c0_19 = arith.constant 0 : index
    %45 = vector.load %arg2[%44, %c0_18, %c0_19] : memref<8x8x512xbf16, #tpu.memory_space<vmem>>, vector<1x8x512xbf16>
    %46 = vector.shape_cast %45 : vector<1x8x512xbf16> to vector<8x512xbf16>
    %47 = arith.extf %46 : vector<8x512xbf16> to vector<8x512xf32>
    %c0_20 = arith.constant 0 : index
    %c0_21 = arith.constant 0 : index
    %48 = vector.load %arg9[%c0_20, %c0_21] : memref<8x128xf32, #tpu.memory_space<vmem>>, vector<8x128xf32>
    %49 = arith.truncf %48 : vector<8x128xf32> to vector<8x128xbf16>
    %c0_22 = arith.constant 0 : index
    %c0_23 = arith.constant 0 : index
    %50 = vector.load %arg5[%c0_22, %c0_23] : memref<128x512xbf16, #tpu.memory_space<vmem>>, vector<128x512xbf16>
    %cst_24 = arith.constant dense<0.000000e+00> : vector<8x512xf32>
    %51 = tpu.matmul %49, %50, %cst_24 {dimension_numbers = #tpu.dot_dimension_numbers<[1], [0], [0], [1], [0, 0, 1, 1], [], []>} : vector<8x128xbf16>, vector<128x512xbf16>, vector<8x512xf32> -> vector<8x512xf32>
    %52 = arith.addf %47, %51 : vector<8x512xf32>
    %53 = vector.extract_strided_slice %52 {offsets = [0, 0], sizes = [8, 128], strides = [1, 1]} : vector<8x512xf32> to vector<8x128xf32>
    %54 = arith.negf %53 : vector<8x128xf32>
    %55 = math.exp %54 : vector<8x128xf32>
    %cst_25 = arith.constant 1.000000e+00 : f32
    %56 = vector.broadcast %cst_25 : f32 to vector<8x128xf32>
    %57 = arith.addf %56, %55 : vector<8x128xf32>
    %58 = arith.divf %56, %57 : vector<8x128xf32>
    %59 = vector.extract_strided_slice %52 {offsets = [0, 128], sizes = [8, 128], strides = [1, 1]} : vector<8x512xf32> to vector<8x128xf32>
    %60 = arith.negf %59 : vector<8x128xf32>
    %61 = math.exp %60 : vector<8x128xf32>
    %cst_26 = arith.constant 1.000000e+00 : f32
    %62 = vector.broadcast %cst_26 : f32 to vector<8x128xf32>
    %63 = arith.addf %62, %61 : vector<8x128xf32>
    %64 = arith.divf %62, %63 : vector<8x128xf32>
    %65 = vector.extract_strided_slice %52 {offsets = [0, 256], sizes = [8, 128], strides = [1, 1]} : vector<8x512xf32> to vector<8x128xf32>
    %66 = math.tanh %65 : vector<8x128xf32>
    %67 = vector.extract_strided_slice %52 {offsets = [0, 384], sizes = [8, 128], strides = [1, 1]} : vector<8x512xf32> to vector<8x128xf32>
    %68 = arith.negf %67 : vector<8x128xf32>
    %69 = math.exp %68 : vector<8x128xf32>
    %cst_27 = arith.constant 1.000000e+00 : f32
    %70 = vector.broadcast %cst_27 : f32 to vector<8x128xf32>
    %71 = arith.addf %70, %69 : vector<8x128xf32>
    %72 = arith.divf %70, %71 : vector<8x128xf32>
    %c0_28 = arith.constant 0 : index
    %c0_29 = arith.constant 0 : index
    %73 = vector.load %arg10[%c0_28, %c0_29] : memref<8x128xf32, #tpu.memory_space<vmem>>, vector<8x128xf32>
    %74 = arith.mulf %64, %73 : vector<8x128xf32>
    %75 = arith.mulf %58, %66 : vector<8x128xf32>
    %76 = arith.addf %74, %75 : vector<8x128xf32>
    %77 = math.tanh %76 : vector<8x128xf32>
    %78 = arith.mulf %72, %77 : vector<8x128xf32>
    %c0_30 = arith.constant 0 : index
    %c0_31 = arith.constant 0 : index
    %79 = vector.load %arg10[%c0_30, %c0_31] : memref<8x128xf32, #tpu.memory_space<vmem>>, vector<8x128xf32>
    tpu.vector_store %arg10[%c0_30, %c0_31], %76 {strides = array<i32>} : memref<8x128xf32, #tpu.memory_space<vmem>>, vector<8x128xf32>,
    %c0_32 = arith.constant 0 : index
    %c0_33 = arith.constant 0 : index
    %80 = vector.load %arg9[%c0_32, %c0_33] : memref<8x128xf32, #tpu.memory_space<vmem>>, vector<8x128xf32>
    tpu.vector_store %arg9[%c0_32, %c0_33], %78 {strides = array<i32>} : memref<8x128xf32, #tpu.memory_space<vmem>>, vector<8x128xf32>,
    %81 = arith.index_cast %c1_i32 : i32 to index
    %c0_34 = arith.constant 0 : index
    %c0_35 = arith.constant 0 : index
    %82 = vector.load %arg6[%81, %c0_34, %c0_35] : memref<8x8x128xf32, #tpu.memory_space<vmem>>, vector<1x8x128xf32>
    %83 = vector.shape_cast %82 : vector<1x8x128xf32> to vector<8x128xf32>
    %84 = vector.shape_cast %78 : vector<8x128xf32> to vector<1x8x128xf32>
    tpu.vector_store %arg6[%81, %c0_34, %c0_35], %84 {strides = array<i32>} : memref<8x8x128xf32, #tpu.memory_space<vmem>>, vector<1x8x128xf32>,
    %c2_i32 = arith.constant 2 : i32
    %85 = arith.index_cast %c2_i32 : i32 to index
    %c0_36 = arith.constant 0 : index
    %c0_37 = arith.constant 0 : index
    %86 = vector.load %arg2[%85, %c0_36, %c0_37] : memref<8x8x512xbf16, #tpu.memory_space<vmem>>, vector<1x8x512xbf16>
    %87 = vector.shape_cast %86 : vector<1x8x512xbf16> to vector<8x512xbf16>
    %88 = arith.extf %87 : vector<8x512xbf16> to vector<8x512xf32>
    %c0_38 = arith.constant 0 : index
    %c0_39 = arith.constant 0 : index
    %89 = vector.load %arg9[%c0_38, %c0_39] : memref<8x128xf32, #tpu.memory_space<vmem>>, vector<8x128xf32>
    %90 = arith.truncf %89 : vector<8x128xf32> to vector<8x128xbf16>
    %c0_40 = arith.constant 0 : index
    %c0_41 = arith.constant 0 : index
    %91 = vector.load %arg5[%c0_40, %c0_41] : memref<128x512xbf16, #tpu.memory_space<vmem>>, vector<128x512xbf16>
    %cst_42 = arith.constant dense<0.000000e+00> : vector<8x512xf32>
    %92 = tpu.matmul %90, %91, %cst_42 {dimension_numbers = #tpu.dot_dimension_numbers<[1], [0], [0], [1], [0, 0, 1, 1], [], []>} : vector<8x128xbf16>, vector<128x512xbf16>, vector<8x512xf32> -> vector<8x512xf32>
    %93 = arith.addf %88, %92 : vector<8x512xf32>
    %94 = vector.extract_strided_slice %93 {offsets = [0, 0], sizes = [8, 128], strides = [1, 1]} : vector<8x512xf32> to vector<8x128xf32>
    %95 = arith.negf %94 : vector<8x128xf32>
    %96 = math.exp %95 : vector<8x128xf32>
    %cst_43 = arith.constant 1.000000e+00 : f32
    %97 = vector.broadcast %cst_43 : f32 to vector<8x128xf32>
    %98 = arith.addf %97, %96 : vector<8x128xf32>
    %99 = arith.divf %97, %98 : vector<8x128xf32>
    %100 = vector.extract_strided_slice %93 {offsets = [0, 128], sizes = [8, 128], strides = [1, 1]} : vector<8x512xf32> to vector<8x128xf32>
    %101 = arith.negf %100 : vector<8x128xf32>
    %102 = math.exp %101 : vector<8x128xf32>
    %cst_44 = arith.constant 1.000000e+00 : f32
    %103 = vector.broadcast %cst_44 : f32 to vector<8x128xf32>
    %104 = arith.addf %103, %102 : vector<8x128xf32>
    %105 = arith.divf %103, %104 : vector<8x128xf32>
    %106 = vector.extract_strided_slice %93 {offsets = [0, 256], sizes = [8, 128], strides = [1, 1]} : vector<8x512xf32> to vector<8x128xf32>
    %107 = math.tanh %106 : vector<8x128xf32>
    %108 = vector.extract_strided_slice %93 {offsets = [0, 384], sizes = [8, 128], strides = [1, 1]} : vector<8x512xf32> to vector<8x128xf32>
    %109 = arith.negf %108 : vector<8x128xf32>
    %110 = math.exp %109 : vector<8x128xf32>
    %cst_45 = arith.constant 1.000000e+00 : f32
    %111 = vector.broadcast %cst_45 : f32 to vector<8x128xf32>
    %112 = arith.addf %111, %110 : vector<8x128xf32>
    %113 = arith.divf %111, %112 : vector<8x128xf32>
    %c0_46 = arith.constant 0 : index
    %c0_47 = arith.constant 0 : index
    %114 = vector.load %arg10[%c0_46, %c0_47] : memref<8x128xf32, #tpu.memory_space<vmem>>, vector<8x128xf32>
    %115 = arith.mulf %105, %114 : vector<8x128xf32>
    %116 = arith.mulf %99, %107 : vector<8x128xf32>
    %117 = arith.addf %115, %116 : vector<8x128xf32>
    %118 = math.tanh %117 : vector<8x128xf32>
    %119 = arith.mulf %113, %118 : vector<8x128xf32>
    %c0_48 = arith.constant 0 : index
    %c0_49 = arith.constant 0 : index
    %120 = vector.load %arg10[%c0_48, %c0_49] : memref<8x128xf32, #tpu.memory_space<vmem>>, vector<8x128xf32>
    tpu.vector_store %arg10[%c0_48, %c0_49], %117 {strides = array<i32>} : memref<8x128xf32, #tpu.memory_space<vmem>>, vector<8x128xf32>,
    %c0_50 = arith.constant 0 : index
    %c0_51 = arith.constant 0 : index
    %121 = vector.load %arg9[%c0_50, %c0_51] : memref<8x128xf32, #tpu.memory_space<vmem>>, vector<8x128xf32>
    tpu.vector_store %arg9[%c0_50, %c0_51], %119 {strides = array<i32>} : memref<8x128xf32, #tpu.memory_space<vmem>>, vector<8x128xf32>,
    %122 = arith.index_cast %c2_i32 : i32 to index
    %c0_52 = arith.constant 0 : index
    %c0_53 = arith.constant 0 : index
    %123 = vector.load %arg6[%122, %c0_52, %c0_53] : memref<8x8x128xf32, #tpu.memory_space<vmem>>, vector<1x8x128xf32>
    %124 = vector.shape_cast %123 : vector<1x8x128xf32> to vector<8x128xf32>
    %125 = vector.shape_cast %119 : vector<8x128xf32> to vector<1x8x128xf32>
    tpu.vector_store %arg6[%122, %c0_52, %c0_53], %125 {strides = array<i32>} : memref<8x8x128xf32, #tpu.memory_space<vmem>>, vector<1x8x128xf32>,
    %c3_i32 = arith.constant 3 : i32
    %126 = arith.index_cast %c3_i32 : i32 to index
    %c0_54 = arith.constant 0 : index
    %c0_55 = arith.constant 0 : index
    %127 = vector.load %arg2[%126, %c0_54, %c0_55] : memref<8x8x512xbf16, #tpu.memory_space<vmem>>, vector<1x8x512xbf16>
    %128 = vector.shape_cast %127 : vector<1x8x512xbf16> to vector<8x512xbf16>
    %129 = arith.extf %128 : vector<8x512xbf16> to vector<8x512xf32>
    %c0_56 = arith.constant 0 : index
    %c0_57 = arith.constant 0 : index
    %130 = vector.load %arg9[%c0_56, %c0_57] : memref<8x128xf32, #tpu.memory_space<vmem>>, vector<8x128xf32>
    %131 = arith.truncf %130 : vector<8x128xf32> to vector<8x128xbf16>
    %c0_58 = arith.constant 0 : index
    %c0_59 = arith.constant 0 : index
    %132 = vector.load %arg5[%c0_58, %c0_59] : memref<128x512xbf16, #tpu.memory_space<vmem>>, vector<128x512xbf16>
    %cst_60 = arith.constant dense<0.000000e+00> : vector<8x512xf32>
    %133 = tpu.matmul %131, %132, %cst_60 {dimension_numbers = #tpu.dot_dimension_numbers<[1], [0], [0], [1], [0, 0, 1, 1], [], []>} : vector<8x128xbf16>, vector<128x512xbf16>, vector<8x512xf32> -> vector<8x512xf32>
    %134 = arith.addf %129, %133 : vector<8x512xf32>
    %135 = vector.extract_strided_slice %134 {offsets = [0, 0], sizes = [8, 128], strides = [1, 1]} : vector<8x512xf32> to vector<8x128xf32>
    %136 = arith.negf %135 : vector<8x128xf32>
    %137 = math.exp %136 : vector<8x128xf32>
    %cst_61 = arith.constant 1.000000e+00 : f32
    %138 = vector.broadcast %cst_61 : f32 to vector<8x128xf32>
    %139 = arith.addf %138, %137 : vector<8x128xf32>
    %140 = arith.divf %138, %139 : vector<8x128xf32>
    %141 = vector.extract_strided_slice %134 {offsets = [0, 128], sizes = [8, 128], strides = [1, 1]} : vector<8x512xf32> to vector<8x128xf32>
    %142 = arith.negf %141 : vector<8x128xf32>
    %143 = math.exp %142 : vector<8x128xf32>
    %cst_62 = arith.constant 1.000000e+00 : f32
    %144 = vector.broadcast %cst_62 : f32 to vector<8x128xf32>
    %145 = arith.addf %144, %143 : vector<8x128xf32>
    %146 = arith.divf %144, %145 : vector<8x128xf32>
    %147 = vector.extract_strided_slice %134 {offsets = [0, 256], sizes = [8, 128], strides = [1, 1]} : vector<8x512xf32> to vector<8x128xf32>
    %148 = math.tanh %147 : vector<8x128xf32>
    %149 = vector.extract_strided_slice %134 {offsets = [0, 384], sizes = [8, 128], strides = [1, 1]} : vector<8x512xf32> to vector<8x128xf32>
    %150 = arith.negf %149 : vector<8x128xf32>
    %151 = math.exp %150 : vector<8x128xf32>
    %cst_63 = arith.constant 1.000000e+00 : f32
    %152 = vector.broadcast %cst_63 : f32 to vector<8x128xf32>
    %153 = arith.addf %152, %151 : vector<8x128xf32>
    %154 = arith.divf %152, %153 : vector<8x128xf32>
    %c0_64 = arith.constant 0 : index
    %c0_65 = arith.constant 0 : index
    %155 = vector.load %arg10[%c0_64, %c0_65] : memref<8x128xf32, #tpu.memory_space<vmem>>, vector<8x128xf32>
    %156 = arith.mulf %146, %155 : vector<8x128xf32>
    %157 = arith.mulf %140, %148 : vector<8x128xf32>
    %158 = arith.addf %156, %157 : vector<8x128xf32>
    %159 = math.tanh %158 : vector<8x128xf32>
    %160 = arith.mulf %154, %159 : vector<8x128xf32>
    %c0_66 = arith.constant 0 : index
    %c0_67 = arith.constant 0 : index
    %161 = vector.load %arg10[%c0_66, %c0_67] : memref<8x128xf32, #tpu.memory_space<vmem>>, vector<8x128xf32>
    tpu.vector_store %arg10[%c0_66, %c0_67], %158 {strides = array<i32>} : memref<8x128xf32, #tpu.memory_space<vmem>>, vector<8x128xf32>,
    %c0_68 = arith.constant 0 : index
    %c0_69 = arith.constant 0 : index
    %162 = vector.load %arg9[%c0_68, %c0_69] : memref<8x128xf32, #tpu.memory_space<vmem>>, vector<8x128xf32>
    tpu.vector_store %arg9[%c0_68, %c0_69], %160 {strides = array<i32>} : memref<8x128xf32, #tpu.memory_space<vmem>>, vector<8x128xf32>,
    %163 = arith.index_cast %c3_i32 : i32 to index
    %c0_70 = arith.constant 0 : index
    %c0_71 = arith.constant 0 : index
    %164 = vector.load %arg6[%163, %c0_70, %c0_71] : memref<8x8x128xf32, #tpu.memory_space<vmem>>, vector<1x8x128xf32>
    %165 = vector.shape_cast %164 : vector<1x8x128xf32> to vector<8x128xf32>
    %166 = vector.shape_cast %160 : vector<8x128xf32> to vector<1x8x128xf32>
    tpu.vector_store %arg6[%163, %c0_70, %c0_71], %166 {strides = array<i32>} : memref<8x8x128xf32, #tpu.memory_space<vmem>>, vector<1x8x128xf32>,
    %c4_i32 = arith.constant 4 : i32
    %167 = arith.index_cast %c4_i32 : i32 to index
    %c0_72 = arith.constant 0 : index
    %c0_73 = arith.constant 0 : index
    %168 = vector.load %arg2[%167, %c0_72, %c0_73] : memref<8x8x512xbf16, #tpu.memory_space<vmem>>, vector<1x8x512xbf16>
    %169 = vector.shape_cast %168 : vector<1x8x512xbf16> to vector<8x512xbf16>
    %170 = arith.extf %169 : vector<8x512xbf16> to vector<8x512xf32>
    %c0_74 = arith.constant 0 : index
    %c0_75 = arith.constant 0 : index
    %171 = vector.load %arg9[%c0_74, %c0_75] : memref<8x128xf32, #tpu.memory_space<vmem>>, vector<8x128xf32>
    %172 = arith.truncf %171 : vector<8x128xf32> to vector<8x128xbf16>
    %c0_76 = arith.constant 0 : index
    %c0_77 = arith.constant 0 : index
    %173 = vector.load %arg5[%c0_76, %c0_77] : memref<128x512xbf16, #tpu.memory_space<vmem>>, vector<128x512xbf16>
    %cst_78 = arith.constant dense<0.000000e+00> : vector<8x512xf32>
    %174 = tpu.matmul %172, %173, %cst_78 {dimension_numbers = #tpu.dot_dimension_numbers<[1], [0], [0], [1], [0, 0, 1, 1], [], []>} : vector<8x128xbf16>, vector<128x512xbf16>, vector<8x512xf32> -> vector<8x512xf32>
    %175 = arith.addf %170, %174 : vector<8x512xf32>
    %176 = vector.extract_strided_slice %175 {offsets = [0, 0], sizes = [8, 128], strides = [1, 1]} : vector<8x512xf32> to vector<8x128xf32>
    %177 = arith.negf %176 : vector<8x128xf32>
    %178 = math.exp %177 : vector<8x128xf32>
    %cst_79 = arith.constant 1.000000e+00 : f32
    %179 = vector.broadcast %cst_79 : f32 to vector<8x128xf32>
    %180 = arith.addf %179, %178 : vector<8x128xf32>
    %181 = arith.divf %179, %180 : vector<8x128xf32>
    %182 = vector.extract_strided_slice %175 {offsets = [0, 128], sizes = [8, 128], strides = [1, 1]} : vector<8x512xf32> to vector<8x128xf32>
    %183 = arith.negf %182 : vector<8x128xf32>
    %184 = math.exp %183 : vector<8x128xf32>
    %cst_80 = arith.constant 1.000000e+00 : f32
    %185 = vector.broadcast %cst_80 : f32 to vector<8x128xf32>
    %186 = arith.addf %185, %184 : vector<8x128xf32>
    %187 = arith.divf %185, %186 : vector<8x128xf32>
    %188 = vector.extract_strided_slice %175 {offsets = [0, 256], sizes = [8, 128], strides = [1, 1]} : vector<8x512xf32> to vector<8x128xf32>
    %189 = math.tanh %188 : vector<8x128xf32>
    %190 = vector.extract_strided_slice %175 {offsets = [0, 384], sizes = [8, 128], strides = [1, 1]} : vector<8x512xf32> to vector<8x128xf32>
    %191 = arith.negf %190 : vector<8x128xf32>
    %192 = math.exp %191 : vector<8x128xf32>
    %cst_81 = arith.constant 1.000000e+00 : f32
    %193 = vector.broadcast %cst_81 : f32 to vector<8x128xf32>
    %194 = arith.addf %193, %192 : vector<8x128xf32>
    %195 = arith.divf %193, %194 : vector<8x128xf32>
    %c0_82 = arith.constant 0 : index
    %c0_83 = arith.constant 0 : index
    %196 = vector.load %arg10[%c0_82, %c0_83] : memref<8x128xf32, #tpu.memory_space<vmem>>, vector<8x128xf32>
    %197 = arith.mulf %187, %196 : vector<8x128xf32>
    %198 = arith.mulf %181, %189 : vector<8x128xf32>
    %199 = arith.addf %197, %198 : vector<8x128xf32>
    %200 = math.tanh %199 : vector<8x128xf32>
    %201 = arith.mulf %195, %200 : vector<8x128xf32>
    %c0_84 = arith.constant 0 : index
    %c0_85 = arith.constant 0 : index
    %202 = vector.load %arg10[%c0_84, %c0_85] : memref<8x128xf32, #tpu.memory_space<vmem>>, vector<8x128xf32>
    tpu.vector_store %arg10[%c0_84, %c0_85], %199 {strides = array<i32>} : memref<8x128xf32, #tpu.memory_space<vmem>>, vector<8x128xf32>,
    %c0_86 = arith.constant 0 : index
    %c0_87 = arith.constant 0 : index
    %203 = vector.load %arg9[%c0_86, %c0_87] : memref<8x128xf32, #tpu.memory_space<vmem>>, vector<8x128xf32>
    tpu.vector_store %arg9[%c0_86, %c0_87], %201 {strides = array<i32>} : memref<8x128xf32, #tpu.memory_space<vmem>>, vector<8x128xf32>,
    %204 = arith.index_cast %c4_i32 : i32 to index
    %c0_88 = arith.constant 0 : index
    %c0_89 = arith.constant 0 : index
    %205 = vector.load %arg6[%204, %c0_88, %c0_89] : memref<8x8x128xf32, #tpu.memory_space<vmem>>, vector<1x8x128xf32>
    %206 = vector.shape_cast %205 : vector<1x8x128xf32> to vector<8x128xf32>
    %207 = vector.shape_cast %201 : vector<8x128xf32> to vector<1x8x128xf32>
    tpu.vector_store %arg6[%204, %c0_88, %c0_89], %207 {strides = array<i32>} : memref<8x8x128xf32, #tpu.memory_space<vmem>>, vector<1x8x128xf32>,
    %c5_i32 = arith.constant 5 : i32
    %208 = arith.index_cast %c5_i32 : i32 to index
    %c0_90 = arith.constant 0 : index
    %c0_91 = arith.constant 0 : index
    %209 = vector.load %arg2[%208, %c0_90, %c0_91] : memref<8x8x512xbf16, #tpu.memory_space<vmem>>, vector<1x8x512xbf16>
    %210 = vector.shape_cast %209 : vector<1x8x512xbf16> to vector<8x512xbf16>
    %211 = arith.extf %210 : vector<8x512xbf16> to vector<8x512xf32>
    %c0_92 = arith.constant 0 : index
    %c0_93 = arith.constant 0 : index
    %212 = vector.load %arg9[%c0_92, %c0_93] : memref<8x128xf32, #tpu.memory_space<vmem>>, vector<8x128xf32>
    %213 = arith.truncf %212 : vector<8x128xf32> to vector<8x128xbf16>
    %c0_94 = arith.constant 0 : index
    %c0_95 = arith.constant 0 : index
    %214 = vector.load %arg5[%c0_94, %c0_95] : memref<128x512xbf16, #tpu.memory_space<vmem>>, vector<128x512xbf16>
    %cst_96 = arith.constant dense<0.000000e+00> : vector<8x512xf32>
    %215 = tpu.matmul %213, %214, %cst_96 {dimension_numbers = #tpu.dot_dimension_numbers<[1], [0], [0], [1], [0, 0, 1, 1], [], []>} : vector<8x128xbf16>, vector<128x512xbf16>, vector<8x512xf32> -> vector<8x512xf32>
    %216 = arith.addf %211, %215 : vector<8x512xf32>
    %217 = vector.extract_strided_slice %216 {offsets = [0, 0], sizes = [8, 128], strides = [1, 1]} : vector<8x512xf32> to vector<8x128xf32>
    %218 = arith.negf %217 : vector<8x128xf32>
    %219 = math.exp %218 : vector<8x128xf32>
    %cst_97 = arith.constant 1.000000e+00 : f32
    %220 = vector.broadcast %cst_97 : f32 to vector<8x128xf32>
    %221 = arith.addf %220, %219 : vector<8x128xf32>
    %222 = arith.divf %220, %221 : vector<8x128xf32>
    %223 = vector.extract_strided_slice %216 {offsets = [0, 128], sizes = [8, 128], strides = [1, 1]} : vector<8x512xf32> to vector<8x128xf32>
    %224 = arith.negf %223 : vector<8x128xf32>
    %225 = math.exp %224 : vector<8x128xf32>
    %cst_98 = arith.constant 1.000000e+00 : f32
    %226 = vector.broadcast %cst_98 : f32 to vector<8x128xf32>
    %227 = arith.addf %226, %225 : vector<8x128xf32>
    %228 = arith.divf %226, %227 : vector<8x128xf32>
    %229 = vector.extract_strided_slice %216 {offsets = [0, 256], sizes = [8, 128], strides = [1, 1]} : vector<8x512xf32> to vector<8x128xf32>
    %230 = math.tanh %229 : vector<8x128xf32>
    %231 = vector.extract_strided_slice %216 {offsets = [0, 384], sizes = [8, 128], strides = [1, 1]} : vector<8x512xf32> to vector<8x128xf32>
    %232 = arith.negf %231 : vector<8x128xf32>
    %233 = math.exp %232 : vector<8x128xf32>
    %cst_99 = arith.constant 1.000000e+00 : f32
    %234 = vector.broadcast %cst_99 : f32 to vector<8x128xf32>
    %235 = arith.addf %234, %233 : vector<8x128xf32>
    %236 = arith.divf %234, %235 : vector<8x128xf32>
    %c0_100 = arith.constant 0 : index
    %c0_101 = arith.constant 0 : index
    %237 = vector.load %arg10[%c0_100, %c0_101] : memref<8x128xf32, #tpu.memory_space<vmem>>, vector<8x128xf32>
    %238 = arith.mulf %228, %237 : vector<8x128xf32>
    %239 = arith.mulf %222, %230 : vector<8x128xf32>
    %240 = arith.addf %238, %239 : vector<8x128xf32>
    %241 = math.tanh %240 : vector<8x128xf32>
    %242 = arith.mulf %236, %241 : vector<8x128xf32>
    %c0_102 = arith.constant 0 : index
    %c0_103 = arith.constant 0 : index
    %243 = vector.load %arg10[%c0_102, %c0_103] : memref<8x128xf32, #tpu.memory_space<vmem>>, vector<8x128xf32>
    tpu.vector_store %arg10[%c0_102, %c0_103], %240 {strides = array<i32>} : memref<8x128xf32, #tpu.memory_space<vmem>>, vector<8x128xf32>,
    %c0_104 = arith.constant 0 : index
    %c0_105 = arith.constant 0 : index
    %244 = vector.load %arg9[%c0_104, %c0_105] : memref<8x128xf32, #tpu.memory_space<vmem>>, vector<8x128xf32>
    tpu.vector_store %arg9[%c0_104, %c0_105], %242 {strides = array<i32>} : memref<8x128xf32, #tpu.memory_space<vmem>>, vector<8x128xf32>,
    %245 = arith.index_cast %c5_i32 : i32 to index
    %c0_106 = arith.constant 0 : index
    %c0_107 = arith.constant 0 : index
    %246 = vector.load %arg6[%245, %c0_106, %c0_107] : memref<8x8x128xf32, #tpu.memory_space<vmem>>, vector<1x8x128xf32>
    %247 = vector.shape_cast %246 : vector<1x8x128xf32> to vector<8x128xf32>
    %248 = vector.shape_cast %242 : vector<8x128xf32> to vector<1x8x128xf32>
    tpu.vector_store %arg6[%245, %c0_106, %c0_107], %248 {strides = array<i32>} : memref<8x8x128xf32, #tpu.memory_space<vmem>>, vector<1x8x128xf32>,
    %c6_i32 = arith.constant 6 : i32
    %249 = arith.index_cast %c6_i32 : i32 to index
    %c0_108 = arith.constant 0 : index
    %c0_109 = arith.constant 0 : index
    %250 = vector.load %arg2[%249, %c0_108, %c0_109] : memref<8x8x512xbf16, #tpu.memory_space<vmem>>, vector<1x8x512xbf16>
    %251 = vector.shape_cast %250 : vector<1x8x512xbf16> to vector<8x512xbf16>
    %252 = arith.extf %251 : vector<8x512xbf16> to vector<8x512xf32>
    %c0_110 = arith.constant 0 : index
    %c0_111 = arith.constant 0 : index
    %253 = vector.load %arg9[%c0_110, %c0_111] : memref<8x128xf32, #tpu.memory_space<vmem>>, vector<8x128xf32>
    %254 = arith.truncf %253 : vector<8x128xf32> to vector<8x128xbf16>
    %c0_112 = arith.constant 0 : index
    %c0_113 = arith.constant 0 : index
    %255 = vector.load %arg5[%c0_112, %c0_113] : memref<128x512xbf16, #tpu.memory_space<vmem>>, vector<128x512xbf16>
    %cst_114 = arith.constant dense<0.000000e+00> : vector<8x512xf32>
    %256 = tpu.matmul %254, %255, %cst_114 {dimension_numbers = #tpu.dot_dimension_numbers<[1], [0], [0], [1], [0, 0, 1, 1], [], []>} : vector<8x128xbf16>, vector<128x512xbf16>, vector<8x512xf32> -> vector<8x512xf32>
    %257 = arith.addf %252, %256 : vector<8x512xf32>
    %258 = vector.extract_strided_slice %257 {offsets = [0, 0], sizes = [8, 128], strides = [1, 1]} : vector<8x512xf32> to vector<8x128xf32>
    %259 = arith.negf %258 : vector<8x128xf32>
    %260 = math.exp %259 : vector<8x128xf32>
    %cst_115 = arith.constant 1.000000e+00 : f32
    %261 = vector.broadcast %cst_115 : f32 to vector<8x128xf32>
    %262 = arith.addf %261, %260 : vector<8x128xf32>
    %263 = arith.divf %261, %262 : vector<8x128xf32>
    %264 = vector.extract_strided_slice %257 {offsets = [0, 128], sizes = [8, 128], strides = [1, 1]} : vector<8x512xf32> to vector<8x128xf32>
    %265 = arith.negf %264 : vector<8x128xf32>
    %266 = math.exp %265 : vector<8x128xf32>
    %cst_116 = arith.constant 1.000000e+00 : f32
    %267 = vector.broadcast %cst_116 : f32 to vector<8x128xf32>
    %268 = arith.addf %267, %266 : vector<8x128xf32>
    %269 = arith.divf %267, %268 : vector<8x128xf32>
    %270 = vector.extract_strided_slice %257 {offsets = [0, 256], sizes = [8, 128], strides = [1, 1]} : vector<8x512xf32> to vector<8x128xf32>
    %271 = math.tanh %270 : vector<8x128xf32>
    %272 = vector.extract_strided_slice %257 {offsets = [0, 384], sizes = [8, 128], strides = [1, 1]} : vector<8x512xf32> to vector<8x128xf32>
    %273 = arith.negf %272 : vector<8x128xf32>
    %274 = math.exp %273 : vector<8x128xf32>
    %cst_117 = arith.constant 1.000000e+00 : f32
    %275 = vector.broadcast %cst_117 : f32 to vector<8x128xf32>
    %276 = arith.addf %275, %274 : vector<8x128xf32>
    %277 = arith.divf %275, %276 : vector<8x128xf32>
    %c0_118 = arith.constant 0 : index
    %c0_119 = arith.constant 0 : index
    %278 = vector.load %arg10[%c0_118, %c0_119] : memref<8x128xf32, #tpu.memory_space<vmem>>, vector<8x128xf32>
    %279 = arith.mulf %269, %278 : vector<8x128xf32>
    %280 = arith.mulf %263, %271 : vector<8x128xf32>
    %281 = arith.addf %279, %280 : vector<8x128xf32>
    %282 = math.tanh %281 : vector<8x128xf32>
    %283 = arith.mulf %277, %282 : vector<8x128xf32>
    %c0_120 = arith.constant 0 : index
    %c0_121 = arith.constant 0 : index
    %284 = vector.load %arg10[%c0_120, %c0_121] : memref<8x128xf32, #tpu.memory_space<vmem>>, vector<8x128xf32>
    tpu.vector_store %arg10[%c0_120, %c0_121], %281 {strides = array<i32>} : memref<8x128xf32, #tpu.memory_space<vmem>>, vector<8x128xf32>,
    %c0_122 = arith.constant 0 : index
    %c0_123 = arith.constant 0 : index
    %285 = vector.load %arg9[%c0_122, %c0_123] : memref<8x128xf32, #tpu.memory_space<vmem>>, vector<8x128xf32>
    tpu.vector_store %arg9[%c0_122, %c0_123], %283 {strides = array<i32>} : memref<8x128xf32, #tpu.memory_space<vmem>>, vector<8x128xf32>,
    %286 = arith.index_cast %c6_i32 : i32 to index
    %c0_124 = arith.constant 0 : index
    %c0_125 = arith.constant 0 : index
    %287 = vector.load %arg6[%286, %c0_124, %c0_125] : memref<8x8x128xf32, #tpu.memory_space<vmem>>, vector<1x8x128xf32>
    %288 = vector.shape_cast %287 : vector<1x8x128xf32> to vector<8x128xf32>
    %289 = vector.shape_cast %283 : vector<8x128xf32> to vector<1x8x128xf32>
    tpu.vector_store %arg6[%286, %c0_124, %c0_125], %289 {strides = array<i32>} : memref<8x8x128xf32, #tpu.memory_space<vmem>>, vector<1x8x128xf32>,
    %c7_i32 = arith.constant 7 : i32
    %290 = arith.index_cast %c7_i32 : i32 to index
    %c0_126 = arith.constant 0 : index
    %c0_127 = arith.constant 0 : index
    %291 = vector.load %arg2[%290, %c0_126, %c0_127] : memref<8x8x512xbf16, #tpu.memory_space<vmem>>, vector<1x8x512xbf16>
    %292 = vector.shape_cast %291 : vector<1x8x512xbf16> to vector<8x512xbf16>
    %293 = arith.extf %292 : vector<8x512xbf16> to vector<8x512xf32>
    %c0_128 = arith.constant 0 : index
    %c0_129 = arith.constant 0 : index
    %294 = vector.load %arg9[%c0_128, %c0_129] : memref<8x128xf32, #tpu.memory_space<vmem>>, vector<8x128xf32>
    %295 = arith.truncf %294 : vector<8x128xf32> to vector<8x128xbf16>
    %c0_130 = arith.constant 0 : index
    %c0_131 = arith.constant 0 : index
    %296 = vector.load %arg5[%c0_130, %c0_131] : memref<128x512xbf16, #tpu.memory_space<vmem>>, vector<128x512xbf16>
    %cst_132 = arith.constant dense<0.000000e+00> : vector<8x512xf32>
    %297 = tpu.matmul %295, %296, %cst_132 {dimension_numbers = #tpu.dot_dimension_numbers<[1], [0], [0], [1], [0, 0, 1, 1], [], []>} : vector<8x128xbf16>, vector<128x512xbf16>, vector<8x512xf32> -> vector<8x512xf32>
    %298 = arith.addf %293, %297 : vector<8x512xf32>
    %299 = vector.extract_strided_slice %298 {offsets = [0, 0], sizes = [8, 128], strides = [1, 1]} : vector<8x512xf32> to vector<8x128xf32>
    %300 = arith.negf %299 : vector<8x128xf32>
    %301 = math.exp %300 : vector<8x128xf32>
    %cst_133 = arith.constant 1.000000e+00 : f32
    %302 = vector.broadcast %cst_133 : f32 to vector<8x128xf32>
    %303 = arith.addf %302, %301 : vector<8x128xf32>
    %304 = arith.divf %302, %303 : vector<8x128xf32>
    %305 = vector.extract_strided_slice %298 {offsets = [0, 128], sizes = [8, 128], strides = [1, 1]} : vector<8x512xf32> to vector<8x128xf32>
    %306 = arith.negf %305 : vector<8x128xf32>
    %307 = math.exp %306 : vector<8x128xf32>
    %cst_134 = arith.constant 1.000000e+00 : f32
    %308 = vector.broadcast %cst_134 : f32 to vector<8x128xf32>
    %309 = arith.addf %308, %307 : vector<8x128xf32>
    %310 = arith.divf %308, %309 : vector<8x128xf32>
    %311 = vector.extract_strided_slice %298 {offsets = [0, 256], sizes = [8, 128], strides = [1, 1]} : vector<8x512xf32> to vector<8x128xf32>
    %312 = math.tanh %311 : vector<8x128xf32>
    %313 = vector.extract_strided_slice %298 {offsets = [0, 384], sizes = [8, 128], strides = [1, 1]} : vector<8x512xf32> to vector<8x128xf32>
    %314 = arith.negf %313 : vector<8x128xf32>
    %315 = math.exp %314 : vector<8x128xf32>
    %cst_135 = arith.constant 1.000000e+00 : f32
    %316 = vector.broadcast %cst_135 : f32 to vector<8x128xf32>
    %317 = arith.addf %316, %315 : vector<8x128xf32>
    %318 = arith.divf %316, %317 : vector<8x128xf32>
    %c0_136 = arith.constant 0 : index
    %c0_137 = arith.constant 0 : index
    %319 = vector.load %arg10[%c0_136, %c0_137] : memref<8x128xf32, #tpu.memory_space<vmem>>, vector<8x128xf32>
    %320 = arith.mulf %310, %319 : vector<8x128xf32>
    %321 = arith.mulf %304, %312 : vector<8x128xf32>
    %322 = arith.addf %320, %321 : vector<8x128xf32>
    %323 = math.tanh %322 : vector<8x128xf32>
    %324 = arith.mulf %318, %323 : vector<8x128xf32>
    %c0_138 = arith.constant 0 : index
    %c0_139 = arith.constant 0 : index
    %325 = vector.load %arg10[%c0_138, %c0_139] : memref<8x128xf32, #tpu.memory_space<vmem>>, vector<8x128xf32>
    tpu.vector_store %arg10[%c0_138, %c0_139], %322 {strides = array<i32>} : memref<8x128xf32, #tpu.memory_space<vmem>>, vector<8x128xf32>,
    %c0_140 = arith.constant 0 : index
    %c0_141 = arith.constant 0 : index
    %326 = vector.load %arg9[%c0_140, %c0_141] : memref<8x128xf32, #tpu.memory_space<vmem>>, vector<8x128xf32>
    tpu.vector_store %arg9[%c0_140, %c0_141], %324 {strides = array<i32>} : memref<8x128xf32, #tpu.memory_space<vmem>>, vector<8x128xf32>,
    %327 = arith.index_cast %c7_i32 : i32 to index
    %c0_142 = arith.constant 0 : index
    %c0_143 = arith.constant 0 : index
    %328 = vector.load %arg6[%327, %c0_142, %c0_143] : memref<8x8x128xf32, #tpu.memory_space<vmem>>, vector<1x8x128xf32>
    %329 = vector.shape_cast %328 : vector<1x8x128xf32> to vector<8x128xf32>
    %330 = vector.shape_cast %324 : vector<8x128xf32> to vector<1x8x128xf32>
    tpu.vector_store %arg6[%327, %c0_142, %c0_143], %330 {strides = array<i32>} : memref<8x8x128xf32, #tpu.memory_space<vmem>>, vector<1x8x128xf32>,
    %c8_i32 = arith.constant 8 : i32
    %c0_i32_144 = arith.constant 0 : i32
    %331 = arith.cmpi eq, %arg1, %c0_i32_144 : i32
    %332 = arith.extui %331 : i1 to i32
    %c0_i32_145 = arith.constant 0 : i32
    %333 = arith.cmpi ne, %332, %c0_i32_145 : i32
    scf.if %333 {
      %c0_146 = arith.constant 0 : index
      %c0_147 = arith.constant 0 : index
      %334 = vector.load %arg9[%c0_146, %c0_147] : memref<8x128xf32, #tpu.memory_space<vmem>>, vector<8x128xf32>
      %c0_148 = arith.constant 0 : index
      %c0_149 = arith.constant 0 : index
      %335 = vector.load %arg7[%c0_148, %c0_149] : memref<8x128xf32, #tpu.memory_space<vmem>>, vector<8x128xf32>
      tpu.vector_store %arg7[%c0_148, %c0_149], %334 {strides = array<i32>} : memref<8x128xf32, #tpu.memory_space<vmem>>, vector<8x128xf32>,
      %c0_150 = arith.constant 0 : index
      %c0_151 = arith.constant 0 : index
      %336 = vector.load %arg10[%c0_150, %c0_151] : memref<8x128xf32, #tpu.memory_space<vmem>>, vector<8x128xf32>
      %c0_152 = arith.constant 0 : index
      %c0_153 = arith.constant 0 : index
      %337 = vector.load %arg8[%c0_152, %c0_153] : memref<8x128xf32, #tpu.memory_space<vmem>>, vector<8x128xf32>
      tpu.vector_store %arg8[%c0_152, %c0_153], %336 {strides = array<i32>} : memref<8x128xf32, #tpu.memory_space<vmem>>, vector<8x128xf32>,
    } else {
    }
    return
  }
  func.func @transform_0(%arg0: i32, %arg1: i32) -> (i32, i32, i32) {
    %c0_i32 = arith.constant 0 : i32
    %c0_i32_0 = arith.constant 0 : i32
    return %arg1, %arg0, %c0_i32 : i32, i32, i32
  }
  func.func @transform_1(%arg0: i32, %arg1: i32) -> (i32, i32) {
    %c0_i32 = arith.constant 0 : i32
    %c0_i32_0 = arith.constant 0 : i32
    return %arg0, %c0_i32 : i32, i32
  }
  func.func @transform_2(%arg0: i32, %arg1: i32) -> (i32, i32) {
    %c0_i32 = arith.constant 0 : i32
    %c0_i32_0 = arith.constant 0 : i32
    return %arg0, %c0_i32 : i32, i32
  }
  func.func @transform_3(%arg0: i32, %arg1: i32) -> (i32, i32) {
    %c0_i32 = arith.constant 0 : i32
    %c0_i32_0 = arith.constant 0 : i32
    %c0_i32_1 = arith.constant 0 : i32
    return %c0_i32, %c0_i32_0 : i32, i32
  }
  func.func @transform_4(%arg0: i32, %arg1: i32) -> (i32, i32, i32) {
    %c0_i32 = arith.constant 0 : i32
    %c0_i32_0 = arith.constant 0 : i32
    return %arg1, %arg0, %c0_i32 : i32, i32, i32
  }
  func.func @transform_5(%arg0: i32, %arg1: i32) -> (i32, i32) {
    %c0_i32 = arith.constant 0 : i32
    %c0_i32_0 = arith.constant 0 : i32
    return %arg0, %c0_i32 : i32, i32
  }
  func.func @transform_6(%arg0: i32, %arg1: i32) -> (i32, i32) {
    %c0_i32 = arith.constant 0 : i32
    %c0_i32_0 = arith.constant 0 : i32
    return %arg0, %c0_i32 : i32, i32
  }
}

</mosaic_0001>

<llo_original>
// kernel: lstm_module_forward.9
$region0: #{lstm_module_forward.9}
  #allocation0 [shape = 'u32[]', space=smem, size = 0x4, offset = 0x4, fixed_abs, tag = 'smem constant byte address 0x4 - core index']
  #allocation1 [shape = 'u32[72,128]{1,0:T(1,128)}', space=vmem, size = 0x9000, scoped, tag = 'internal scratch']
  %s0 = inlined_call_operand.vmem [shape: f32[16,32], index: 0, kind: input, shape index: {}]
  %s1 = inlined_call_operand.vmem [shape: bf16[32,16], index: 1, kind: input, shape index: {}]
  %s2 = inlined_call_operand.vmem [shape: f32[1,16], index: 2, kind: input, shape index: {}]
  %s3 = inlined_call_operand.hbm [shape: f32[16,16], index: 3, kind: output, shape index: {}]
  %s4 = sld [smem:[#allocation0]]
  $region22: #{lstm_module_forward.9} parent=0
    _
  %s6 = ssub.s32 1, %s4
  %s7 = scalar_select 0, %s6, %s4
  $region1: #{lstm_module_forward.9} parent=0
    #allocation2 [shape = 'u8[8192]{0}', space=vmem, size = 0x2000, scoped, tag = 'output window, operand 0, single buffered']
    #allocation3 [shape = 's32[1]{0}', space=sflag, size = 0x4, scoped, tag = 'scoped memory for lstm_module_forward.9']
    %8 = vsyncpa [#allocation3], 0
    // Predicated region
    $region2: #{lstm_module_forward.9} parent=1 // pred_check
      _
    $region3: #{lstm_module_forward.9} parent=1 // pred_check_branch
      %10 = sbr.rel (0) target = $region5
    $region4: #{lstm_module_forward.9} parent=1 // pred_region
      _
    $region5: #{lstm_module_forward.9} parent=1 // pred_fallthru
      _
    // Predicated region
    $region6: #{lstm_module_forward.9} parent=1 // pred_check
      _
    $region7: #{lstm_module_forward.9} parent=1 // pred_check_branch
      %12 = sbr.rel (0) target = $region9
    $region8: #{lstm_module_forward.9} parent=1 // pred_region
      _
    $region9: #{lstm_module_forward.9} parent=1 // pred_fallthru
      _
    // Predicated region
    $region10: #{lstm_module_forward.9} parent=1 // pred_check
      _
    $region11: #{lstm_module_forward.9} parent=1 // pred_check_branch
      %14 = sbr.rel (0) target = $region13
    $region12: #{lstm_module_forward.9} parent=1 // pred_region
      _
    $region13: #{lstm_module_forward.9} parent=1 // pred_fallthru
      _
    %v16 = vld [vmem:[%s0] sm:$0xff]
    %v17 = vld [vmem:[%s0 + $0x8] sm:$0xff]
    %v18 = vpack.c.bf16 %v17, %v16
    %v19 = vld [vmem:[%s1] sm:$0xf]
    %v20 = vld [vmem:[%s1 + $0x4] sm:$0xf]
    %v21 = vld [vmem:[%s1 + $0x8] sm:$0xf]
    %v22 = vld [vmem:[%s1 + $0xc] sm:$0xf]
    %v23 = vld [vmem:[%s2] sm:$0x1]
    %v25 = vperm.slane %v23, 0
    %v31 = vunpack.c.l.b16 %v19
    %v32 = vunpack.c.l.b16 %v20
    %v33 = vunpack.c.l.b16 %v21
    %v34 = vunpack.c.l.b16 %v22
    %v35 = vpack.c.b16 %v32, %v31
    %v36 = vpack.c.b16 %v34, %v33
    %vm39 = vcmask 261120
    %v41 = vsel %vm39, %v18, 0
    %43 = vmatpush.bf16.msra.mxu0 0
    %44 = vmatpush.bf16.msra.mxu0 0
    %45 = vmatpush.bf16.msra.mxu0 0
    %46 = vmatpush.bf16.msra.mxu0 0
    %47 = vmatpush.bf16.msra.mxu0 0
    %48 = vmatpush.bf16.msra.mxu0 0
    %49 = vmatpush.bf16.msra.mxu0 %v36
    %50 = vmatpush.bf16.msra.mxu0 %v35
    %51 = vmatmul.bf16.gmra.mxu0 %v41
    %v52 = vpop.f32.mrf.mxu0
    %v53 = vadd.f32 %v25, %v52
    %v54 = vpop.f32.mrf.mxu0
    %v55 = vadd.f32 %v25, %v54
    %56 = vdwg.mxu0
    %vm57 = vcmask 130048
    %58 = vst.msk [vmem:[#allocation2] sm:$0xff] %vm57, %v53
    %59 = vst.msk [vmem:[#allocation2 + $0x8] sm:$0xff] %vm57, %v55
    // Predicated region
    $region14: #{lstm_module_forward.9} parent=1 // pred_check
      _
    $region15: #{lstm_module_forward.9} parent=1 // pred_check_branch
      %61 = sbr.rel (0) target = $region17
    $region16: #{lstm_module_forward.9} parent=1 // pred_region
      %63 = vsyncadd [#allocation3], 0
      %s64 = sshll.u32 [#allocation2], 4
      %s65 = int_to_ptr.vmem [resolvable:$true] %s64
      %s66 = sshll.u32 %s3, 4
      %s67 = int_to_ptr.hbm [resolvable:$true] %s66
      %72 = dma.vmem_to_hbm [thread:$0]  %s65, 256, %s67, [#allocation3], 128, 128, 8
    $region17: #{lstm_module_forward.9} parent=1 // pred_fallthru
      _
    // Predicated region
    $region18: #{lstm_module_forward.9} parent=1 // pred_check
      _
    $region19: #{lstm_module_forward.9} parent=1 // pred_check_branch
      %74 = sbr.rel (0) target = $region21
    $region20: #{lstm_module_forward.9} parent=1 // pred_region
      %76 = dma.done [#allocation3], 256
    $region21: #{lstm_module_forward.9} parent=1 // pred_fallthru
      _
    %77 = vsyncpa [#allocation3], 1

// kernel: lstm_module_forward.5
$region0: #{lstm_module_forward.5}
  #allocation0 [shape = 'u32[]', space=smem, size = 0x4, offset = 0x4, fixed_abs, tag = 'smem constant byte address 0x4 - core index']
  #allocation1 [shape = 'u32[72,128]{1,0:T(1,128)}', space=vmem, size = 0x9000, scoped, tag = 'internal scratch']
  %s0 = inlined_call_operand.vmem [shape: f32[64,16], index: 0, kind: input, shape index: {}]
  %s1 = inlined_call_operand.vmem [shape: bf16[16,512], index: 1, kind: input, shape index: {}]
  %s2 = inlined_call_operand.vmem [shape: f32[1,512], index: 2, kind: input, shape index: {}]
  %s3 = inlined_call_operand.vmem [shape: bf16[64,512], index: 3, kind: output, shape index: {}]
  %s4 = sld [smem:[#allocation0]]
  $region22: #{lstm_module_forward.5} parent=0
    _
  %s6 = ssub.s32 1, %s4
  %s7 = scalar_select 0, %s6, %s4
  // Predicated region
  $region2: #{lstm_module_forward.5} parent=0 // pred_check
    _
  $region3: #{lstm_module_forward.5} parent=0 // pred_check_branch
    %9 = sbr.rel (0) target = $region5
  $region4: #{lstm_module_forward.5} parent=0 // pred_region
    _
  $region5: #{lstm_module_forward.5} parent=0 // pred_fallthru
    _
  // Predicated region
  $region6: #{lstm_module_forward.5} parent=0 // pred_check
    _
  $region7: #{lstm_module_forward.5} parent=0 // pred_check_branch
    %11 = sbr.rel (0) target = $region9
  $region8: #{lstm_module_forward.5} parent=0 // pred_region
    _
  $region9: #{lstm_module_forward.5} parent=0 // pred_fallthru
    _
  // Predicated region
  $region10: #{lstm_module_forward.5} parent=0 // pred_check
    _
  $region11: #{lstm_module_forward.5} parent=0 // pred_check_branch
    %13 = sbr.rel (0) target = $region13
  $region12: #{lstm_module_forward.5} parent=0 // pred_region
    _
  $region13: #{lstm_module_forward.5} parent=0 // pred_fallthru
    _
  %v15 = vld [vmem:[%s0] sm:$0xff]
  %v16 = vld [vmem:[%s0 + $0x8] sm:$0xff]
  %v17 = vld [vmem:[%s0 + $0x10] sm:$0xff]
  %v18 = vld [vmem:[%s0 + $0x18] sm:$0xff]
  %v19 = vld [vmem:[%s0 + $0x20] sm:$0xff]
  %v20 = vld [vmem:[%s0 + $0x28] sm:$0xff]
  %v21 = vld [vmem:[%s0 + $0x30] sm:$0xff]
  %v22 = vld [vmem:[%s0 + $0x38] sm:$0xff]
  %v23 = vpack.c.bf16 %v16, %v15
  %v24 = vpack.c.bf16 %v18, %v17
  %v25 = vpack.c.bf16 %v20, %v19
  %v26 = vpack.c.bf16 %v22, %v21
  %v27 = vld [vmem:[%s1] sm:$0xff]
  %v28 = vld [vmem:[%s1 + $0x8] sm:$0xff]
  %v29 = vld [vmem:[%s1 + $0x10] sm:$0xff]
  %v30 = vld [vmem:[%s1 + $0x18] sm:$0xff]
  %v31 = vld [vmem:[%s2] sm:$0xf]
  %v33 = vperm.slane %v31, 0
  %v34 = vperm.slane %v31, 1
  %v35 = vperm.slane %v31, 2
  %v36 = vperm.slane %v31, 3
  %v45 = vunpack.c.l.b16 %v27
  %v46 = vunpack.c.h.b16 %v27
  %v47 = vunpack.c.l.b16 %v28
  %v48 = vunpack.c.h.b16 %v28
  %v49 = vunpack.c.l.b16 %v29
  %v50 = vunpack.c.h.b16 %v29
  %v51 = vunpack.c.l.b16 %v30
  %v52 = vunpack.c.h.b16 %v30
  %v53 = vpack.c.b16 %v49, %v45
  %v54 = vpack.c.b16 %v50, %v46
  %v55 = vpack.c.b16 %v51, %v47
  %v56 = vpack.c.b16 %v52, %v48
  %vm61 = vcmask 130048
  %v63 = vsel %vm61, %v23, 0
  %v66 = vsel %vm61, %v24, 0
  %v69 = vsel %vm61, %v25, 0
  %v72 = vsel %vm61, %v26, 0
  %74 = vmatpush.bf16.msra.mxu0 0
  %75 = vmatpush.bf16.msra.mxu0 0
  %76 = vmatpush.bf16.msra.mxu0 0
  %77 = vmatpush.bf16.msra.mxu0 0
  %78 = vmatpush.bf16.msra.mxu0 0
  %79 = vmatpush.bf16.msra.mxu0 0
  %80 = vmatpush.bf16.msra.mxu0 0
  %81 = vmatpush.bf16.msra.mxu0 %v53
  %82 = vmatmul.bf16.gmra.mxu0 %v63
  %v83 = vpop.f32.mrf.mxu0
  %v84 = vadd.f32 %v33, %v83
  %v85 = vpop.f32.mrf.mxu0
  %v86 = vadd.f32 %v33, %v85
  %87 = vmatmul.bf16.gmra.mxu0 %v66
  %v88 = vpop.f32.mrf.mxu0
  %v89 = vadd.f32 %v33, %v88
  %v90 = vpop.f32.mrf.mxu0
  %v91 = vadd.f32 %v33, %v90
  %92 = vmatmul.bf16.gmra.mxu0 %v69
  %v93 = vpop.f32.mrf.mxu0
  %v94 = vadd.f32 %v33, %v93
  %v95 = vpop.f32.mrf.mxu0
  %v96 = vadd.f32 %v33, %v95
  %97 = vmatmul.bf16.gmra.mxu0 %v72
  %v98 = vpop.f32.mrf.mxu0
  %v99 = vadd.f32 %v33, %v98
  %v100 = vpop.f32.mrf.mxu0
  %v101 = vadd.f32 %v33, %v100
  %102 = vdwg.mxu0
  %103 = vmatpush.bf16.msra.mxu0 0
  %104 = vmatpush.bf16.msra.mxu0 0
  %105 = vmatpush.bf16.msra.mxu0 0
  %106 = vmatpush.bf16.msra.mxu0 0
  %107 = vmatpush.bf16.msra.mxu0 0
  %108 = vmatpush.bf16.msra.mxu0 0
  %109 = vmatpush.bf16.msra.mxu0 0
  %110 = vmatpush.bf16.msra.mxu0 %v54
  %111 = vmatmul.bf16.gmra.mxu0 %v63
  %v112 = vpop.f32.mrf.mxu0
  %v113 = vadd.f32 %v34, %v112
  %v114 = vpop.f32.mrf.mxu0
  %v115 = vadd.f32 %v34, %v114
  %116 = vmatmul.bf16.gmra.mxu0 %v66
  %v117 = vpop.f32.mrf.mxu0
  %v118 = vadd.f32 %v34, %v117
  %v119 = vpop.f32.mrf.mxu0
  %v120 = vadd.f32 %v34, %v119
  %121 = vmatmul.bf16.gmra.mxu0 %v69
  %v122 = vpop.f32.mrf.mxu0
  %v123 = vadd.f32 %v34, %v122
  %v124 = vpop.f32.mrf.mxu0
  %v125 = vadd.f32 %v34, %v124
  %126 = vmatmul.bf16.gmra.mxu0 %v72
  %v127 = vpop.f32.mrf.mxu0
  %v128 = vadd.f32 %v34, %v127
  %v129 = vpop.f32.mrf.mxu0
  %v130 = vadd.f32 %v34, %v129
  %131 = vdwg.mxu0
  %132 = vmatpush.bf16.msra.mxu0 0
  %133 = vmatpush.bf16.msra.mxu0 0
  %134 = vmatpush.bf16.msra.mxu0 0
  %135 = vmatpush.bf16.msra.mxu0 0
  %136 = vmatpush.bf16.msra.mxu0 0
  %137 = vmatpush.bf16.msra.mxu0 0
  %138 = vmatpush.bf16.msra.mxu0 0
  %139 = vmatpush.bf16.msra.mxu0 %v55
  %140 = vmatmul.bf16.gmra.mxu0 %v63
  %v141 = vpop.f32.mrf.mxu0
  %v142 = vadd.f32 %v35, %v141
  %v143 = vpop.f32.mrf.mxu0
  %v144 = vadd.f32 %v35, %v143
  %145 = vmatmul.bf16.gmra.mxu0 %v66
  %v146 = vpop.f32.mrf.mxu0
  %v147 = vadd.f32 %v35, %v146
  %v148 = vpop.f32.mrf.mxu0
  %v149 = vadd.f32 %v35, %v148
  %150 = vmatmul.bf16.gmra.mxu0 %v69
  %v151 = vpop.f32.mrf.mxu0
  %v152 = vadd.f32 %v35, %v151
  %v153 = vpop.f32.mrf.mxu0
  %v154 = vadd.f32 %v35, %v153
  %155 = vmatmul.bf16.gmra.mxu0 %v72
  %v156 = vpop.f32.mrf.mxu0
  %v157 = vadd.f32 %v35, %v156
  %v158 = vpop.f32.mrf.mxu0
  %v159 = vadd.f32 %v35, %v158
  %160 = vdwg.mxu0
  %161 = vmatpush.bf16.msra.mxu0 0
  %162 = vmatpush.bf16.msra.mxu0 0
  %163 = vmatpush.bf16.msra.mxu0 0
  %164 = vmatpush.bf16.msra.mxu0 0
  %165 = vmatpush.bf16.msra.mxu0 0
  %166 = vmatpush.bf16.msra.mxu0 0
  %167 = vmatpush.bf16.msra.mxu0 0
  %168 = vmatpush.bf16.msra.mxu0 %v56
  %169 = vmatmul.bf16.gmra.mxu0 %v63
  %v170 = vpop.f32.mrf.mxu0
  %v171 = vadd.f32 %v36, %v170
  %v172 = vpop.f32.mrf.mxu0
  %v173 = vadd.f32 %v36, %v172
  %174 = vmatmul.bf16.gmra.mxu0 %v66
  %v175 = vpop.f32.mrf.mxu0
  %v176 = vadd.f32 %v36, %v175
  %v177 = vpop.f32.mrf.mxu0
  %v178 = vadd.f32 %v36, %v177
  %179 = vmatmul.bf16.gmra.mxu0 %v69
  %v180 = vpop.f32.mrf.mxu0
  %v181 = vadd.f32 %v36, %v180
  %v182 = vpop.f32.mrf.mxu0
  %v183 = vadd.f32 %v36, %v182
  %184 = vmatmul.bf16.gmra.mxu0 %v72
  %v185 = vpop.f32.mrf.mxu0
  %v186 = vadd.f32 %v36, %v185
  %v187 = vpop.f32.mrf.mxu0
  %v188 = vadd.f32 %v36, %v187
  %189 = vdwg.mxu0
  %v190 = vpack.c.bf16 %v113, %v84
  %v191 = vpack.c.bf16 %v171, %v142
  %v192 = vpack.c.bf16 %v115, %v86
  %v193 = vpack.c.bf16 %v173, %v144
  %v194 = vpack.c.bf16 %v118, %v89
  %v195 = vpack.c.bf16 %v176, %v147
  %v196 = vpack.c.bf16 %v120, %v91
  %v197 = vpack.c.bf16 %v178, %v149
  %v198 = vpack.c.bf16 %v123, %v94
  %v199 = vpack.c.bf16 %v181, %v152
  %v200 = vpack.c.bf16 %v125, %v96
  %v201 = vpack.c.bf16 %v183, %v154
  %v202 = vpack.c.bf16 %v128, %v99
  %v203 = vpack.c.bf16 %v186, %v157
  %v204 = vpack.c.bf16 %v130, %v101
  %v205 = vpack.c.bf16 %v188, %v159
  %206 = vst [vmem:[%s3] sm:$0xff] %v190
  %207 = vst [vmem:[%s3 + $0x8] sm:$0xff] %v191
  %208 = vst [vmem:[%s3 + $0x10] sm:$0xff] %v192
  %209 = vst [vmem:[%s3 + $0x18] sm:$0xff] %v193
  %210 = vst [vmem:[%s3 + $0x20] sm:$0xff] %v194
  %211 = vst [vmem:[%s3 + $0x28] sm:$0xff] %v195
  %212 = vst [vmem:[%s3 + $0x30] sm:$0xff] %v196
  %213 = vst [vmem:[%s3 + $0x38] sm:$0xff] %v197
  %214 = vst [vmem:[%s3 + $0x40] sm:$0xff] %v198
  %215 = vst [vmem:[%s3 + $0x48] sm:$0xff] %v199
  %216 = vst [vmem:[%s3 + $0x50] sm:$0xff] %v200
  %217 = vst [vmem:[%s3 + $0x58] sm:$0xff] %v201
  %218 = vst [vmem:[%s3 + $0x60] sm:$0xff] %v202
  %219 = vst [vmem:[%s3 + $0x68] sm:$0xff] %v203
  %220 = vst [vmem:[%s3 + $0x70] sm:$0xff] %v204
  %221 = vst [vmem:[%s3 + $0x78] sm:$0xff] %v205
  // Predicated region
  $region14: #{lstm_module_forward.5} parent=0 // pred_check
    _
  $region15: #{lstm_module_forward.5} parent=0 // pred_check_branch
    %223 = sbr.rel (0) target = $region17
  $region16: #{lstm_module_forward.5} parent=0 // pred_region
    _
  $region17: #{lstm_module_forward.5} parent=0 // pred_fallthru
    _
  // Predicated region
  $region18: #{lstm_module_forward.5} parent=0 // pred_check
    _
  $region19: #{lstm_module_forward.5} parent=0 // pred_check_branch
    %225 = sbr.rel (0) target = $region21
  $region20: #{lstm_module_forward.5} parent=0 // pred_region
    _
  $region21: #{lstm_module_forward.5} parent=0 // pred_fallthru
    _

// kernel: lstm_module_forward.7
$region0: #{lstm_module_forward.7}
  #allocation0 [shape = 'u32[]', space=smem, size = 0x4, offset = 0x4, fixed_abs, tag = 'smem constant byte address 0x4 - core index']
  #allocation1 [shape = 'u32[72,128]{1,0:T(1,128)}', space=vmem, size = 0x9000, scoped, tag = 'internal scratch']
  %s0 = inlined_call_operand.vmem [shape: f32[64,128], index: 0, kind: input, shape index: {}]
  %s1 = inlined_call_operand.hbm [shape: bf16[128,512], index: 1, kind: input, shape index: {}]
  %s2 = inlined_call_operand.vmem [shape: f32[1,512], index: 2, kind: input, shape index: {}]
  %s3 = inlined_call_operand.vmem [shape: bf16[64,512], index: 3, kind: output, shape index: {}]
  %s4 = sld [smem:[#allocation0]]
  $region26: #{lstm_module_forward.7} parent=0
    _
  %s6 = ssub.s32 1, %s4
  %s7 = scalar_select 0, %s6, %s4
  $region1: #{lstm_module_forward.7} parent=0
    #allocation2 [shape = 'u8[131072]{0}', space=vmem, size = 0x20000, scoped, tag = 'input window, operand 1, single buffered']
    #allocation3 [shape = 's32[1]{0}', space=sflag, size = 0x4, scoped, tag = 'scoped memory for lstm_module_forward.7']
    %8 = vsyncpa [#allocation3], 0
    // Predicated region
    $region2: #{lstm_module_forward.7} parent=1 // pred_check
      _
    $region3: #{lstm_module_forward.7} parent=1 // pred_check_branch
      %10 = sbr.rel (0) target = $region5
    $region4: #{lstm_module_forward.7} parent=1 // pred_region
      _
    $region5: #{lstm_module_forward.7} parent=1 // pred_fallthru
      _
    // Predicated region
    $region6: #{lstm_module_forward.7} parent=1 // pred_check
      _
    $region7: #{lstm_module_forward.7} parent=1 // pred_check_branch
      %12 = sbr.rel (0) target = $region9
    $region8: #{lstm_module_forward.7} parent=1 // pred_region
      %14 = vsyncadd [#allocation3], 0
      %s15 = sshll.u32 %s1, 4
      %s16 = int_to_ptr.hbm [resolvable:$true] %s15
      %s17 = sshll.u32 [#allocation2], 4
      %s18 = int_to_ptr.vmem [resolvable:$true] %s17
      %23 = dma.hbm_to_vmem [thread:$0]  %s16, 4096, %s18, [#allocation3], 256, 256, 16
    $region9: #{lstm_module_forward.7} parent=1 // pred_fallthru
      _
    // Predicated region
    $region10: #{lstm_module_forward.7} parent=1 // pred_check
      _
    $region11: #{lstm_module_forward.7} parent=1 // pred_check_branch
      %25 = sbr.rel (0) target = $region13
    $region12: #{lstm_module_forward.7} parent=1 // pred_region
      _
    $region13: #{lstm_module_forward.7} parent=1 // pred_fallthru
      _
    // Predicated region
    $region14: #{lstm_module_forward.7} parent=1 // pred_check
      _
    $region15: #{lstm_module_forward.7} parent=1 // pred_check_branch
      %27 = sbr.rel (0) target = $region17
    $region16: #{lstm_module_forward.7} parent=1 // pred_region
      %29 = dma.done [#allocation3], 4096
    $region17: #{lstm_module_forward.7} parent=1 // pred_fallthru
      _
    %v30 = vld [vmem:[%s0] sm:$0xff]
    %v31 = vld [vmem:[%s0 + $0x8] sm:$0xff]
    %v32 = vld [vmem:[%s0 + $0x10] sm:$0xff]
    %v33 = vld [vmem:[%s0 + $0x18] sm:$0xff]
    %v34 = vld [vmem:[%s0 + $0x20] sm:$0xff]
    %v35 = vld [vmem:[%s0 + $0x28] sm:$0xff]
    %v36 = vld [vmem:[%s0 + $0x30] sm:$0xff]
    %v37 = vld [vmem:[%s0 + $0x38] sm:$0xff]
    %v38 = vpack.c.bf16 %v31, %v30
    %v39 = vpack.c.bf16 %v33, %v32
    %v40 = vpack.c.bf16 %v35, %v34
    %v41 = vpack.c.bf16 %v37, %v36
    %v42 = vld [vmem:[#allocation2] sm:$0xff]
    %v43 = vld [vmem:[#allocation2 + $0x8] sm:$0xff]
    %v44 = vld [vmem:[#allocation2 + $0x10] sm:$0xff]
    %v45 = vld [vmem:[#allocation2 + $0x18] sm:$0xff]
    %v46 = vld [vmem:[#allocation2 + $0x20] sm:$0xff]
    %v47 = vld [vmem:[#allocation2 + $0x28] sm:$0xff]
    %v48 = vld [vmem:[#allocation2 + $0x30] sm:$0xff]
    %v49 = vld [vmem:[#allocation2 + $0x38] sm:$0xff]
    %v50 = vld [vmem:[#allocation2 + $0x40] sm:$0xff]
    %v51 = vld [vmem:[#allocation2 + $0x48] sm:$0xff]
    %v52 = vld [vmem:[#allocation2 + $0x50] sm:$0xff]
    %v53 = vld [vmem:[#allocation2 + $0x58] sm:$0xff]
    %v54 = vld [vmem:[#allocation2 + $0x60] sm:$0xff]
    %v55 = vld [vmem:[#allocation2 + $0x68] sm:$0xff]
    %v56 = vld [vmem:[#allocation2 + $0x70] sm:$0xff]
    %v57 = vld [vmem:[#allocation2 + $0x78] sm:$0xff]
    %v58 = vld [vmem:[#allocation2 + $0x80] sm:$0xff]
    %v59 = vld [vmem:[#allocation2 + $0x88] sm:$0xff]
    %v60 = vld [vmem:[#allocation2 + $0x90] sm:$0xff]
    %v61 = vld [vmem:[#allocation2 + $0x98] sm:$0xff]
    %v62 = vld [vmem:[#allocation2 + $0xa0] sm:$0xff]
    %v63 = vld [vmem:[#allocation2 + $0xa8] sm:$0xff]
    %v64 = vld [vmem:[#allocation2 + $0xb0] sm:$0xff]
    %v65 = vld [vmem:[#allocation2 + $0xb8] sm:$0xff]
    %v66 = vld [vmem:[#allocation2 + $0xc0] sm:$0xff]
    %v67 = vld [vmem:[#allocation2 + $0xc8] sm:$0xff]
    %v68 = vld [vmem:[#allocation2 + $0xd0] sm:$0xff]
    %v69 = vld [vmem:[#allocation2 + $0xd8] sm:$0xff]
    %v70 = vld [vmem:[#allocation2 + $0xe0] sm:$0xff]
    %v71 = vld [vmem:[#allocation2 + $0xe8] sm:$0xff]
    %v72 = vld [vmem:[#allocation2 + $0xf0] sm:$0xff]
    %v73 = vld [vmem:[#allocation2 + $0xf8] sm:$0xff]
    %v74 = vld [vmem:[%s2] sm:$0xf]
    %v76 = vperm.slane %v74, 0
    %v77 = vperm.slane %v74, 1
    %v78 = vperm.slane %v74, 2
    %v79 = vperm.slane %v74, 3
    %v116 = vunpack.c.l.b16 %v42
    %v117 = vunpack.c.h.b16 %v42
    %v118 = vunpack.c.l.b16 %v43
    %v119 = vunpack.c.h.b16 %v43
    %v120 = vunpack.c.l.b16 %v44
    %v121 = vunpack.c.h.b16 %v44
    %v122 = vunpack.c.l.b16 %v45
    %v123 = vunpack.c.h.b16 %v45
    %v124 = vunpack.c.l.b16 %v46
    %v125 = vunpack.c.h.b16 %v46
    %v126 = vunpack.c.l.b16 %v47
    %v127 = vunpack.c.h.b16 %v47
    %v128 = vunpack.c.l.b16 %v48
    %v129 = vunpack.c.h.b16 %v48
    %v130 = vunpack.c.l.b16 %v49
    %v131 = vunpack.c.h.b16 %v49
    %v132 = vunpack.c.l.b16 %v50
    %v133 = vunpack.c.h.b16 %v50
    %v134 = vunpack.c.l.b16 %v51
    %v135 = vunpack.c.h.b16 %v51
    %v136 = vunpack.c.l.b16 %v52
    %v137 = vunpack.c.h.b16 %v52
    %v138 = vunpack.c.l.b16 %v53
    %v139 = vunpack.c.h.b16 %v53
    %v140 = vunpack.c.l.b16 %v54
    %v141 = vunpack.c.h.b16 %v54
    %v142 = vunpack.c.l.b16 %v55
    %v143 = vunpack.c.h.b16 %v55
    %v144 = vunpack.c.l.b16 %v56
    %v145 = vunpack.c.h.b16 %v56
    %v146 = vunpack.c.l.b16 %v57
    %v147 = vunpack.c.h.b16 %v57
    %v148 = vunpack.c.l.b16 %v58
    %v149 = vunpack.c.h.b16 %v58
    %v150 = vunpack.c.l.b16 %v59
    %v151 = vunpack.c.h.b16 %v59
    %v152 = vunpack.c.l.b16 %v60
    %v153 = vunpack.c.h.b16 %v60
    %v154 = vunpack.c.l.b16 %v61
    %v155 = vunpack.c.h.b16 %v61
    %v156 = vunpack.c.l.b16 %v62
    %v157 = vunpack.c.h.b16 %v62
    %v158 = vunpack.c.l.b16 %v63
    %v159 = vunpack.c.h.b16 %v63
    %v160 = vunpack.c.l.b16 %v64
    %v161 = vunpack.c.h.b16 %v64
    %v162 = vunpack.c.l.b16 %v65
    %v163 = vunpack.c.h.b16 %v65
    %v164 = vunpack.c.l.b16 %v66
    %v165 = vunpack.c.h.b16 %v66
    %v166 = vunpack.c.l.b16 %v67
    %v167 = vunpack.c.h.b16 %v67
    %v168 = vunpack.c.l.b16 %v68
    %v169 = vunpack.c.h.b16 %v68
    %v170 = vunpack.c.l.b16 %v69
    %v171 = vunpack.c.h.b16 %v69
    %v172 = vunpack.c.l.b16 %v70
    %v173 = vunpack.c.h.b16 %v70
    %v174 = vunpack.c.l.b16 %v71
    %v175 = vunpack.c.h.b16 %v71
    %v176 = vunpack.c.l.b16 %v72
    %v177 = vunpack.c.h.b16 %v72
    %v178 = vunpack.c.l.b16 %v73
    %v179 = vunpack.c.h.b16 %v73
    %v180 = vpack.c.b16 %v120, %v116
    %v181 = vpack.c.b16 %v121, %v117
    %v182 = vpack.c.b16 %v122, %v118
    %v183 = vpack.c.b16 %v123, %v119
    %v184 = vpack.c.b16 %v128, %v124
    %v185 = vpack.c.b16 %v129, %v125
    %v186 = vpack.c.b16 %v130, %v126
    %v187 = vpack.c.b16 %v131, %v127
    %v188 = vpack.c.b16 %v136, %v132
    %v189 = vpack.c.b16 %v137, %v133
    %v190 = vpack.c.b16 %v138, %v134
    %v191 = vpack.c.b16 %v139, %v135
    %v192 = vpack.c.b16 %v144, %v140
    %v193 = vpack.c.b16 %v145, %v141
    %v194 = vpack.c.b16 %v146, %v142
    %v195 = vpack.c.b16 %v147, %v143
    %v196 = vpack.c.b16 %v152, %v148
    %v197 = vpack.c.b16 %v153, %v149
    %v198 = vpack.c.b16 %v154, %v150
    %v199 = vpack.c.b16 %v155, %v151
    %v200 = vpack.c.b16 %v160, %v156
    %v201 = vpack.c.b16 %v161, %v157
    %v202 = vpack.c.b16 %v162, %v158
    %v203 = vpack.c.b16 %v163, %v159
    %v204 = vpack.c.b16 %v168, %v164
    %v205 = vpack.c.b16 %v169, %v165
    %v206 = vpack.c.b16 %v170, %v166
    %v207 = vpack.c.b16 %v171, %v167
    %v208 = vpack.c.b16 %v176, %v172
    %v209 = vpack.c.b16 %v177, %v173
    %v210 = vpack.c.b16 %v178, %v174
    %v211 = vpack.c.b16 %v179, %v175
    %244 = vmatpush.bf16.msra.mxu0 %v208
    %245 = vmatpush.bf16.msra.mxu0 %v204
    %246 = vmatpush.bf16.msra.mxu0 %v200
    %247 = vmatpush.bf16.msra.mxu0 %v196
    %248 = vmatpush.bf16.msra.mxu0 %v192
    %249 = vmatpush.bf16.msra.mxu0 %v188
    %250 = vmatpush.bf16.msra.mxu0 %v184
    %251 = vmatpush.bf16.msra.mxu0 %v180
    %252 = vmatmul.bf16.gmra.mxu0 %v38
    %v253 = vpop.f32.mrf.mxu0
    %v254 = vadd.f32 %v76, %v253
    %v255 = vpop.f32.mrf.mxu0
    %v256 = vadd.f32 %v76, %v255
    %257 = vmatmul.bf16.gmra.mxu0 %v39
    %v258 = vpop.f32.mrf.mxu0
    %v259 = vadd.f32 %v76, %v258
    %v260 = vpop.f32.mrf.mxu0
    %v261 = vadd.f32 %v76, %v260
    %262 = vmatmul.bf16.gmra.mxu0 %v40
    %v263 = vpop.f32.mrf.mxu0
    %v264 = vadd.f32 %v76, %v263
    %v265 = vpop.f32.mrf.mxu0
    %v266 = vadd.f32 %v76, %v265
    %267 = vmatmul.bf16.gmra.mxu0 %v41
    %v268 = vpop.f32.mrf.mxu0
    %v269 = vadd.f32 %v76, %v268
    %v270 = vpop.f32.mrf.mxu0
    %v271 = vadd.f32 %v76, %v270
    %272 = vdwg.mxu0
    %273 = vmatpush.bf16.msra.mxu0 %v209
    %274 = vmatpush.bf16.msra.mxu0 %v205
    %275 = vmatpush.bf16.msra.mxu0 %v201
    %276 = vmatpush.bf16.msra.mxu0 %v197
    %277 = vmatpush.bf16.msra.mxu0 %v193
    %278 = vmatpush.bf16.msra.mxu0 %v189
    %279 = vmatpush.bf16.msra.mxu0 %v185
    %280 = vmatpush.bf16.msra.mxu0 %v181
    %281 = vmatmul.bf16.gmra.mxu0 %v38
    %v282 = vpop.f32.mrf.mxu0
    %v283 = vadd.f32 %v77, %v282
    %v284 = vpop.f32.mrf.mxu0
    %v285 = vadd.f32 %v77, %v284
    %286 = vmatmul.bf16.gmra.mxu0 %v39
    %v287 = vpop.f32.mrf.mxu0
    %v288 = vadd.f32 %v77, %v287
    %v289 = vpop.f32.mrf.mxu0
    %v290 = vadd.f32 %v77, %v289
    %291 = vmatmul.bf16.gmra.mxu0 %v40
    %v292 = vpop.f32.mrf.mxu0
    %v293 = vadd.f32 %v77, %v292
    %v294 = vpop.f32.mrf.mxu0
    %v295 = vadd.f32 %v77, %v294
    %296 = vmatmul.bf16.gmra.mxu0 %v41
    %v297 = vpop.f32.mrf.mxu0
    %v298 = vadd.f32 %v77, %v297
    %v299 = vpop.f32.mrf.mxu0
    %v300 = vadd.f32 %v77, %v299
    %301 = vdwg.mxu0
    %302 = vmatpush.bf16.msra.mxu0 %v210
    %303 = vmatpush.bf16.msra.mxu0 %v206
    %304 = vmatpush.bf16.msra.mxu0 %v202
    %305 = vmatpush.bf16.msra.mxu0 %v198
    %306 = vmatpush.bf16.msra.mxu0 %v194
    %307 = vmatpush.bf16.msra.mxu0 %v190
    %308 = vmatpush.bf16.msra.mxu0 %v186
    %309 = vmatpush.bf16.msra.mxu0 %v182
    %310 = vmatmul.bf16.gmra.mxu0 %v38
    %v311 = vpop.f32.mrf.mxu0
    %v312 = vadd.f32 %v78, %v311
    %v313 = vpop.f32.mrf.mxu0
    %v314 = vadd.f32 %v78, %v313
    %315 = vmatmul.bf16.gmra.mxu0 %v39
    %v316 = vpop.f32.mrf.mxu0
    %v317 = vadd.f32 %v78, %v316
    %v318 = vpop.f32.mrf.mxu0
    %v319 = vadd.f32 %v78, %v318
    %320 = vmatmul.bf16.gmra.mxu0 %v40
    %v321 = vpop.f32.mrf.mxu0
    %v322 = vadd.f32 %v78, %v321
    %v323 = vpop.f32.mrf.mxu0
    %v324 = vadd.f32 %v78, %v323
    %325 = vmatmul.bf16.gmra.mxu0 %v41
    %v326 = vpop.f32.mrf.mxu0
    %v327 = vadd.f32 %v78, %v326
    %v328 = vpop.f32.mrf.mxu0
    %v329 = vadd.f32 %v78, %v328
    %330 = vdwg.mxu0
    %331 = vmatpush.bf16.msra.mxu0 %v211
    %332 = vmatpush.bf16.msra.mxu0 %v207
    %333 = vmatpush.bf16.msra.mxu0 %v203
    %334 = vmatpush.bf16.msra.mxu0 %v199
    %335 = vmatpush.bf16.msra.mxu0 %v195
    %336 = vmatpush.bf16.msra.mxu0 %v191
    %337 = vmatpush.bf16.msra.mxu0 %v187
    %338 = vmatpush.bf16.msra.mxu0 %v183
    %339 = vmatmul.bf16.gmra.mxu0 %v38
    %v340 = vpop.f32.mrf.mxu0
    %v341 = vadd.f32 %v79, %v340
    %v342 = vpop.f32.mrf.mxu0
    %v343 = vadd.f32 %v79, %v342
    %344 = vmatmul.bf16.gmra.mxu0 %v39
    %v345 = vpop.f32.mrf.mxu0
    %v346 = vadd.f32 %v79, %v345
    %v347 = vpop.f32.mrf.mxu0
    %v348 = vadd.f32 %v79, %v347
    %349 = vmatmul.bf16.gmra.mxu0 %v40
    %v350 = vpop.f32.mrf.mxu0
    %v351 = vadd.f32 %v79, %v350
    %v352 = vpop.f32.mrf.mxu0
    %v353 = vadd.f32 %v79, %v352
    %354 = vmatmul.bf16.gmra.mxu0 %v41
    %v355 = vpop.f32.mrf.mxu0
    %v356 = vadd.f32 %v79, %v355
    %v357 = vpop.f32.mrf.mxu0
    %v358 = vadd.f32 %v79, %v357
    %359 = vdwg.mxu0
    %v360 = vpack.c.bf16 %v283, %v254
    %v361 = vpack.c.bf16 %v341, %v312
    %v362 = vpack.c.bf16 %v285, %v256
    %v363 = vpack.c.bf16 %v343, %v314
    %v364 = vpack.c.bf16 %v288, %v259
    %v365 = vpack.c.bf16 %v346, %v317
    %v366 = vpack.c.bf16 %v290, %v261
    %v367 = vpack.c.bf16 %v348, %v319
    %v368 = vpack.c.bf16 %v293, %v264
    %v369 = vpack.c.bf16 %v351, %v322
    %v370 = vpack.c.bf16 %v295, %v266
    %v371 = vpack.c.bf16 %v353, %v324
    %v372 = vpack.c.bf16 %v298, %v269
    %v373 = vpack.c.bf16 %v356, %v327
    %v374 = vpack.c.bf16 %v300, %v271
    %v375 = vpack.c.bf16 %v358, %v329
    %376 = vst [vmem:[%s3] sm:$0xff] %v360
    %377 = vst [vmem:[%s3 + $0x8] sm:$0xff] %v361
    %378 = vst [vmem:[%s3 + $0x10] sm:$0xff] %v362
    %379 = vst [vmem:[%s3 + $0x18] sm:$0xff] %v363
    %380 = vst [vmem:[%s3 + $0x20] sm:$0xff] %v364
    %381 = vst [vmem:[%s3 + $0x28] sm:$0xff] %v365
    %382 = vst [vmem:[%s3 + $0x30] sm:$0xff] %v366
    %383 = vst [vmem:[%s3 + $0x38] sm:$0xff] %v367
    %384 = vst [vmem:[%s3 + $0x40] sm:$0xff] %v368
    %385 = vst [vmem:[%s3 + $0x48] sm:$0xff] %v369
    %386 = vst [vmem:[%s3 + $0x50] sm:$0xff] %v370
    %387 = vst [vmem:[%s3 + $0x58] sm:$0xff] %v371
    %388 = vst [vmem:[%s3 + $0x60] sm:$0xff] %v372
    %389 = vst [vmem:[%s3 + $0x68] sm:$0xff] %v373
    %390 = vst [vmem:[%s3 + $0x70] sm:$0xff] %v374
    %391 = vst [vmem:[%s3 + $0x78] sm:$0xff] %v375
    // Predicated region
    $region18: #{lstm_module_forward.7} parent=1 // pred_check
      _
    $region19: #{lstm_module_forward.7} parent=1 // pred_check_branch
      %393 = sbr.rel (0) target = $region21
    $region20: #{lstm_module_forward.7} parent=1 // pred_region
      _
    $region21: #{lstm_module_forward.7} parent=1 // pred_fallthru
      _
    // Predicated region
    $region22: #{lstm_module_forward.7} parent=1 // pred_check
      _
    $region23: #{lstm_module_forward.7} parent=1 // pred_check_branch
      %395 = sbr.rel (0) target = $region25
    $region24: #{lstm_module_forward.7} parent=1 // pred_region
      _
    $region25: #{lstm_module_forward.7} parent=1 // pred_fallthru
      _
    %396 = vsyncpa [#allocation3], 1

// kernel: lstm_module_forward.6
$region0: #{lstm_module_forward.6}
  #allocation0 [shape = 'u32[]', space=smem, size = 0x4, offset = 0x4, fixed_abs, tag = 'smem constant byte address 0x4 - core index']
  #allocation1 [shape = 'u32[72,128]{1,0:T(1,128)}', space=vmem, size = 0x9000, scoped, tag = 'internal scratch']
  #allocation2 [shape = 'f32[8,128]{1,0:T(8,128)}', space=vmem, size = 0x1000, scoped, tag = 'scratch operand']
  #allocation3 [shape = 'f32[8,128]{1,0:T(8,128)}', space=vmem, size = 0x1000, scoped, tag = 'scratch operand']
  %s0 = inlined_call_operand.vmem [shape: bf16[8,8,512], index: 0, kind: input, shape index: {}]
  %s1 = inlined_call_operand.vmem [shape: f32[8,128], index: 1, kind: input, shape index: {}]
  %s2 = inlined_call_operand.vmem [shape: f32[8,128], index: 2, kind: input, shape index: {}]
  %s3 = inlined_call_operand.hbm [shape: bf16[128,512], index: 3, kind: input, shape index: {}]
  %s4 = inlined_call_operand.vmem [shape: f32[8,8,128], index: 4, kind: output, shape index: {0}]
  %s5 = inlined_call_operand.vmem [shape: f32[8,128], index: 5, kind: output, shape index: {1}]
  %s6 = inlined_call_operand.vmem [shape: f32[8,128], index: 6, kind: output, shape index: {2}]
  %7 = xla_tuple %s4, %s5, %s6
  %s8 = sld [smem:[#allocation0]]
  $region54: #{lstm_module_forward.6} parent=0
    _
  %s10 = ssub.s32 1, %s8
  %s11 = scalar_select 0, %s10, %s8
  $region1: #{lstm_module_forward.6} parent=0
    #allocation4 [shape = 'u8[131072]{0}', space=vmem, size = 0x20000, scoped, tag = 'input window, operand 3, single buffered']
    #allocation5 [shape = 's32[1]{0}', space=sflag, size = 0x4, scoped, tag = 'scoped memory for lstm_module_forward.6']
    %12 = vsyncpa [#allocation5], 0
    // Predicated region
    $region2: #{lstm_module_forward.6} parent=1 // pred_check
      _
    $region3: #{lstm_module_forward.6} parent=1 // pred_check_branch
      %14 = sbr.rel (0) target = $region5
    $region4: #{lstm_module_forward.6} parent=1 // pred_region
      _
    $region5: #{lstm_module_forward.6} parent=1 // pred_fallthru
      _
    // Predicated region
    $region6: #{lstm_module_forward.6} parent=1 // pred_check
      _
    $region7: #{lstm_module_forward.6} parent=1 // pred_check_branch
      %16 = sbr.rel (0) target = $region9
    $region8: #{lstm_module_forward.6} parent=1 // pred_region
      _
    $region9: #{lstm_module_forward.6} parent=1 // pred_fallthru
      _
    // Predicated region
    $region10: #{lstm_module_forward.6} parent=1 // pred_check
      _
    $region11: #{lstm_module_forward.6} parent=1 // pred_check_branch
      %18 = sbr.rel (0) target = $region13
    $region12: #{lstm_module_forward.6} parent=1 // pred_region
      _
    $region13: #{lstm_module_forward.6} parent=1 // pred_fallthru
      _
    // Predicated region
    $region14: #{lstm_module_forward.6} parent=1 // pred_check
      _
    $region15: #{lstm_module_forward.6} parent=1 // pred_check_branch
      %20 = sbr.rel (0) target = $region17
    $region16: #{lstm_module_forward.6} parent=1 // pred_region
      %22 = vsyncadd [#allocation5], 0
      %s23 = sshll.u32 %s3, 4
      %s24 = int_to_ptr.hbm [resolvable:$true] %s23
      %s25 = sshll.u32 [#allocation4], 4
      %s26 = int_to_ptr.vmem [resolvable:$true] %s25
      %31 = dma.hbm_to_vmem [thread:$0]  %s24, 4096, %s26, [#allocation5], 256, 256, 16
    $region17: #{lstm_module_forward.6} parent=1 // pred_fallthru
      _
    // Predicated region
    $region18: #{lstm_module_forward.6} parent=1 // pred_check
      _
    $region19: #{lstm_module_forward.6} parent=1 // pred_check_branch
      %33 = sbr.rel (0) target = $region21
    $region20: #{lstm_module_forward.6} parent=1 // pred_region
      %35 = dma.done [#allocation5], 4096
    $region21: #{lstm_module_forward.6} parent=1 // pred_fallthru
      _
    %p36 = scmp.eq.s32.totalorder 0, 0
    // Predicated region
    $region22: #{lstm_module_forward.6} parent=1 // pred_check
      %p37 = pneg %p36
    $region23: #{lstm_module_forward.6} parent=1 // pred_check_branch
      %39 = sbr.rel (%p37) target = $region25
    $region24: #{lstm_module_forward.6} parent=1 // pred_region
      %v40 = vld [vmem:[%s1] sm:$0xff]
      %41 = vst [vmem:[#allocation2] sm:$0xff] %v40
      %v42 = vld [vmem:[%s2] sm:$0xff]
      %43 = vst [vmem:[#allocation3] sm:$0xff] %v42
    $region25: #{lstm_module_forward.6} parent=1 // pred_fallthru
      _
    %v44 = vld [vmem:[%s0] sm:$0xff]
    %v45 = vld [vmem:[%s0 + $0x8] sm:$0xff]
    %v46 = vunpack.c.l.bf16 %v44
    %v47 = vunpack.c.h.bf16 %v44
    %v48 = vunpack.c.l.bf16 %v45
    %v49 = vunpack.c.h.bf16 %v45
    %v50 = vld [vmem:[#allocation2] sm:$0xff]
    %v51 = vpack.c.bf16 %v50, %v50
    %v52 = vld [vmem:[#allocation4] sm:$0xff]
    %v53 = vld [vmem:[#allocation4 + $0x8] sm:$0xff]
    %v54 = vld [vmem:[#allocation4 + $0x10] sm:$0xff]
    %v55 = vld [vmem:[#allocation4 + $0x18] sm:$0xff]
    %v56 = vld [vmem:[#allocation4 + $0x20] sm:$0xff]
    %v57 = vld [vmem:[#allocation4 + $0x28] sm:$0xff]
    %v58 = vld [vmem:[#allocation4 + $0x30] sm:$0xff]
    %v59 = vld [vmem:[#allocation4 + $0x38] sm:$0xff]
    %v60 = vld [vmem:[#allocation4 + $0x40] sm:$0xff]
    %v61 = vld [vmem:[#allocation4 + $0x48] sm:$0xff]
    %v62 = vld [vmem:[#allocation4 + $0x50] sm:$0xff]
    %v63 = vld [vmem:[#allocation4 + $0x58] sm:$0xff]
    %v64 = vld [vmem:[#allocation4 + $0x60] sm:$0xff]
    %v65 = vld [vmem:[#allocation4 + $0x68] sm:$0xff]
    %v66 = vld [vmem:[#allocation4 + $0x70] sm:$0xff]
    %v67 = vld [vmem:[#allocation4 + $0x78] sm:$0xff]
    %v68 = vld [vmem:[#allocation4 + $0x80] sm:$0xff]
    %v69 = vld [vmem:[#allocation4 + $0x88] sm:$0xff]
    %v70 = vld [vmem:[#allocation4 + $0x90] sm:$0xff]
    %v71 = vld [vmem:[#allocation4 + $0x98] sm:$0xff]
    %v72 = vld [vmem:[#allocation4 + $0xa0] sm:$0xff]
    %v73 = vld [vmem:[#allocation4 + $0xa8] sm:$0xff]
    %v74 = vld [vmem:[#allocation4 + $0xb0] sm:$0xff]
    %v75 = vld [vmem:[#allocation4 + $0xb8] sm:$0xff]
    %v76 = vld [vmem:[#allocation4 + $0xc0] sm:$0xff]
    %v77 = vld [vmem:[#allocation4 + $0xc8] sm:$0xff]
    %v78 = vld [vmem:[#allocation4 + $0xd0] sm:$0xff]
    %v79 = vld [vmem:[#allocation4 + $0xd8] sm:$0xff]
    %v80 = vld [vmem:[#allocation4 + $0xe0] sm:$0xff]
    %v81 = vld [vmem:[#allocation4 + $0xe8] sm:$0xff]
    %v82 = vld [vmem:[#allocation4 + $0xf0] sm:$0xff]
    %v83 = vld [vmem:[#allocation4 + $0xf8] sm:$0xff]
    %v116 = vunpack.c.l.b16 %v52
    %v117 = vunpack.c.h.b16 %v52
    %v118 = vunpack.c.l.b16 %v53
    %v119 = vunpack.c.h.b16 %v53
    %v120 = vunpack.c.l.b16 %v54
    %v121 = vunpack.c.h.b16 %v54
    %v122 = vunpack.c.l.b16 %v55
    %v123 = vunpack.c.h.b16 %v55
    %v124 = vunpack.c.l.b16 %v56
    %v125 = vunpack.c.h.b16 %v56
    %v126 = vunpack.c.l.b16 %v57
    %v127 = vunpack.c.h.b16 %v57
    %v128 = vunpack.c.l.b16 %v58
    %v129 = vunpack.c.h.b16 %v58
    %v130 = vunpack.c.l.b16 %v59
    %v131 = vunpack.c.h.b16 %v59
    %v132 = vunpack.c.l.b16 %v60
    %v133 = vunpack.c.h.b16 %v60
    %v134 = vunpack.c.l.b16 %v61
    %v135 = vunpack.c.h.b16 %v61
    %v136 = vunpack.c.l.b16 %v62
    %v137 = vunpack.c.h.b16 %v62
    %v138 = vunpack.c.l.b16 %v63
    %v139 = vunpack.c.h.b16 %v63
    %v140 = vunpack.c.l.b16 %v64
    %v141 = vunpack.c.h.b16 %v64
    %v142 = vunpack.c.l.b16 %v65
    %v143 = vunpack.c.h.b16 %v65
    %v144 = vunpack.c.l.b16 %v66
    %v145 = vunpack.c.h.b16 %v66
    %v146 = vunpack.c.l.b16 %v67
    %v147 = vunpack.c.h.b16 %v67
    %v148 = vunpack.c.l.b16 %v68
    %v149 = vunpack.c.h.b16 %v68
    %v150 = vunpack.c.l.b16 %v69
    %v151 = vunpack.c.h.b16 %v69
    %v152 = vunpack.c.l.b16 %v70
    %v153 = vunpack.c.h.b16 %v70
    %v154 = vunpack.c.l.b16 %v71
    %v155 = vunpack.c.h.b16 %v71
    %v156 = vunpack.c.l.b16 %v72
    %v157 = vunpack.c.h.b16 %v72
    %v158 = vunpack.c.l.b16 %v73
    %v159 = vunpack.c.h.b16 %v73
    %v160 = vunpack.c.l.b16 %v74
    %v161 = vunpack.c.h.b16 %v74
    %v162 = vunpack.c.l.b16 %v75
    %v163 = vunpack.c.h.b16 %v75
    %v164 = vunpack.c.l.b16 %v76
    %v165 = vunpack.c.h.b16 %v76
    %v166 = vunpack.c.l.b16 %v77
    %v167 = vunpack.c.h.b16 %v77
    %v168 = vunpack.c.l.b16 %v78
    %v169 = vunpack.c.h.b16 %v78
    %v170 = vunpack.c.l.b16 %v79
    %v171 = vunpack.c.h.b16 %v79
    %v172 = vunpack.c.l.b16 %v80
    %v173 = vunpack.c.h.b16 %v80
    %v174 = vunpack.c.l.b16 %v81
    %v175 = vunpack.c.h.b16 %v81
    %v176 = vunpack.c.l.b16 %v82
    %v177 = vunpack.c.h.b16 %v82
    %v178 = vunpack.c.l.b16 %v83
    %v179 = vunpack.c.h.b16 %v83
    %v180 = vpack.c.b16 %v120, %v116
    %v181 = vpack.c.b16 %v121, %v117
    %v182 = vpack.c.b16 %v122, %v118
    %v183 = vpack.c.b16 %v123, %v119
    %v184 = vpack.c.b16 %v128, %v124
    %v185 = vpack.c.b16 %v129, %v125
    %v186 = vpack.c.b16 %v130, %v126
    %v187 = vpack.c.b16 %v131, %v127
    %v188 = vpack.c.b16 %v136, %v132
    %v189 = vpack.c.b16 %v137, %v133
    %v190 = vpack.c.b16 %v138, %v134
    %v191 = vpack.c.b16 %v139, %v135
    %v192 = vpack.c.b16 %v144, %v140
    %v193 = vpack.c.b16 %v145, %v141
    %v194 = vpack.c.b16 %v146, %v142
    %v195 = vpack.c.b16 %v147, %v143
    %v196 = vpack.c.b16 %v152, %v148
    %v197 = vpack.c.b16 %v153, %v149
    %v198 = vpack.c.b16 %v154, %v150
    %v199 = vpack.c.b16 %v155, %v151
    %v200 = vpack.c.b16 %v160, %v156
    %v201 = vpack.c.b16 %v161, %v157
    %v202 = vpack.c.b16 %v162, %v158
    %v203 = vpack.c.b16 %v163, %v159
    %v204 = vpack.c.b16 %v168, %v164
    %v205 = vpack.c.b16 %v169, %v165
    %v206 = vpack.c.b16 %v170, %v166
    %v207 = vpack.c.b16 %v171, %v167
    %v208 = vpack.c.b16 %v176, %v172
    %v209 = vpack.c.b16 %v177, %v173
    %v210 = vpack.c.b16 %v178, %v174
    %v211 = vpack.c.b16 %v179, %v175
    %244 = vmatpush.bf16.msra.mxu0 %v208
    %245 = vmatpush.bf16.msra.mxu0 %v204
    %246 = vmatpush.bf16.msra.mxu0 %v200
    %247 = vmatpush.bf16.msra.mxu0 %v196
    %248 = vmatpush.bf16.msra.mxu0 %v192
    %249 = vmatpush.bf16.msra.mxu0 %v188
    %250 = vmatpush.bf16.msra.mxu0 %v184
    %251 = vmatpush.bf16.msra.mxu0 %v180
    %252 = vmatmul.bf16.gmra.mxu0 %v51
    %v253 = vpop.f32.mrf.mxu0
    %v254 = vadd.f32 0.0, %v253
    %v255 = vpop.f32.mrf.mxu0
    %256 = vdwg.mxu0
    %257 = vmatpush.bf16.msra.mxu0 %v209
    %258 = vmatpush.bf16.msra.mxu0 %v205
    %259 = vmatpush.bf16.msra.mxu0 %v201
    %260 = vmatpush.bf16.msra.mxu0 %v197
    %261 = vmatpush.bf16.msra.mxu0 %v193
    %262 = vmatpush.bf16.msra.mxu0 %v189
    %263 = vmatpush.bf16.msra.mxu0 %v185
    %264 = vmatpush.bf16.msra.mxu0 %v181
    %265 = vmatmul.bf16.gmra.mxu0 %v51
    %v266 = vpop.f32.mrf.mxu0
    %v267 = vadd.f32 0.0, %v266
    %v268 = vpop.f32.mrf.mxu0
    %269 = vdwg.mxu0
    %270 = vmatpush.bf16.msra.mxu0 %v210
    %271 = vmatpush.bf16.msra.mxu0 %v206
    %272 = vmatpush.bf16.msra.mxu0 %v202
    %273 = vmatpush.bf16.msra.mxu0 %v198
    %274 = vmatpush.bf16.msra.mxu0 %v194
    %275 = vmatpush.bf16.msra.mxu0 %v190
    %276 = vmatpush.bf16.msra.mxu0 %v186
    %277 = vmatpush.bf16.msra.mxu0 %v182
    %278 = vmatmul.bf16.gmra.mxu0 %v51
    %v279 = vpop.f32.mrf.mxu0
    %v280 = vadd.f32 0.0, %v279
    %v281 = vpop.f32.mrf.mxu0
    %282 = vdwg.mxu0
    %283 = vmatpush.bf16.msra.mxu0 %v211
    %284 = vmatpush.bf16.msra.mxu0 %v207
    %285 = vmatpush.bf16.msra.mxu0 %v203
    %286 = vmatpush.bf16.msra.mxu0 %v199
    %287 = vmatpush.bf16.msra.mxu0 %v195
    %288 = vmatpush.bf16.msra.mxu0 %v191
    %289 = vmatpush.bf16.msra.mxu0 %v187
    %290 = vmatpush.bf16.msra.mxu0 %v183
    %291 = vmatmul.bf16.gmra.mxu0 %v51
    %v292 = vpop.f32.mrf.mxu0
    %v293 = vadd.f32 0.0, %v292
    %v294 = vpop.f32.mrf.mxu0
    %295 = vdwg.mxu0
    %v296 = vadd.f32 %v46, %v254
    %v297 = vadd.f32 %v47, %v267
    %v298 = vadd.f32 %v48, %v280
    %v299 = vadd.f32 %v49, %v293
    %v300 = vxor.u32 %v296, 2147483648
    %v301 = vmul.f32 %v300, 1.442695
    %v302 = vpow.pop %v301
    %v303 = vadd.f32 %v302, 1.0
    %v304 = vrcp.pop %v303
    %v305 = vmul.f32 %v303, %v304
    %v306 = vsub.f32 1.0, %v305
    %v307 = vmul.f32 %v304, %v306
    %v308 = vadd.f32 %v304, %v307
    %vm309 = vweird.f32 %v303
    %vm310 = vweird.f32 %v304
    %vm311 = vmor %vm309, %vm310
    %v312 = vsel %vm311, %v304, %v308
    %v313 = vand.u32 2147483647, %v303
    %vm314 = vcmp.eq.f32.partialorder %v313, 8.507059e+37
    %v315 = vand.u32 %v303, 2147483648
    %v316 = vor.u32 1.1754944e-38, %v315
    %v317 = vsel %vm314, %v316, %v312
    %v318 = vmul.f32 1.0, %v317
    %v319 = vxor.u32 %v297, 2147483648
    %v320 = vmul.f32 %v319, 1.442695
    %v321 = vpow.pop %v320
    %v322 = vadd.f32 %v321, 1.0
    %v323 = vrcp.pop %v322
    %v324 = vmul.f32 %v322, %v323
    %v325 = vsub.f32 1.0, %v324
    %v326 = vmul.f32 %v323, %v325
    %v327 = vadd.f32 %v323, %v326
    %vm328 = vweird.f32 %v322
    %vm329 = vweird.f32 %v323
    %vm330 = vmor %vm328, %vm329
    %v331 = vsel %vm330, %v323, %v327
    %v332 = vand.u32 2147483647, %v322
    %vm333 = vcmp.eq.f32.partialorder %v332, 8.507059e+37
    %v334 = vand.u32 %v322, 2147483648
    %v335 = vor.u32 1.1754944e-38, %v334
    %v336 = vsel %vm333, %v335, %v331
    %v337 = vmul.f32 1.0, %v336
    %v338 = vtanh.pop %v298
    %v339 = vxor.u32 %v299, 2147483648
    %v340 = vmul.f32 %v339, 1.442695
    %v341 = vpow.pop %v340
    %v342 = vadd.f32 %v341, 1.0
    %v343 = vrcp.pop %v342
    %v344 = vmul.f32 %v342, %v343
    %v345 = vsub.f32 1.0, %v344
    %v346 = vmul.f32 %v343, %v345
    %v347 = vadd.f32 %v343, %v346
    %vm348 = vweird.f32 %v342
    %vm349 = vweird.f32 %v343
    %vm350 = vmor %vm348, %vm349
    %v351 = vsel %vm350, %v343, %v347
    %v352 = vand.u32 2147483647, %v342
    %vm353 = vcmp.eq.f32.partialorder %v352, 8.507059e+37
    %v354 = vand.u32 %v342, 2147483648
    %v355 = vor.u32 1.1754944e-38, %v354
    %v356 = vsel %vm353, %v355, %v351
    %v357 = vmul.f32 1.0, %v356
    %v358 = vld [vmem:[#allocation3] sm:$0xff]
    %v359 = vmul.f32 %v337, %v358
    %v360 = vmul.f32 %v318, %v338
    %v361 = vadd.f32 %v359, %v360
    %v362 = vtanh.pop %v361
    %v363 = vmul.f32 %v357, %v362
    %364 = vst [vmem:[#allocation3] sm:$0xff] %v361
    %365 = vst [vmem:[#allocation2] sm:$0xff] %v363
    %366 = vst [vmem:[%s4] sm:$0xff] %v363
    %s367 = scalar_lea.vmem %s0, 16
    %v368 = vld [vmem:[%s367] sm:$0xff]
    %v369 = vld [vmem:[%s367 + $0x8] sm:$0xff]
    %v370 = vunpack.c.l.bf16 %v368
    %v371 = vunpack.c.h.bf16 %v368
    %v372 = vunpack.c.l.bf16 %v369
    %v373 = vunpack.c.h.bf16 %v369
    %v374 = vld [vmem:[#allocation2] sm:$0xff]
    %v375 = vpack.c.bf16 %v374, %v374
    %v376 = vld [vmem:[#allocation4] sm:$0xff]
    %v377 = vld [vmem:[#allocation4 + $0x8] sm:$0xff]
    %v378 = vld [vmem:[#allocation4 + $0x10] sm:$0xff]
    %v379 = vld [vmem:[#allocation4 + $0x18] sm:$0xff]
    %v380 = vld [vmem:[#allocation4 + $0x20] sm:$0xff]
    %v381 = vld [vmem:[#allocation4 + $0x28] sm:$0xff]
    %v382 = vld [vmem:[#allocation4 + $0x30] sm:$0xff]
    %v383 = vld [vmem:[#allocation4 + $0x38] sm:$0xff]
    %v384 = vld [vmem:[#allocation4 + $0x40] sm:$0xff]
    %v385 = vld [vmem:[#allocation4 + $0x48] sm:$0xff]
    %v386 = vld [vmem:[#allocation4 + $0x50] sm:$0xff]
    %v387 = vld [vmem:[#allocation4 + $0x58] sm:$0xff]
    %v388 = vld [vmem:[#allocation4 + $0x60] sm:$0xff]
    %v389 = vld [vmem:[#allocation4 + $0x68] sm:$0xff]
    %v390 = vld [vmem:[#allocation4 + $0x70] sm:$0xff]
    %v391 = vld [vmem:[#allocation4 + $0x78] sm:$0xff]
    %v392 = vld [vmem:[#allocation4 + $0x80] sm:$0xff]
    %v393 = vld [vmem:[#allocation4 + $0x88] sm:$0xff]
    %v394 = vld [vmem:[#allocation4 + $0x90] sm:$0xff]
    %v395 = vld [vmem:[#allocation4 + $0x98] sm:$0xff]
    %v396 = vld [vmem:[#allocation4 + $0xa0] sm:$0xff]
    %v397 = vld [vmem:[#allocation4 + $0xa8] sm:$0xff]
    %v398 = vld [vmem:[#allocation4 + $0xb0] sm:$0xff]
    %v399 = vld [vmem:[#allocation4 + $0xb8] sm:$0xff]
    %v400 = vld [vmem:[#allocation4 + $0xc0] sm:$0xff]
    %v401 = vld [vmem:[#allocation4 + $0xc8] sm:$0xff]
    %v402 = vld [vmem:[#allocation4 + $0xd0] sm:$0xff]
    %v403 = vld [vmem:[#allocation4 + $0xd8] sm:$0xff]
    %v404 = vld [vmem:[#allocation4 + $0xe0] sm:$0xff]
    %v405 = vld [vmem:[#allocation4 + $0xe8] sm:$0xff]
    %v406 = vld [vmem:[#allocation4 + $0xf0] sm:$0xff]
    %v407 = vld [vmem:[#allocation4 + $0xf8] sm:$0xff]
    %v440 = vunpack.c.l.b16 %v376
    %v441 = vunpack.c.h.b16 %v376
    %v442 = vunpack.c.l.b16 %v377
    %v443 = vunpack.c.h.b16 %v377
    %v444 = vunpack.c.l.b16 %v378
    %v445 = vunpack.c.h.b16 %v378
    %v446 = vunpack.c.l.b16 %v379
    %v447 = vunpack.c.h.b16 %v379
    %v448 = vunpack.c.l.b16 %v380
    %v449 = vunpack.c.h.b16 %v380
    %v450 = vunpack.c.l.b16 %v381
    %v451 = vunpack.c.h.b16 %v381
    %v452 = vunpack.c.l.b16 %v382
    %v453 = vunpack.c.h.b16 %v382
    %v454 = vunpack.c.l.b16 %v383
    %v455 = vunpack.c.h.b16 %v383
    %v456 = vunpack.c.l.b16 %v384
    %v457 = vunpack.c.h.b16 %v384
    %v458 = vunpack.c.l.b16 %v385
    %v459 = vunpack.c.h.b16 %v385
    %v460 = vunpack.c.l.b16 %v386
    %v461 = vunpack.c.h.b16 %v386
    %v462 = vunpack.c.l.b16 %v387
    %v463 = vunpack.c.h.b16 %v387
    %v464 = vunpack.c.l.b16 %v388
    %v465 = vunpack.c.h.b16 %v388
    %v466 = vunpack.c.l.b16 %v389
    %v467 = vunpack.c.h.b16 %v389
    %v468 = vunpack.c.l.b16 %v390
    %v469 = vunpack.c.h.b16 %v390
    %v470 = vunpack.c.l.b16 %v391
    %v471 = vunpack.c.h.b16 %v391
    %v472 = vunpack.c.l.b16 %v392
    %v473 = vunpack.c.h.b16 %v392
    %v474 = vunpack.c.l.b16 %v393
    %v475 = vunpack.c.h.b16 %v393
    %v476 = vunpack.c.l.b16 %v394
    %v477 = vunpack.c.h.b16 %v394
    %v478 = vunpack.c.l.b16 %v395
    %v479 = vunpack.c.h.b16 %v395
    %v480 = vunpack.c.l.b16 %v396
    %v481 = vunpack.c.h.b16 %v396
    %v482 = vunpack.c.l.b16 %v397
    %v483 = vunpack.c.h.b16 %v397
    %v484 = vunpack.c.l.b16 %v398
    %v485 = vunpack.c.h.b16 %v398
    %v486 = vunpack.c.l.b16 %v399
    %v487 = vunpack.c.h.b16 %v399
    %v488 = vunpack.c.l.b16 %v400
    %v489 = vunpack.c.h.b16 %v400
    %v490 = vunpack.c.l.b16 %v401
    %v491 = vunpack.c.h.b16 %v401
    %v492 = vunpack.c.l.b16 %v402
    %v493 = vunpack.c.h.b16 %v402
    %v494 = vunpack.c.l.b16 %v403
    %v495 = vunpack.c.h.b16 %v403
    %v496 = vunpack.c.l.b16 %v404
    %v497 = vunpack.c.h.b16 %v404
    %v498 = vunpack.c.l.b16 %v405
    %v499 = vunpack.c.h.b16 %v405
    %v500 = vunpack.c.l.b16 %v406
    %v501 = vunpack.c.h.b16 %v406
    %v502 = vunpack.c.l.b16 %v407
    %v503 = vunpack.c.h.b16 %v407
    %v504 = vpack.c.b16 %v444, %v440
    %v505 = vpack.c.b16 %v445, %v441
    %v506 = vpack.c.b16 %v446, %v442
    %v507 = vpack.c.b16 %v447, %v443
    %v508 = vpack.c.b16 %v452, %v448
    %v509 = vpack.c.b16 %v453, %v449
    %v510 = vpack.c.b16 %v454, %v450
    %v511 = vpack.c.b16 %v455, %v451
    %v512 = vpack.c.b16 %v460, %v456
    %v513 = vpack.c.b16 %v461, %v457
    %v514 = vpack.c.b16 %v462, %v458
    %v515 = vpack.c.b16 %v463, %v459
    %v516 = vpack.c.b16 %v468, %v464
    %v517 = vpack.c.b16 %v469, %v465
    %v518 = vpack.c.b16 %v470, %v466
    %v519 = vpack.c.b16 %v471, %v467
    %v520 = vpack.c.b16 %v476, %v472
    %v521 = vpack.c.b16 %v477, %v473
    %v522 = vpack.c.b16 %v478, %v474
    %v523 = vpack.c.b16 %v479, %v475
    %v524 = vpack.c.b16 %v484, %v480
    %v525 = vpack.c.b16 %v485, %v481
    %v526 = vpack.c.b16 %v486, %v482
    %v527 = vpack.c.b16 %v487, %v483
    %v528 = vpack.c.b16 %v492, %v488
    %v529 = vpack.c.b16 %v493, %v489
    %v530 = vpack.c.b16 %v494, %v490
    %v531 = vpack.c.b16 %v495, %v491
    %v532 = vpack.c.b16 %v500, %v496
    %v533 = vpack.c.b16 %v501, %v497
    %v534 = vpack.c.b16 %v502, %v498
    %v535 = vpack.c.b16 %v503, %v499
    %568 = vmatpush.bf16.msra.mxu0 %v532
    %569 = vmatpush.bf16.msra.mxu0 %v528
    %570 = vmatpush.bf16.msra.mxu0 %v524
    %571 = vmatpush.bf16.msra.mxu0 %v520
    %572 = vmatpush.bf16.msra.mxu0 %v516
    %573 = vmatpush.bf16.msra.mxu0 %v512
    %574 = vmatpush.bf16.msra.mxu0 %v508
    %575 = vmatpush.bf16.msra.mxu0 %v504
    %576 = vmatmul.bf16.gmra.mxu0 %v375
    %v577 = vpop.f32.mrf.mxu0
    %v578 = vadd.f32 0.0, %v577
    %v579 = vpop.f32.mrf.mxu0
    %580 = vdwg.mxu0
    %581 = vmatpush.bf16.msra.mxu0 %v533
    %582 = vmatpush.bf16.msra.mxu0 %v529
    %583 = vmatpush.bf16.msra.mxu0 %v525
    %584 = vmatpush.bf16.msra.mxu0 %v521
    %585 = vmatpush.bf16.msra.mxu0 %v517
    %586 = vmatpush.bf16.msra.mxu0 %v513
    %587 = vmatpush.bf16.msra.mxu0 %v509
    %588 = vmatpush.bf16.msra.mxu0 %v505
    %589 = vmatmul.bf16.gmra.mxu0 %v375
    %v590 = vpop.f32.mrf.mxu0
    %v591 = vadd.f32 0.0, %v590
    %v592 = vpop.f32.mrf.mxu0
    %593 = vdwg.mxu0
    %594 = vmatpush.bf16.msra.mxu0 %v534
    %595 = vmatpush.bf16.msra.mxu0 %v530
    %596 = vmatpush.bf16.msra.mxu0 %v526
    %597 = vmatpush.bf16.msra.mxu0 %v522
    %598 = vmatpush.bf16.msra.mxu0 %v518
    %599 = vmatpush.bf16.msra.mxu0 %v514
    %600 = vmatpush.bf16.msra.mxu0 %v510
    %601 = vmatpush.bf16.msra.mxu0 %v506
    %602 = vmatmul.bf16.gmra.mxu0 %v375
    %v603 = vpop.f32.mrf.mxu0
    %v604 = vadd.f32 0.0, %v603
    %v605 = vpop.f32.mrf.mxu0
    %606 = vdwg.mxu0
    %607 = vmatpush.bf16.msra.mxu0 %v535
    %608 = vmatpush.bf16.msra.mxu0 %v531
    %609 = vmatpush.bf16.msra.mxu0 %v527
    %610 = vmatpush.bf16.msra.mxu0 %v523
    %611 = vmatpush.bf16.msra.mxu0 %v519
    %612 = vmatpush.bf16.msra.mxu0 %v515
    %613 = vmatpush.bf16.msra.mxu0 %v511
    %614 = vmatpush.bf16.msra.mxu0 %v507
    %615 = vmatmul.bf16.gmra.mxu0 %v375
    %v616 = vpop.f32.mrf.mxu0
    %v617 = vadd.f32 0.0, %v616
    %v618 = vpop.f32.mrf.mxu0
    %619 = vdwg.mxu0
    %v620 = vadd.f32 %v370, %v578
    %v621 = vadd.f32 %v371, %v591
    %v622 = vadd.f32 %v372, %v604
    %v623 = vadd.f32 %v373, %v617
    %v624 = vxor.u32 %v620, 2147483648
    %v625 = vmul.f32 %v624, 1.442695
    %v626 = vpow.pop %v625
    %v627 = vadd.f32 %v626, 1.0
    %v628 = vrcp.pop %v627
    %v629 = vmul.f32 %v627, %v628
    %v630 = vsub.f32 1.0, %v629
    %v631 = vmul.f32 %v628, %v630
    %v632 = vadd.f32 %v628, %v631
    %vm633 = vweird.f32 %v627
    %vm634 = vweird.f32 %v628
    %vm635 = vmor %vm633, %vm634
    %v636 = vsel %vm635, %v628, %v632
    %v637 = vand.u32 2147483647, %v627
    %vm638 = vcmp.eq.f32.partialorder %v637, 8.507059e+37
    %v639 = vand.u32 %v627, 2147483648
    %v640 = vor.u32 1.1754944e-38, %v639
    %v641 = vsel %vm638, %v640, %v636
    %v642 = vmul.f32 1.0, %v641
    %v643 = vxor.u32 %v621, 2147483648
    %v644 = vmul.f32 %v643, 1.442695
    %v645 = vpow.pop %v644
    %v646 = vadd.f32 %v645, 1.0
    %v647 = vrcp.pop %v646
    %v648 = vmul.f32 %v646, %v647
    %v649 = vsub.f32 1.0, %v648
    %v650 = vmul.f32 %v647, %v649
    %v651 = vadd.f32 %v647, %v650
    %vm652 = vweird.f32 %v646
    %vm653 = vweird.f32 %v647
    %vm654 = vmor %vm652, %vm653
    %v655 = vsel %vm654, %v647, %v651
    %v656 = vand.u32 2147483647, %v646
    %vm657 = vcmp.eq.f32.partialorder %v656, 8.507059e+37
    %v658 = vand.u32 %v646, 2147483648
    %v659 = vor.u32 1.1754944e-38, %v658
    %v660 = vsel %vm657, %v659, %v655
    %v661 = vmul.f32 1.0, %v660
    %v662 = vtanh.pop %v622
    %v663 = vxor.u32 %v623, 2147483648
    %v664 = vmul.f32 %v663, 1.442695
    %v665 = vpow.pop %v664
    %v666 = vadd.f32 %v665, 1.0
    %v667 = vrcp.pop %v666
    %v668 = vmul.f32 %v666, %v667
    %v669 = vsub.f32 1.0, %v668
    %v670 = vmul.f32 %v667, %v669
    %v671 = vadd.f32 %v667, %v670
    %vm672 = vweird.f32 %v666
    %vm673 = vweird.f32 %v667
    %vm674 = vmor %vm672, %vm673
    %v675 = vsel %vm674, %v667, %v671
    %v676 = vand.u32 2147483647, %v666
    %vm677 = vcmp.eq.f32.partialorder %v676, 8.507059e+37
    %v678 = vand.u32 %v666, 2147483648
    %v679 = vor.u32 1.1754944e-38, %v678
    %v680 = vsel %vm677, %v679, %v675
    %v681 = vmul.f32 1.0, %v680
    %v682 = vld [vmem:[#allocation3] sm:$0xff]
    %v683 = vmul.f32 %v661, %v682
    %v684 = vmul.f32 %v642, %v662
    %v685 = vadd.f32 %v683, %v684
    %v686 = vtanh.pop %v685
    %v687 = vmul.f32 %v681, %v686
    %688 = vst [vmem:[#allocation3] sm:$0xff] %v685
    %689 = vst [vmem:[#allocation2] sm:$0xff] %v687
    %s690 = scalar_lea.vmem %s4, 8
    %691 = vst [vmem:[%s690] sm:$0xff] %v687
    %s692 = scalar_lea.vmem %s0, 32
    %v693 = vld [vmem:[%s692] sm:$0xff]
    %v694 = vld [vmem:[%s692 + $0x8] sm:$0xff]
    %v695 = vunpack.c.l.bf16 %v693
    %v696 = vunpack.c.h.bf16 %v693
    %v697 = vunpack.c.l.bf16 %v694
    %v698 = vunpack.c.h.bf16 %v694
    %v699 = vld [vmem:[#allocation2] sm:$0xff]
    %v700 = vpack.c.bf16 %v699, %v699
    %v701 = vld [vmem:[#allocation4] sm:$0xff]
    %v702 = vld [vmem:[#allocation4 + $0x8] sm:$0xff]
    %v703 = vld [vmem:[#allocation4 + $0x10] sm:$0xff]
    %v704 = vld [vmem:[#allocation4 + $0x18] sm:$0xff]
    %v705 = vld [vmem:[#allocation4 + $0x20] sm:$0xff]
    %v706 = vld [vmem:[#allocation4 + $0x28] sm:$0xff]
    %v707 = vld [vmem:[#allocation4 + $0x30] sm:$0xff]
    %v708 = vld [vmem:[#allocation4 + $0x38] sm:$0xff]
    %v709 = vld [vmem:[#allocation4 + $0x40] sm:$0xff]
    %v710 = vld [vmem:[#allocation4 + $0x48] sm:$0xff]
    %v711 = vld [vmem:[#allocation4 + $0x50] sm:$0xff]
    %v712 = vld [vmem:[#allocation4 + $0x58] sm:$0xff]
    %v713 = vld [vmem:[#allocation4 + $0x60] sm:$0xff]
    %v714 = vld [vmem:[#allocation4 + $0x68] sm:$0xff]
    %v715 = vld [vmem:[#allocation4 + $0x70] sm:$0xff]
    %v716 = vld [vmem:[#allocation4 + $0x78] sm:$0xff]
    %v717 = vld [vmem:[#allocation4 + $0x80] sm:$0xff]
    %v718 = vld [vmem:[#allocation4 + $0x88] sm:$0xff]
    %v719 = vld [vmem:[#allocation4 + $0x90] sm:$0xff]
    %v720 = vld [vmem:[#allocation4 + $0x98] sm:$0xff]
    %v721 = vld [vmem:[#allocation4 + $0xa0] sm:$0xff]
    %v722 = vld [vmem:[#allocation4 + $0xa8] sm:$0xff]
    %v723 = vld [vmem:[#allocation4 + $0xb0] sm:$0xff]
    %v724 = vld [vmem:[#allocation4 + $0xb8] sm:$0xff]
    %v725 = vld [vmem:[#allocation4 + $0xc0] sm:$0xff]
    %v726 = vld [vmem:[#allocation4 + $0xc8] sm:$0xff]
    %v727 = vld [vmem:[#allocation4 + $0xd0] sm:$0xff]
    %v728 = vld [vmem:[#allocation4 + $0xd8] sm:$0xff]
    %v729 = vld [vmem:[#allocation4 + $0xe0] sm:$0xff]
    %v730 = vld [vmem:[#allocation4 + $0xe8] sm:$0xff]
    %v731 = vld [vmem:[#allocation4 + $0xf0] sm:$0xff]
    %v732 = vld [vmem:[#allocation4 + $0xf8] sm:$0xff]
    %v765 = vunpack.c.l.b16 %v701
    %v766 = vunpack.c.h.b16 %v701
    %v767 = vunpack.c.l.b16 %v702
    %v768 = vunpack.c.h.b16 %v702
    %v769 = vunpack.c.l.b16 %v703
    %v770 = vunpack.c.h.b16 %v703
    %v771 = vunpack.c.l.b16 %v704
    %v772 = vunpack.c.h.b16 %v704
    %v773 = vunpack.c.l.b16 %v705
    %v774 = vunpack.c.h.b16 %v705
    %v775 = vunpack.c.l.b16 %v706
    %v776 = vunpack.c.h.b16 %v706
    %v777 = vunpack.c.l.b16 %v707
    %v778 = vunpack.c.h.b16 %v707
    %v779 = vunpack.c.l.b16 %v708
    %v780 = vunpack.c.h.b16 %v708
    %v781 = vunpack.c.l.b16 %v709
    %v782 = vunpack.c.h.b16 %v709
    %v783 = vunpack.c.l.b16 %v710
    %v784 = vunpack.c.h.b16 %v710
    %v785 = vunpack.c.l.b16 %v711
    %v786 = vunpack.c.h.b16 %v711
    %v787 = vunpack.c.l.b16 %v712
    %v788 = vunpack.c.h.b16 %v712
    %v789 = vunpack.c.l.b16 %v713
    %v790 = vunpack.c.h.b16 %v713
    %v791 = vunpack.c.l.b16 %v714
    %v792 = vunpack.c.h.b16 %v714
    %v793 = vunpack.c.l.b16 %v715
    %v794 = vunpack.c.h.b16 %v715
    %v795 = vunpack.c.l.b16 %v716
    %v796 = vunpack.c.h.b16 %v716
    %v797 = vunpack.c.l.b16 %v717
    %v798 = vunpack.c.h.b16 %v717
    %v799 = vunpack.c.l.b16 %v718
    %v800 = vunpack.c.h.b16 %v718
    %v801 = vunpack.c.l.b16 %v719
    %v802 = vunpack.c.h.b16 %v719
    %v803 = vunpack.c.l.b16 %v720
    %v804 = vunpack.c.h.b16 %v720
    %v805 = vunpack.c.l.b16 %v721
    %v806 = vunpack.c.h.b16 %v721
    %v807 = vunpack.c.l.b16 %v722
    %v808 = vunpack.c.h.b16 %v722
    %v809 = vunpack.c.l.b16 %v723
    %v810 = vunpack.c.h.b16 %v723
    %v811 = vunpack.c.l.b16 %v724
    %v812 = vunpack.c.h.b16 %v724
    %v813 = vunpack.c.l.b16 %v725
    %v814 = vunpack.c.h.b16 %v725
    %v815 = vunpack.c.l.b16 %v726
    %v816 = vunpack.c.h.b16 %v726
    %v817 = vunpack.c.l.b16 %v727
    %v818 = vunpack.c.h.b16 %v727
    %v819 = vunpack.c.l.b16 %v728
    %v820 = vunpack.c.h.b16 %v728
    %v821 = vunpack.c.l.b16 %v729
    %v822 = vunpack.c.h.b16 %v729
    %v823 = vunpack.c.l.b16 %v730
    %v824 = vunpack.c.h.b16 %v730
    %v825 = vunpack.c.l.b16 %v731
    %v826 = vunpack.c.h.b16 %v731
    %v827 = vunpack.c.l.b16 %v732
    %v828 = vunpack.c.h.b16 %v732
    %v829 = vpack.c.b16 %v769, %v765
    %v830 = vpack.c.b16 %v770, %v766
    %v831 = vpack.c.b16 %v771, %v767
    %v832 = vpack.c.b16 %v772, %v768
    %v833 = vpack.c.b16 %v777, %v773
    %v834 = vpack.c.b16 %v778, %v774
    %v835 = vpack.c.b16 %v779, %v775
    %v836 = vpack.c.b16 %v780, %v776
    %v837 = vpack.c.b16 %v785, %v781
    %v838 = vpack.c.b16 %v786, %v782
    %v839 = vpack.c.b16 %v787, %v783
    %v840 = vpack.c.b16 %v788, %v784
    %v841 = vpack.c.b16 %v793, %v789
    %v842 = vpack.c.b16 %v794, %v790
    %v843 = vpack.c.b16 %v795, %v791
    %v844 = vpack.c.b16 %v796, %v792
    %v845 = vpack.c.b16 %v801, %v797
    %v846 = vpack.c.b16 %v802, %v798
    %v847 = vpack.c.b16 %v803, %v799
    %v848 = vpack.c.b16 %v804, %v800
    %v849 = vpack.c.b16 %v809, %v805
    %v850 = vpack.c.b16 %v810, %v806
    %v851 = vpack.c.b16 %v811, %v807
    %v852 = vpack.c.b16 %v812, %v808
    %v853 = vpack.c.b16 %v817, %v813
    %v854 = vpack.c.b16 %v818, %v814
    %v855 = vpack.c.b16 %v819, %v815
    %v856 = vpack.c.b16 %v820, %v816
    %v857 = vpack.c.b16 %v825, %v821
    %v858 = vpack.c.b16 %v826, %v822
    %v859 = vpack.c.b16 %v827, %v823
    %v860 = vpack.c.b16 %v828, %v824
    %893 = vmatpush.bf16.msra.mxu0 %v857
    %894 = vmatpush.bf16.msra.mxu0 %v853
    %895 = vmatpush.bf16.msra.mxu0 %v849
    %896 = vmatpush.bf16.msra.mxu0 %v845
    %897 = vmatpush.bf16.msra.mxu0 %v841
    %898 = vmatpush.bf16.msra.mxu0 %v837
    %899 = vmatpush.bf16.msra.mxu0 %v833
    %900 = vmatpush.bf16.msra.mxu0 %v829
    %901 = vmatmul.bf16.gmra.mxu0 %v700
    %v902 = vpop.f32.mrf.mxu0
    %v903 = vadd.f32 0.0, %v902
    %v904 = vpop.f32.mrf.mxu0
    %905 = vdwg.mxu0
    %906 = vmatpush.bf16.msra.mxu0 %v858
    %907 = vmatpush.bf16.msra.mxu0 %v854
    %908 = vmatpush.bf16.msra.mxu0 %v850
    %909 = vmatpush.bf16.msra.mxu0 %v846
    %910 = vmatpush.bf16.msra.mxu0 %v842
    %911 = vmatpush.bf16.msra.mxu0 %v838
    %912 = vmatpush.bf16.msra.mxu0 %v834
    %913 = vmatpush.bf16.msra.mxu0 %v830
    %914 = vmatmul.bf16.gmra.mxu0 %v700
    %v915 = vpop.f32.mrf.mxu0
    %v916 = vadd.f32 0.0, %v915
    %v917 = vpop.f32.mrf.mxu0
    %918 = vdwg.mxu0
    %919 = vmatpush.bf16.msra.mxu0 %v859
    %920 = vmatpush.bf16.msra.mxu0 %v855
    %921 = vmatpush.bf16.msra.mxu0 %v851
    %922 = vmatpush.bf16.msra.mxu0 %v847
    %923 = vmatpush.bf16.msra.mxu0 %v843
    %924 = vmatpush.bf16.msra.mxu0 %v839
    %925 = vmatpush.bf16.msra.mxu0 %v835
    %926 = vmatpush.bf16.msra.mxu0 %v831
    %927 = vmatmul.bf16.gmra.mxu0 %v700
    %v928 = vpop.f32.mrf.mxu0
    %v929 = vadd.f32 0.0, %v928
    %v930 = vpop.f32.mrf.mxu0
    %931 = vdwg.mxu0
    %932 = vmatpush.bf16.msra.mxu0 %v860
    %933 = vmatpush.bf16.msra.mxu0 %v856
    %934 = vmatpush.bf16.msra.mxu0 %v852
    %935 = vmatpush.bf16.msra.mxu0 %v848
    %936 = vmatpush.bf16.msra.mxu0 %v844
    %937 = vmatpush.bf16.msra.mxu0 %v840
    %938 = vmatpush.bf16.msra.mxu0 %v836
    %939 = vmatpush.bf16.msra.mxu0 %v832
    %940 = vmatmul.bf16.gmra.mxu0 %v700
    %v941 = vpop.f32.mrf.mxu0
    %v942 = vadd.f32 0.0, %v941
    %v943 = vpop.f32.mrf.mxu0
    %944 = vdwg.mxu0
    %v945 = vadd.f32 %v695, %v903
    %v946 = vadd.f32 %v696, %v916
    %v947 = vadd.f32 %v697, %v929
    %v948 = vadd.f32 %v698, %v942
    %v949 = vxor.u32 %v945, 2147483648
    %v950 = vmul.f32 %v949, 1.442695
    %v951 = vpow.pop %v950
    %v952 = vadd.f32 %v951, 1.0
    %v953 = vrcp.pop %v952
    %v954 = vmul.f32 %v952, %v953
    %v955 = vsub.f32 1.0, %v954
    %v956 = vmul.f32 %v953, %v955
    %v957 = vadd.f32 %v953, %v956
    %vm958 = vweird.f32 %v952
    %vm959 = vweird.f32 %v953
    %vm960 = vmor %vm958, %vm959
    %v961 = vsel %vm960, %v953, %v957
    %v962 = vand.u32 2147483647, %v952
    %vm963 = vcmp.eq.f32.partialorder %v962, 8.507059e+37
    %v964 = vand.u32 %v952, 2147483648
    %v965 = vor.u32 1.1754944e-38, %v964
    %v966 = vsel %vm963, %v965, %v961
    %v967 = vmul.f32 1.0, %v966
    %v968 = vxor.u32 %v946, 2147483648
    %v969 = vmul.f32 %v968, 1.442695
    %v970 = vpow.pop %v969
    %v971 = vadd.f32 %v970, 1.0
    %v972 = vrcp.pop %v971
    %v973 = vmul.f32 %v971, %v972
    %v974 = vsub.f32 1.0, %v973
    %v975 = vmul.f32 %v972, %v974
    %v976 = vadd.f32 %v972, %v975
    %vm977 = vweird.f32 %v971
    %vm978 = vweird.f32 %v972
    %vm979 = vmor %vm977, %vm978
    %v980 = vsel %vm979, %v972, %v976
    %v981 = vand.u32 2147483647, %v971
    %vm982 = vcmp.eq.f32.partialorder %v981, 8.507059e+37
    %v983 = vand.u32 %v971, 2147483648
    %v984 = vor.u32 1.1754944e-38, %v983
    %v985 = vsel %vm982, %v984, %v980
    %v986 = vmul.f32 1.0, %v985
    %v987 = vtanh.pop %v947
    %v988 = vxor.u32 %v948, 2147483648
    %v989 = vmul.f32 %v988, 1.442695
    %v990 = vpow.pop %v989
    %v991 = vadd.f32 %v990, 1.0
    %v992 = vrcp.pop %v991
    %v993 = vmul.f32 %v991, %v992
    %v994 = vsub.f32 1.0, %v993
    %v995 = vmul.f32 %v992, %v994
    %v996 = vadd.f32 %v992, %v995
    %vm997 = vweird.f32 %v991
    %vm998 = vweird.f32 %v992
    %vm999 = vmor %vm997, %vm998
    %v1000 = vsel %vm999, %v992, %v996
    %v1001 = vand.u32 2147483647, %v991
    %vm1002 = vcmp.eq.f32.partialorder %v1001, 8.507059e+37
    %v1003 = vand.u32 %v991, 2147483648
    %v1004 = vor.u32 1.1754944e-38, %v1003
    %v1005 = vsel %vm1002, %v1004, %v1000
    %v1006 = vmul.f32 1.0, %v1005
    %v1007 = vld [vmem:[#allocation3] sm:$0xff]
    %v1008 = vmul.f32 %v986, %v1007
    %v1009 = vmul.f32 %v967, %v987
    %v1010 = vadd.f32 %v1008, %v1009
    %v1011 = vtanh.pop %v1010
    %v1012 = vmul.f32 %v1006, %v1011
    %1013 = vst [vmem:[#allocation3] sm:$0xff] %v1010
    %1014 = vst [vmem:[#allocation2] sm:$0xff] %v1012
    %s1015 = scalar_lea.vmem %s4, 16
    %1016 = vst [vmem:[%s1015] sm:$0xff] %v1012
    %s1017 = scalar_lea.vmem %s0, 48
    %v1018 = vld [vmem:[%s1017] sm:$0xff]
    %v1019 = vld [vmem:[%s1017 + $0x8] sm:$0xff]
    %v1020 = vunpack.c.l.bf16 %v1018
    %v1021 = vunpack.c.h.bf16 %v1018
    %v1022 = vunpack.c.l.bf16 %v1019
    %v1023 = vunpack.c.h.bf16 %v1019
    %v1024 = vld [vmem:[#allocation2] sm:$0xff]
    %v1025 = vpack.c.bf16 %v1024, %v1024
    %v1026 = vld [vmem:[#allocation4] sm:$0xff]
    %v1027 = vld [vmem:[#allocation4 + $0x8] sm:$0xff]
    %v1028 = vld [vmem:[#allocation4 + $0x10] sm:$0xff]
    %v1029 = vld [vmem:[#allocation4 + $0x18] sm:$0xff]
    %v1030 = vld [vmem:[#allocation4 + $0x20] sm:$0xff]
    %v1031 = vld [vmem:[#allocation4 + $0x28] sm:$0xff]
    %v1032 = vld [vmem:[#allocation4 + $0x30] sm:$0xff]
    %v1033 = vld [vmem:[#allocation4 + $0x38] sm:$0xff]
    %v1034 = vld [vmem:[#allocation4 + $0x40] sm:$0xff]
    %v1035 = vld [vmem:[#allocation4 + $0x48] sm:$0xff]
    %v1036 = vld [vmem:[#allocation4 + $0x50] sm:$0xff]
    %v1037 = vld [vmem:[#allocation4 + $0x58] sm:$0xff]
    %v1038 = vld [vmem:[#allocation4 + $0x60] sm:$0xff]
    %v1039 = vld [vmem:[#allocation4 + $0x68] sm:$0xff]
    %v1040 = vld [vmem:[#allocation4 + $0x70] sm:$0xff]
    %v1041 = vld [vmem:[#allocation4 + $0x78] sm:$0xff]
    %v1042 = vld [vmem:[#allocation4 + $0x80] sm:$0xff]
    %v1043 = vld [vmem:[#allocation4 + $0x88] sm:$0xff]
    %v1044 = vld [vmem:[#allocation4 + $0x90] sm:$0xff]
    %v1045 = vld [vmem:[#allocation4 + $0x98] sm:$0xff]
    %v1046 = vld [vmem:[#allocation4 + $0xa0] sm:$0xff]
    %v1047 = vld [vmem:[#allocation4 + $0xa8] sm:$0xff]
    %v1048 = vld [vmem:[#allocation4 + $0xb0] sm:$0xff]
    %v1049 = vld [vmem:[#allocation4 + $0xb8] sm:$0xff]
    %v1050 = vld [vmem:[#allocation4 + $0xc0] sm:$0xff]
    %v1051 = vld [vmem:[#allocation4 + $0xc8] sm:$0xff]
    %v1052 = vld [vmem:[#allocation4 + $0xd0] sm:$0xff]
    %v1053 = vld [vmem:[#allocation4 + $0xd8] sm:$0xff]
    %v1054 = vld [vmem:[#allocation4 + $0xe0] sm:$0xff]
    %v1055 = vld [vmem:[#allocation4 + $0xe8] sm:$0xff]
    %v1056 = vld [vmem:[#allocation4 + $0xf0] sm:$0xff]
    %v1057 = vld [vmem:[#allocation4 + $0xf8] sm:$0xff]
    %v1090 = vunpack.c.l.b16 %v1026
    %v1091 = vunpack.c.h.b16 %v1026
    %v1092 = vunpack.c.l.b16 %v1027
    %v1093 = vunpack.c.h.b16 %v1027
    %v1094 = vunpack.c.l.b16 %v1028
    %v1095 = vunpack.c.h.b16 %v1028
    %v1096 = vunpack.c.l.b16 %v1029
    %v1097 = vunpack.c.h.b16 %v1029
    %v1098 = vunpack.c.l.b16 %v1030
    %v1099 = vunpack.c.h.b16 %v1030
    %v1100 = vunpack.c.l.b16 %v1031
    %v1101 = vunpack.c.h.b16 %v1031
    %v1102 = vunpack.c.l.b16 %v1032
    %v1103 = vunpack.c.h.b16 %v1032
    %v1104 = vunpack.c.l.b16 %v1033
    %v1105 = vunpack.c.h.b16 %v1033
    %v1106 = vunpack.c.l.b16 %v1034
    %v1107 = vunpack.c.h.b16 %v1034
    %v1108 = vunpack.c.l.b16 %v1035
    %v1109 = vunpack.c.h.b16 %v1035
    %v1110 = vunpack.c.l.b16 %v1036
    %v1111 = vunpack.c.h.b16 %v1036
    %v1112 = vunpack.c.l.b16 %v1037
    %v1113 = vunpack.c.h.b16 %v1037
    %v1114 = vunpack.c.l.b16 %v1038
    %v1115 = vunpack.c.h.b16 %v1038
    %v1116 = vunpack.c.l.b16 %v1039
    %v1117 = vunpack.c.h.b16 %v1039
    %v1118 = vunpack.c.l.b16 %v1040
    %v1119 = vunpack.c.h.b16 %v1040
    %v1120 = vunpack.c.l.b16 %v1041
    %v1121 = vunpack.c.h.b16 %v1041
    %v1122 = vunpack.c.l.b16 %v1042
    %v1123 = vunpack.c.h.b16 %v1042
    %v1124 = vunpack.c.l.b16 %v1043
    %v1125 = vunpack.c.h.b16 %v1043
    %v1126 = vunpack.c.l.b16 %v1044
    %v1127 = vunpack.c.h.b16 %v1044
    %v1128 = vunpack.c.l.b16 %v1045
    %v1129 = vunpack.c.h.b16 %v1045
    %v1130 = vunpack.c.l.b16 %v1046
    %v1131 = vunpack.c.h.b16 %v1046
    %v1132 = vunpack.c.l.b16 %v1047
    %v1133 = vunpack.c.h.b16 %v1047
    %v1134 = vunpack.c.l.b16 %v1048
    %v1135 = vunpack.c.h.b16 %v1048
    %v1136 = vunpack.c.l.b16 %v1049
    %v1137 = vunpack.c.h.b16 %v1049
    %v1138 = vunpack.c.l.b16 %v1050
    %v1139 = vunpack.c.h.b16 %v1050
    %v1140 = vunpack.c.l.b16 %v1051
    %v1141 = vunpack.c.h.b16 %v1051
    %v1142 = vunpack.c.l.b16 %v1052
    %v1143 = vunpack.c.h.b16 %v1052
    %v1144 = vunpack.c.l.b16 %v1053
    %v1145 = vunpack.c.h.b16 %v1053
    %v1146 = vunpack.c.l.b16 %v1054
    %v1147 = vunpack.c.h.b16 %v1054
    %v1148 = vunpack.c.l.b16 %v1055
    %v1149 = vunpack.c.h.b16 %v1055
    %v1150 = vunpack.c.l.b16 %v1056
    %v1151 = vunpack.c.h.b16 %v1056
    %v1152 = vunpack.c.l.b16 %v1057
    %v1153 = vunpack.c.h.b16 %v1057
    %v1154 = vpack.c.b16 %v1094, %v1090
    %v1155 = vpack.c.b16 %v1095, %v1091
    %v1156 = vpack.c.b16 %v1096, %v1092
    %v1157 = vpack.c.b16 %v1097, %v1093
    %v1158 = vpack.c.b16 %v1102, %v1098
    %v1159 = vpack.c.b16 %v1103, %v1099
    %v1160 = vpack.c.b16 %v1104, %v1100
    %v1161 = vpack.c.b16 %v1105, %v1101
    %v1162 = vpack.c.b16 %v1110, %v1106
    %v1163 = vpack.c.b16 %v1111, %v1107
    %v1164 = vpack.c.b16 %v1112, %v1108
    %v1165 = vpack.c.b16 %v1113, %v1109
    %v1166 = vpack.c.b16 %v1118, %v1114
    %v1167 = vpack.c.b16 %v1119, %v1115
    %v1168 = vpack.c.b16 %v1120, %v1116
    %v1169 = vpack.c.b16 %v1121, %v1117
    %v1170 = vpack.c.b16 %v1126, %v1122
    %v1171 = vpack.c.b16 %v1127, %v1123
    %v1172 = vpack.c.b16 %v1128, %v1124
    %v1173 = vpack.c.b16 %v1129, %v1125
    %v1174 = vpack.c.b16 %v1134, %v1130
    %v1175 = vpack.c.b16 %v1135, %v1131
    %v1176 = vpack.c.b16 %v1136, %v1132
    %v1177 = vpack.c.b16 %v1137, %v1133
    %v1178 = vpack.c.b16 %v1142, %v1138
    %v1179 = vpack.c.b16 %v1143, %v1139
    %v1180 = vpack.c.b16 %v1144, %v1140
    %v1181 = vpack.c.b16 %v1145, %v1141
    %v1182 = vpack.c.b16 %v1150, %v1146
    %v1183 = vpack.c.b16 %v1151, %v1147
    %v1184 = vpack.c.b16 %v1152, %v1148
    %v1185 = vpack.c.b16 %v1153, %v1149
    %1218 = vmatpush.bf16.msra.mxu0 %v1182
    %1219 = vmatpush.bf16.msra.mxu0 %v1178
    %1220 = vmatpush.bf16.msra.mxu0 %v1174
    %1221 = vmatpush.bf16.msra.mxu0 %v1170
    %1222 = vmatpush.bf16.msra.mxu0 %v1166
    %1223 = vmatpush.bf16.msra.mxu0 %v1162
    %1224 = vmatpush.bf16.msra.mxu0 %v1158
    %1225 = vmatpush.bf16.msra.mxu0 %v1154
    %1226 = vmatmul.bf16.gmra.mxu0 %v1025
    %v1227 = vpop.f32.mrf.mxu0
    %v1228 = vadd.f32 0.0, %v1227
    %v1229 = vpop.f32.mrf.mxu0
    %1230 = vdwg.mxu0
    %1231 = vmatpush.bf16.msra.mxu0 %v1183
    %1232 = vmatpush.bf16.msra.mxu0 %v1179
    %1233 = vmatpush.bf16.msra.mxu0 %v1175
    %1234 = vmatpush.bf16.msra.mxu0 %v1171
    %1235 = vmatpush.bf16.msra.mxu0 %v1167
    %1236 = vmatpush.bf16.msra.mxu0 %v1163
    %1237 = vmatpush.bf16.msra.mxu0 %v1159
    %1238 = vmatpush.bf16.msra.mxu0 %v1155
    %1239 = vmatmul.bf16.gmra.mxu0 %v1025
    %v1240 = vpop.f32.mrf.mxu0
    %v1241 = vadd.f32 0.0, %v1240
    %v1242 = vpop.f32.mrf.mxu0
    %1243 = vdwg.mxu0
    %1244 = vmatpush.bf16.msra.mxu0 %v1184
    %1245 = vmatpush.bf16.msra.mxu0 %v1180
    %1246 = vmatpush.bf16.msra.mxu0 %v1176
    %1247 = vmatpush.bf16.msra.mxu0 %v1172
    %1248 = vmatpush.bf16.msra.mxu0 %v1168
    %1249 = vmatpush.bf16.msra.mxu0 %v1164
    %1250 = vmatpush.bf16.msra.mxu0 %v1160
    %1251 = vmatpush.bf16.msra.mxu0 %v1156
    %1252 = vmatmul.bf16.gmra.mxu0 %v1025
    %v1253 = vpop.f32.mrf.mxu0
    %v1254 = vadd.f32 0.0, %v1253
    %v1255 = vpop.f32.mrf.mxu0
    %1256 = vdwg.mxu0
    %1257 = vmatpush.bf16.msra.mxu0 %v1185
    %1258 = vmatpush.bf16.msra.mxu0 %v1181
    %1259 = vmatpush.bf16.msra.mxu0 %v1177
    %1260 = vmatpush.bf16.msra.mxu0 %v1173
    %1261 = vmatpush.bf16.msra.mxu0 %v1169
    %1262 = vmatpush.bf16.msra.mxu0 %v1165
    %1263 = vmatpush.bf16.msra.mxu0 %v1161
    %1264 = vmatpush.bf16.msra.mxu0 %v1157
    %1265 = vmatmul.bf16.gmra.mxu0 %v1025
    %v1266 = vpop.f32.mrf.mxu0
    %v1267 = vadd.f32 0.0, %v1266
    %v1268 = vpop.f32.mrf.mxu0
    %1269 = vdwg.mxu0
    %v1270 = vadd.f32 %v1020, %v1228
    %v1271 = vadd.f32 %v1021, %v1241
    %v1272 = vadd.f32 %v1022, %v1254
    %v1273 = vadd.f32 %v1023, %v1267
    %v1274 = vxor.u32 %v1270, 2147483648
    %v1275 = vmul.f32 %v1274, 1.442695
    %v1276 = vpow.pop %v1275
    %v1277 = vadd.f32 %v1276, 1.0
    %v1278 = vrcp.pop %v1277
    %v1279 = vmul.f32 %v1277, %v1278
    %v1280 = vsub.f32 1.0, %v1279
    %v1281 = vmul.f32 %v1278, %v1280
    %v1282 = vadd.f32 %v1278, %v1281
    %vm1283 = vweird.f32 %v1277
    %vm1284 = vweird.f32 %v1278
    %vm1285 = vmor %vm1283, %vm1284
    %v1286 = vsel %vm1285, %v1278, %v1282
    %v1287 = vand.u32 2147483647, %v1277
    %vm1288 = vcmp.eq.f32.partialorder %v1287, 8.507059e+37
    %v1289 = vand.u32 %v1277, 2147483648
    %v1290 = vor.u32 1.1754944e-38, %v1289
    %v1291 = vsel %vm1288, %v1290, %v1286
    %v1292 = vmul.f32 1.0, %v1291
    %v1293 = vxor.u32 %v1271, 2147483648
    %v1294 = vmul.f32 %v1293, 1.442695
    %v1295 = vpow.pop %v1294
    %v1296 = vadd.f32 %v1295, 1.0
    %v1297 = vrcp.pop %v1296
    %v1298 = vmul.f32 %v1296, %v1297
    %v1299 = vsub.f32 1.0, %v1298
    %v1300 = vmul.f32 %v1297, %v1299
    %v1301 = vadd.f32 %v1297, %v1300
    %vm1302 = vweird.f32 %v1296
    %vm1303 = vweird.f32 %v1297
    %vm1304 = vmor %vm1302, %vm1303
    %v1305 = vsel %vm1304, %v1297, %v1301
    %v1306 = vand.u32 2147483647, %v1296
    %vm1307 = vcmp.eq.f32.partialorder %v1306, 8.507059e+37
    %v1308 = vand.u32 %v1296, 2147483648
    %v1309 = vor.u32 1.1754944e-38, %v1308
    %v1310 = vsel %vm1307, %v1309, %v1305
    %v1311 = vmul.f32 1.0, %v1310
    %v1312 = vtanh.pop %v1272
    %v1313 = vxor.u32 %v1273, 2147483648
    %v1314 = vmul.f32 %v1313, 1.442695
    %v1315 = vpow.pop %v1314
    %v1316 = vadd.f32 %v1315, 1.0
    %v1317 = vrcp.pop %v1316
    %v1318 = vmul.f32 %v1316, %v1317
    %v1319 = vsub.f32 1.0, %v1318
    %v1320 = vmul.f32 %v1317, %v1319
    %v1321 = vadd.f32 %v1317, %v1320
    %vm1322 = vweird.f32 %v1316
    %vm1323 = vweird.f32 %v1317
    %vm1324 = vmor %vm1322, %vm1323
    %v1325 = vsel %vm1324, %v1317, %v1321
    %v1326 = vand.u32 2147483647, %v1316
    %vm1327 = vcmp.eq.f32.partialorder %v1326, 8.507059e+37
    %v1328 = vand.u32 %v1316, 2147483648
    %v1329 = vor.u32 1.1754944e-38, %v1328
    %v1330 = vsel %vm1327, %v1329, %v1325
    %v1331 = vmul.f32 1.0, %v1330
    %v1332 = vld [vmem:[#allocation3] sm:$0xff]
    %v1333 = vmul.f32 %v1311, %v1332
    %v1334 = vmul.f32 %v1292, %v1312
    %v1335 = vadd.f32 %v1333, %v1334
    %v1336 = vtanh.pop %v1335
    %v1337 = vmul.f32 %v1331, %v1336
    %1338 = vst [vmem:[#allocation3] sm:$0xff] %v1335
    %1339 = vst [vmem:[#allocation2] sm:$0xff] %v1337
    %s1340 = scalar_lea.vmem %s4, 24
    %1341 = vst [vmem:[%s1340] sm:$0xff] %v1337
    %s1342 = scalar_lea.vmem %s0, 64
    %v1343 = vld [vmem:[%s1342] sm:$0xff]
    %v1344 = vld [vmem:[%s1342 + $0x8] sm:$0xff]
    %v1345 = vunpack.c.l.bf16 %v1343
    %v1346 = vunpack.c.h.bf16 %v1343
    %v1347 = vunpack.c.l.bf16 %v1344
    %v1348 = vunpack.c.h.bf16 %v1344
    %v1349 = vld [vmem:[#allocation2] sm:$0xff]
    %v1350 = vpack.c.bf16 %v1349, %v1349
    %v1351 = vld [vmem:[#allocation4] sm:$0xff]
    %v1352 = vld [vmem:[#allocation4 + $0x8] sm:$0xff]
    %v1353 = vld [vmem:[#allocation4 + $0x10] sm:$0xff]
    %v1354 = vld [vmem:[#allocation4 + $0x18] sm:$0xff]
    %v1355 = vld [vmem:[#allocation4 + $0x20] sm:$0xff]
    %v1356 = vld [vmem:[#allocation4 + $0x28] sm:$0xff]
    %v1357 = vld [vmem:[#allocation4 + $0x30] sm:$0xff]
    %v1358 = vld [vmem:[#allocation4 + $0x38] sm:$0xff]
    %v1359 = vld [vmem:[#allocation4 + $0x40] sm:$0xff]
    %v1360 = vld [vmem:[#allocation4 + $0x48] sm:$0xff]
    %v1361 = vld [vmem:[#allocation4 + $0x50] sm:$0xff]
    %v1362 = vld [vmem:[#allocation4 + $0x58] sm:$0xff]
    %v1363 = vld [vmem:[#allocation4 + $0x60] sm:$0xff]
    %v1364 = vld [vmem:[#allocation4 + $0x68] sm:$0xff]
    %v1365 = vld [vmem:[#allocation4 + $0x70] sm:$0xff]
    %v1366 = vld [vmem:[#allocation4 + $0x78] sm:$0xff]
    %v1367 = vld [vmem:[#allocation4 + $0x80] sm:$0xff]
    %v1368 = vld [vmem:[#allocation4 + $0x88] sm:$0xff]
    %v1369 = vld [vmem:[#allocation4 + $0x90] sm:$0xff]
    %v1370 = vld [vmem:[#allocation4 + $0x98] sm:$0xff]
    %v1371 = vld [vmem:[#allocation4 + $0xa0] sm:$0xff]
    %v1372 = vld [vmem:[#allocation4 + $0xa8] sm:$0xff]
    %v1373 = vld [vmem:[#allocation4 + $0xb0] sm:$0xff]
    %v1374 = vld [vmem:[#allocation4 + $0xb8] sm:$0xff]
    %v1375 = vld [vmem:[#allocation4 + $0xc0] sm:$0xff]
    %v1376 = vld [vmem:[#allocation4 + $0xc8] sm:$0xff]
    %v1377 = vld [vmem:[#allocation4 + $0xd0] sm:$0xff]
    %v1378 = vld [vmem:[#allocation4 + $0xd8] sm:$0xff]
    %v1379 = vld [vmem:[#allocation4 + $0xe0] sm:$0xff]
    %v1380 = vld [vmem:[#allocation4 + $0xe8] sm:$0xff]
    %v1381 = vld [vmem:[#allocation4 + $0xf0] sm:$0xff]
    %v1382 = vld [vmem:[#allocation4 + $0xf8] sm:$0xff]
    %v1415 = vunpack.c.l.b16 %v1351
    %v1416 = vunpack.c.h.b16 %v1351
    %v1417 = vunpack.c.l.b16 %v1352
    %v1418 = vunpack.c.h.b16 %v1352
    %v1419 = vunpack.c.l.b16 %v1353
    %v1420 = vunpack.c.h.b16 %v1353
    %v1421 = vunpack.c.l.b16 %v1354
    %v1422 = vunpack.c.h.b16 %v1354
    %v1423 = vunpack.c.l.b16 %v1355
    %v1424 = vunpack.c.h.b16 %v1355
    %v1425 = vunpack.c.l.b16 %v1356
    %v1426 = vunpack.c.h.b16 %v1356
    %v1427 = vunpack.c.l.b16 %v1357
    %v1428 = vunpack.c.h.b16 %v1357
    %v1429 = vunpack.c.l.b16 %v1358
    %v1430 = vunpack.c.h.b16 %v1358
    %v1431 = vunpack.c.l.b16 %v1359
    %v1432 = vunpack.c.h.b16 %v1359
    %v1433 = vunpack.c.l.b16 %v1360
    %v1434 = vunpack.c.h.b16 %v1360
    %v1435 = vunpack.c.l.b16 %v1361
    %v1436 = vunpack.c.h.b16 %v1361
    %v1437 = vunpack.c.l.b16 %v1362
    %v1438 = vunpack.c.h.b16 %v1362
    %v1439 = vunpack.c.l.b16 %v1363
    %v1440 = vunpack.c.h.b16 %v1363
    %v1441 = vunpack.c.l.b16 %v1364
    %v1442 = vunpack.c.h.b16 %v1364
    %v1443 = vunpack.c.l.b16 %v1365
    %v1444 = vunpack.c.h.b16 %v1365
    %v1445 = vunpack.c.l.b16 %v1366
    %v1446 = vunpack.c.h.b16 %v1366
    %v1447 = vunpack.c.l.b16 %v1367
    %v1448 = vunpack.c.h.b16 %v1367
    %v1449 = vunpack.c.l.b16 %v1368
    %v1450 = vunpack.c.h.b16 %v1368
    %v1451 = vunpack.c.l.b16 %v1369
    %v1452 = vunpack.c.h.b16 %v1369
    %v1453 = vunpack.c.l.b16 %v1370
    %v1454 = vunpack.c.h.b16 %v1370
    %v1455 = vunpack.c.l.b16 %v1371
    %v1456 = vunpack.c.h.b16 %v1371
    %v1457 = vunpack.c.l.b16 %v1372
    %v1458 = vunpack.c.h.b16 %v1372
    %v1459 = vunpack.c.l.b16 %v1373
    %v1460 = vunpack.c.h.b16 %v1373
    %v1461 = vunpack.c.l.b16 %v1374
    %v1462 = vunpack.c.h.b16 %v1374
    %v1463 = vunpack.c.l.b16 %v1375
    %v1464 = vunpack.c.h.b16 %v1375
    %v1465 = vunpack.c.l.b16 %v1376
    %v1466 = vunpack.c.h.b16 %v1376
    %v1467 = vunpack.c.l.b16 %v1377
    %v1468 = vunpack.c.h.b16 %v1377
    %v1469 = vunpack.c.l.b16 %v1378
    %v1470 = vunpack.c.h.b16 %v1378
    %v1471 = vunpack.c.l.b16 %v1379
    %v1472 = vunpack.c.h.b16 %v1379
    %v1473 = vunpack.c.l.b16 %v1380
    %v1474 = vunpack.c.h.b16 %v1380
    %v1475 = vunpack.c.l.b16 %v1381
    %v1476 = vunpack.c.h.b16 %v1381
    %v1477 = vunpack.c.l.b16 %v1382
    %v1478 = vunpack.c.h.b16 %v1382
    %v1479 = vpack.c.b16 %v1419, %v1415
    %v1480 = vpack.c.b16 %v1420, %v1416
    %v1481 = vpack.c.b16 %v1421, %v1417
    %v1482 = vpack.c.b16 %v1422, %v1418
    %v1483 = vpack.c.b16 %v1427, %v1423
    %v1484 = vpack.c.b16 %v1428, %v1424
    %v1485 = vpack.c.b16 %v1429, %v1425
    %v1486 = vpack.c.b16 %v1430, %v1426
    %v1487 = vpack.c.b16 %v1435, %v1431
    %v1488 = vpack.c.b16 %v1436, %v1432
    %v1489 = vpack.c.b16 %v1437, %v1433
    %v1490 = vpack.c.b16 %v1438, %v1434
    %v1491 = vpack.c.b16 %v1443, %v1439
    %v1492 = vpack.c.b16 %v1444, %v1440
    %v1493 = vpack.c.b16 %v1445, %v1441
    %v1494 = vpack.c.b16 %v1446, %v1442
    %v1495 = vpack.c.b16 %v1451, %v1447
    %v1496 = vpack.c.b16 %v1452, %v1448
    %v1497 = vpack.c.b16 %v1453, %v1449
    %v1498 = vpack.c.b16 %v1454, %v1450
    %v1499 = vpack.c.b16 %v1459, %v1455
    %v1500 = vpack.c.b16 %v1460, %v1456
    %v1501 = vpack.c.b16 %v1461, %v1457
    %v1502 = vpack.c.b16 %v1462, %v1458
    %v1503 = vpack.c.b16 %v1467, %v1463
    %v1504 = vpack.c.b16 %v1468, %v1464
    %v1505 = vpack.c.b16 %v1469, %v1465
    %v1506 = vpack.c.b16 %v1470, %v1466
    %v1507 = vpack.c.b16 %v1475, %v1471
    %v1508 = vpack.c.b16 %v1476, %v1472
    %v1509 = vpack.c.b16 %v1477, %v1473
    %v1510 = vpack.c.b16 %v1478, %v1474
    %1543 = vmatpush.bf16.msra.mxu0 %v1507
    %1544 = vmatpush.bf16.msra.mxu0 %v1503
    %1545 = vmatpush.bf16.msra.mxu0 %v1499
    %1546 = vmatpush.bf16.msra.mxu0 %v1495
    %1547 = vmatpush.bf16.msra.mxu0 %v1491
    %1548 = vmatpush.bf16.msra.mxu0 %v1487
    %1549 = vmatpush.bf16.msra.mxu0 %v1483
    %1550 = vmatpush.bf16.msra.mxu0 %v1479
    %1551 = vmatmul.bf16.gmra.mxu0 %v1350
    %v1552 = vpop.f32.mrf.mxu0
    %v1553 = vadd.f32 0.0, %v1552
    %v1554 = vpop.f32.mrf.mxu0
    %1555 = vdwg.mxu0
    %1556 = vmatpush.bf16.msra.mxu0 %v1508
    %1557 = vmatpush.bf16.msra.mxu0 %v1504
    %1558 = vmatpush.bf16.msra.mxu0 %v1500
    %1559 = vmatpush.bf16.msra.mxu0 %v1496
    %1560 = vmatpush.bf16.msra.mxu0 %v1492
    %1561 = vmatpush.bf16.msra.mxu0 %v1488
    %1562 = vmatpush.bf16.msra.mxu0 %v1484
    %1563 = vmatpush.bf16.msra.mxu0 %v1480
    %1564 = vmatmul.bf16.gmra.mxu0 %v1350
    %v1565 = vpop.f32.mrf.mxu0
    %v1566 = vadd.f32 0.0, %v1565
    %v1567 = vpop.f32.mrf.mxu0
    %1568 = vdwg.mxu0
    %1569 = vmatpush.bf16.msra.mxu0 %v1509
    %1570 = vmatpush.bf16.msra.mxu0 %v1505
    %1571 = vmatpush.bf16.msra.mxu0 %v1501
    %1572 = vmatpush.bf16.msra.mxu0 %v1497
    %1573 = vmatpush.bf16.msra.mxu0 %v1493
    %1574 = vmatpush.bf16.msra.mxu0 %v1489
    %1575 = vmatpush.bf16.msra.mxu0 %v1485
    %1576 = vmatpush.bf16.msra.mxu0 %v1481
    %1577 = vmatmul.bf16.gmra.mxu0 %v1350
    %v1578 = vpop.f32.mrf.mxu0
    %v1579 = vadd.f32 0.0, %v1578
    %v1580 = vpop.f32.mrf.mxu0
    %1581 = vdwg.mxu0
    %1582 = vmatpush.bf16.msra.mxu0 %v1510
    %1583 = vmatpush.bf16.msra.mxu0 %v1506
    %1584 = vmatpush.bf16.msra.mxu0 %v1502
    %1585 = vmatpush.bf16.msra.mxu0 %v1498
    %1586 = vmatpush.bf16.msra.mxu0 %v1494
    %1587 = vmatpush.bf16.msra.mxu0 %v1490
    %1588 = vmatpush.bf16.msra.mxu0 %v1486
    %1589 = vmatpush.bf16.msra.mxu0 %v1482
    %1590 = vmatmul.bf16.gmra.mxu0 %v1350
    %v1591 = vpop.f32.mrf.mxu0
    %v1592 = vadd.f32 0.0, %v1591
    %v1593 = vpop.f32.mrf.mxu0
    %1594 = vdwg.mxu0
    %v1595 = vadd.f32 %v1345, %v1553
    %v1596 = vadd.f32 %v1346, %v1566
    %v1597 = vadd.f32 %v1347, %v1579
    %v1598 = vadd.f32 %v1348, %v1592
    %v1599 = vxor.u32 %v1595, 2147483648
    %v1600 = vmul.f32 %v1599, 1.442695
    %v1601 = vpow.pop %v1600
    %v1602 = vadd.f32 %v1601, 1.0
    %v1603 = vrcp.pop %v1602
    %v1604 = vmul.f32 %v1602, %v1603
    %v1605 = vsub.f32 1.0, %v1604
    %v1606 = vmul.f32 %v1603, %v1605
    %v1607 = vadd.f32 %v1603, %v1606
    %vm1608 = vweird.f32 %v1602
    %vm1609 = vweird.f32 %v1603
    %vm1610 = vmor %vm1608, %vm1609
    %v1611 = vsel %vm1610, %v1603, %v1607
    %v1612 = vand.u32 2147483647, %v1602
    %vm1613 = vcmp.eq.f32.partialorder %v1612, 8.507059e+37
    %v1614 = vand.u32 %v1602, 2147483648
    %v1615 = vor.u32 1.1754944e-38, %v1614
    %v1616 = vsel %vm1613, %v1615, %v1611
    %v1617 = vmul.f32 1.0, %v1616
    %v1618 = vxor.u32 %v1596, 2147483648
    %v1619 = vmul.f32 %v1618, 1.442695
    %v1620 = vpow.pop %v1619
    %v1621 = vadd.f32 %v1620, 1.0
    %v1622 = vrcp.pop %v1621
    %v1623 = vmul.f32 %v1621, %v1622
    %v1624 = vsub.f32 1.0, %v1623
    %v1625 = vmul.f32 %v1622, %v1624
    %v1626 = vadd.f32 %v1622, %v1625
    %vm1627 = vweird.f32 %v1621
    %vm1628 = vweird.f32 %v1622
    %vm1629 = vmor %vm1627, %vm1628
    %v1630 = vsel %vm1629, %v1622, %v1626
    %v1631 = vand.u32 2147483647, %v1621
    %vm1632 = vcmp.eq.f32.partialorder %v1631, 8.507059e+37
    %v1633 = vand.u32 %v1621, 2147483648
    %v1634 = vor.u32 1.1754944e-38, %v1633
    %v1635 = vsel %vm1632, %v1634, %v1630
    %v1636 = vmul.f32 1.0, %v1635
    %v1637 = vtanh.pop %v1597
    %v1638 = vxor.u32 %v1598, 2147483648
    %v1639 = vmul.f32 %v1638, 1.442695
    %v1640 = vpow.pop %v1639
    %v1641 = vadd.f32 %v1640, 1.0
    %v1642 = vrcp.pop %v1641
    %v1643 = vmul.f32 %v1641, %v1642
    %v1644 = vsub.f32 1.0, %v1643
    %v1645 = vmul.f32 %v1642, %v1644
    %v1646 = vadd.f32 %v1642, %v1645
    %vm1647 = vweird.f32 %v1641
    %vm1648 = vweird.f32 %v1642
    %vm1649 = vmor %vm1647, %vm1648
    %v1650 = vsel %vm1649, %v1642, %v1646
    %v1651 = vand.u32 2147483647, %v1641
    %vm1652 = vcmp.eq.f32.partialorder %v1651, 8.507059e+37
    %v1653 = vand.u32 %v1641, 2147483648
    %v1654 = vor.u32 1.1754944e-38, %v1653
    %v1655 = vsel %vm1652, %v1654, %v1650
    %v1656 = vmul.f32 1.0, %v1655
    %v1657 = vld [vmem:[#allocation3] sm:$0xff]
    %v1658 = vmul.f32 %v1636, %v1657
    %v1659 = vmul.f32 %v1617, %v1637
    %v1660 = vadd.f32 %v1658, %v1659
    %v1661 = vtanh.pop %v1660
    %v1662 = vmul.f32 %v1656, %v1661
    %1663 = vst [vmem:[#allocation3] sm:$0xff] %v1660
    %1664 = vst [vmem:[#allocation2] sm:$0xff] %v1662
    %s1665 = scalar_lea.vmem %s4, 32
    %1666 = vst [vmem:[%s1665] sm:$0xff] %v1662
    %s1667 = scalar_lea.vmem %s0, 80
    %v1668 = vld [vmem:[%s1667] sm:$0xff]
    %v1669 = vld [vmem:[%s1667 + $0x8] sm:$0xff]
    %v1670 = vunpack.c.l.bf16 %v1668
    %v1671 = vunpack.c.h.bf16 %v1668
    %v1672 = vunpack.c.l.bf16 %v1669
    %v1673 = vunpack.c.h.bf16 %v1669
    %v1674 = vld [vmem:[#allocation2] sm:$0xff]
    %v1675 = vpack.c.bf16 %v1674, %v1674
    %v1676 = vld [vmem:[#allocation4] sm:$0xff]
    %v1677 = vld [vmem:[#allocation4 + $0x8] sm:$0xff]
    %v1678 = vld [vmem:[#allocation4 + $0x10] sm:$0xff]
    %v1679 = vld [vmem:[#allocation4 + $0x18] sm:$0xff]
    %v1680 = vld [vmem:[#allocation4 + $0x20] sm:$0xff]
    %v1681 = vld [vmem:[#allocation4 + $0x28] sm:$0xff]
    %v1682 = vld [vmem:[#allocation4 + $0x30] sm:$0xff]
    %v1683 = vld [vmem:[#allocation4 + $0x38] sm:$0xff]
    %v1684 = vld [vmem:[#allocation4 + $0x40] sm:$0xff]
    %v1685 = vld [vmem:[#allocation4 + $0x48] sm:$0xff]
    %v1686 = vld [vmem:[#allocation4 + $0x50] sm:$0xff]
    %v1687 = vld [vmem:[#allocation4 + $0x58] sm:$0xff]
    %v1688 = vld [vmem:[#allocation4 + $0x60] sm:$0xff]
    %v1689 = vld [vmem:[#allocation4 + $0x68] sm:$0xff]
    %v1690 = vld [vmem:[#allocation4 + $0x70] sm:$0xff]
    %v1691 = vld [vmem:[#allocation4 + $0x78] sm:$0xff]
    %v1692 = vld [vmem:[#allocation4 + $0x80] sm:$0xff]
    %v1693 = vld [vmem:[#allocation4 + $0x88] sm:$0xff]
    %v1694 = vld [vmem:[#allocation4 + $0x90] sm:$0xff]
    %v1695 = vld [vmem:[#allocation4 + $0x98] sm:$0xff]
    %v1696 = vld [vmem:[#allocation4 + $0xa0] sm:$0xff]
    %v1697 = vld [vmem:[#allocation4 + $0xa8] sm:$0xff]
    %v1698 = vld [vmem:[#allocation4 + $0xb0] sm:$0xff]
    %v1699 = vld [vmem:[#allocation4 + $0xb8] sm:$0xff]
    %v1700 = vld [vmem:[#allocation4 + $0xc0] sm:$0xff]
    %v1701 = vld [vmem:[#allocation4 + $0xc8] sm:$0xff]
    %v1702 = vld [vmem:[#allocation4 + $0xd0] sm:$0xff]
    %v1703 = vld [vmem:[#allocation4 + $0xd8] sm:$0xff]
    %v1704 = vld [vmem:[#allocation4 + $0xe0] sm:$0xff]
    %v1705 = vld [vmem:[#allocation4 + $0xe8] sm:$0xff]
    %v1706 = vld [vmem:[#allocation4 + $0xf0] sm:$0xff]
    %v1707 = vld [vmem:[#allocation4 + $0xf8] sm:$0xff]
    %v1740 = vunpack.c.l.b16 %v1676
    %v1741 = vunpack.c.h.b16 %v1676
    %v1742 = vunpack.c.l.b16 %v1677
    %v1743 = vunpack.c.h.b16 %v1677
    %v1744 = vunpack.c.l.b16 %v1678
    %v1745 = vunpack.c.h.b16 %v1678
    %v1746 = vunpack.c.l.b16 %v1679
    %v1747 = vunpack.c.h.b16 %v1679
    %v1748 = vunpack.c.l.b16 %v1680
    %v1749 = vunpack.c.h.b16 %v1680
    %v1750 = vunpack.c.l.b16 %v1681
    %v1751 = vunpack.c.h.b16 %v1681
    %v1752 = vunpack.c.l.b16 %v1682
    %v1753 = vunpack.c.h.b16 %v1682
    %v1754 = vunpack.c.l.b16 %v1683
    %v1755 = vunpack.c.h.b16 %v1683
    %v1756 = vunpack.c.l.b16 %v1684
    %v1757 = vunpack.c.h.b16 %v1684
    %v1758 = vunpack.c.l.b16 %v1685
    %v1759 = vunpack.c.h.b16 %v1685
    %v1760 = vunpack.c.l.b16 %v1686
    %v1761 = vunpack.c.h.b16 %v1686
    %v1762 = vunpack.c.l.b16 %v1687
    %v1763 = vunpack.c.h.b16 %v1687
    %v1764 = vunpack.c.l.b16 %v1688
    %v1765 = vunpack.c.h.b16 %v1688
    %v1766 = vunpack.c.l.b16 %v1689
    %v1767 = vunpack.c.h.b16 %v1689
    %v1768 = vunpack.c.l.b16 %v1690
    %v1769 = vunpack.c.h.b16 %v1690
    %v1770 = vunpack.c.l.b16 %v1691
    %v1771 = vunpack.c.h.b16 %v1691
    %v1772 = vunpack.c.l.b16 %v1692
    %v1773 = vunpack.c.h.b16 %v1692
    %v1774 = vunpack.c.l.b16 %v1693
    %v1775 = vunpack.c.h.b16 %v1693
    %v1776 = vunpack.c.l.b16 %v1694
    %v1777 = vunpack.c.h.b16 %v1694
    %v1778 = vunpack.c.l.b16 %v1695
    %v1779 = vunpack.c.h.b16 %v1695
    %v1780 = vunpack.c.l.b16 %v1696
    %v1781 = vunpack.c.h.b16 %v1696
    %v1782 = vunpack.c.l.b16 %v1697
    %v1783 = vunpack.c.h.b16 %v1697
    %v1784 = vunpack.c.l.b16 %v1698
    %v1785 = vunpack.c.h.b16 %v1698
    %v1786 = vunpack.c.l.b16 %v1699
    %v1787 = vunpack.c.h.b16 %v1699
    %v1788 = vunpack.c.l.b16 %v1700
    %v1789 = vunpack.c.h.b16 %v1700
    %v1790 = vunpack.c.l.b16 %v1701
    %v1791 = vunpack.c.h.b16 %v1701
    %v1792 = vunpack.c.l.b16 %v1702
    %v1793 = vunpack.c.h.b16 %v1702
    %v1794 = vunpack.c.l.b16 %v1703
    %v1795 = vunpack.c.h.b16 %v1703
    %v1796 = vunpack.c.l.b16 %v1704
    %v1797 = vunpack.c.h.b16 %v1704
    %v1798 = vunpack.c.l.b16 %v1705
    %v1799 = vunpack.c.h.b16 %v1705
    %v1800 = vunpack.c.l.b16 %v1706
    %v1801 = vunpack.c.h.b16 %v1706
    %v1802 = vunpack.c.l.b16 %v1707
    %v1803 = vunpack.c.h.b16 %v1707
    %v1804 = vpack.c.b16 %v1744, %v1740
    %v1805 = vpack.c.b16 %v1745, %v1741
    %v1806 = vpack.c.b16 %v1746, %v1742
    %v1807 = vpack.c.b16 %v1747, %v1743
    %v1808 = vpack.c.b16 %v1752, %v1748
    %v1809 = vpack.c.b16 %v1753, %v1749
    %v1810 = vpack.c.b16 %v1754, %v1750
    %v1811 = vpack.c.b16 %v1755, %v1751
    %v1812 = vpack.c.b16 %v1760, %v1756
    %v1813 = vpack.c.b16 %v1761, %v1757
    %v1814 = vpack.c.b16 %v1762, %v1758
    %v1815 = vpack.c.b16 %v1763, %v1759
    %v1816 = vpack.c.b16 %v1768, %v1764
    %v1817 = vpack.c.b16 %v1769, %v1765
    %v1818 = vpack.c.b16 %v1770, %v1766
    %v1819 = vpack.c.b16 %v1771, %v1767
    %v1820 = vpack.c.b16 %v1776, %v1772
    %v1821 = vpack.c.b16 %v1777, %v1773
    %v1822 = vpack.c.b16 %v1778, %v1774
    %v1823 = vpack.c.b16 %v1779, %v1775
    %v1824 = vpack.c.b16 %v1784, %v1780
    %v1825 = vpack.c.b16 %v1785, %v1781
    %v1826 = vpack.c.b16 %v1786, %v1782
    %v1827 = vpack.c.b16 %v1787, %v1783
    %v1828 = vpack.c.b16 %v1792, %v1788
    %v1829 = vpack.c.b16 %v1793, %v1789
    %v1830 = vpack.c.b16 %v1794, %v1790
    %v1831 = vpack.c.b16 %v1795, %v1791
    %v1832 = vpack.c.b16 %v1800, %v1796
    %v1833 = vpack.c.b16 %v1801, %v1797
    %v1834 = vpack.c.b16 %v1802, %v1798
    %v1835 = vpack.c.b16 %v1803, %v1799
    %1868 = vmatpush.bf16.msra.mxu0 %v1832
    %1869 = vmatpush.bf16.msra.mxu0 %v1828
    %1870 = vmatpush.bf16.msra.mxu0 %v1824
    %1871 = vmatpush.bf16.msra.mxu0 %v1820
    %1872 = vmatpush.bf16.msra.mxu0 %v1816
    %1873 = vmatpush.bf16.msra.mxu0 %v1812
    %1874 = vmatpush.bf16.msra.mxu0 %v1808
    %1875 = vmatpush.bf16.msra.mxu0 %v1804
    %1876 = vmatmul.bf16.gmra.mxu0 %v1675
    %v1877 = vpop.f32.mrf.mxu0
    %v1878 = vadd.f32 0.0, %v1877
    %v1879 = vpop.f32.mrf.mxu0
    %1880 = vdwg.mxu0
    %1881 = vmatpush.bf16.msra.mxu0 %v1833
    %1882 = vmatpush.bf16.msra.mxu0 %v1829
    %1883 = vmatpush.bf16.msra.mxu0 %v1825
    %1884 = vmatpush.bf16.msra.mxu0 %v1821
    %1885 = vmatpush.bf16.msra.mxu0 %v1817
    %1886 = vmatpush.bf16.msra.mxu0 %v1813
    %1887 = vmatpush.bf16.msra.mxu0 %v1809
    %1888 = vmatpush.bf16.msra.mxu0 %v1805
    %1889 = vmatmul.bf16.gmra.mxu0 %v1675
    %v1890 = vpop.f32.mrf.mxu0
    %v1891 = vadd.f32 0.0, %v1890
    %v1892 = vpop.f32.mrf.mxu0
    %1893 = vdwg.mxu0
    %1894 = vmatpush.bf16.msra.mxu0 %v1834
    %1895 = vmatpush.bf16.msra.mxu0 %v1830
    %1896 = vmatpush.bf16.msra.mxu0 %v1826
    %1897 = vmatpush.bf16.msra.mxu0 %v1822
    %1898 = vmatpush.bf16.msra.mxu0 %v1818
    %1899 = vmatpush.bf16.msra.mxu0 %v1814
    %1900 = vmatpush.bf16.msra.mxu0 %v1810
    %1901 = vmatpush.bf16.msra.mxu0 %v1806
    %1902 = vmatmul.bf16.gmra.mxu0 %v1675
    %v1903 = vpop.f32.mrf.mxu0
    %v1904 = vadd.f32 0.0, %v1903
    %v1905 = vpop.f32.mrf.mxu0
    %1906 = vdwg.mxu0
    %1907 = vmatpush.bf16.msra.mxu0 %v1835
    %1908 = vmatpush.bf16.msra.mxu0 %v1831
    %1909 = vmatpush.bf16.msra.mxu0 %v1827
    %1910 = vmatpush.bf16.msra.mxu0 %v1823
    %1911 = vmatpush.bf16.msra.mxu0 %v1819
    %1912 = vmatpush.bf16.msra.mxu0 %v1815
    %1913 = vmatpush.bf16.msra.mxu0 %v1811
    %1914 = vmatpush.bf16.msra.mxu0 %v1807
    %1915 = vmatmul.bf16.gmra.mxu0 %v1675
    %v1916 = vpop.f32.mrf.mxu0
    %v1917 = vadd.f32 0.0, %v1916
    %v1918 = vpop.f32.mrf.mxu0
    %1919 = vdwg.mxu0
    %v1920 = vadd.f32 %v1670, %v1878
    %v1921 = vadd.f32 %v1671, %v1891
    %v1922 = vadd.f32 %v1672, %v1904
    %v1923 = vadd.f32 %v1673, %v1917
    %v1924 = vxor.u32 %v1920, 2147483648
    %v1925 = vmul.f32 %v1924, 1.442695
    %v1926 = vpow.pop %v1925
    %v1927 = vadd.f32 %v1926, 1.0
    %v1928 = vrcp.pop %v1927
    %v1929 = vmul.f32 %v1927, %v1928
    %v1930 = vsub.f32 1.0, %v1929
    %v1931 = vmul.f32 %v1928, %v1930
    %v1932 = vadd.f32 %v1928, %v1931
    %vm1933 = vweird.f32 %v1927
    %vm1934 = vweird.f32 %v1928
    %vm1935 = vmor %vm1933, %vm1934
    %v1936 = vsel %vm1935, %v1928, %v1932
    %v1937 = vand.u32 2147483647, %v1927
    %vm1938 = vcmp.eq.f32.partialorder %v1937, 8.507059e+37
    %v1939 = vand.u32 %v1927, 2147483648
    %v1940 = vor.u32 1.1754944e-38, %v1939
    %v1941 = vsel %vm1938, %v1940, %v1936
    %v1942 = vmul.f32 1.0, %v1941
    %v1943 = vxor.u32 %v1921, 2147483648
    %v1944 = vmul.f32 %v1943, 1.442695
    %v1945 = vpow.pop %v1944
    %v1946 = vadd.f32 %v1945, 1.0
    %v1947 = vrcp.pop %v1946
    %v1948 = vmul.f32 %v1946, %v1947
    %v1949 = vsub.f32 1.0, %v1948
    %v1950 = vmul.f32 %v1947, %v1949
    %v1951 = vadd.f32 %v1947, %v1950
    %vm1952 = vweird.f32 %v1946
    %vm1953 = vweird.f32 %v1947
    %vm1954 = vmor %vm1952, %vm1953
    %v1955 = vsel %vm1954, %v1947, %v1951
    %v1956 = vand.u32 2147483647, %v1946
    %vm1957 = vcmp.eq.f32.partialorder %v1956, 8.507059e+37
    %v1958 = vand.u32 %v1946, 2147483648
    %v1959 = vor.u32 1.1754944e-38, %v1958
    %v1960 = vsel %vm1957, %v1959, %v1955
    %v1961 = vmul.f32 1.0, %v1960
    %v1962 = vtanh.pop %v1922
    %v1963 = vxor.u32 %v1923, 2147483648
    %v1964 = vmul.f32 %v1963, 1.442695
    %v1965 = vpow.pop %v1964
    %v1966 = vadd.f32 %v1965, 1.0
    %v1967 = vrcp.pop %v1966
    %v1968 = vmul.f32 %v1966, %v1967
    %v1969 = vsub.f32 1.0, %v1968
    %v1970 = vmul.f32 %v1967, %v1969
    %v1971 = vadd.f32 %v1967, %v1970
    %vm1972 = vweird.f32 %v1966
    %vm1973 = vweird.f32 %v1967
    %vm1974 = vmor %vm1972, %vm1973
    %v1975 = vsel %vm1974, %v1967, %v1971
    %v1976 = vand.u32 2147483647, %v1966
    %vm1977 = vcmp.eq.f32.partialorder %v1976, 8.507059e+37
    %v1978 = vand.u32 %v1966, 2147483648
    %v1979 = vor.u32 1.1754944e-38, %v1978
    %v1980 = vsel %vm1977, %v1979, %v1975
    %v1981 = vmul.f32 1.0, %v1980
    %v1982 = vld [vmem:[#allocation3] sm:$0xff]
    %v1983 = vmul.f32 %v1961, %v1982
    %v1984 = vmul.f32 %v1942, %v1962
    %v1985 = vadd.f32 %v1983, %v1984
    %v1986 = vtanh.pop %v1985
    %v1987 = vmul.f32 %v1981, %v1986
    %1988 = vst [vmem:[#allocation3] sm:$0xff] %v1985
    %1989 = vst [vmem:[#allocation2] sm:$0xff] %v1987
    %s1990 = scalar_lea.vmem %s4, 40
    %1991 = vst [vmem:[%s1990] sm:$0xff] %v1987
    %s1992 = scalar_lea.vmem %s0, 96
    %v1993 = vld [vmem:[%s1992] sm:$0xff]
    %v1994 = vld [vmem:[%s1992 + $0x8] sm:$0xff]
    %v1995 = vunpack.c.l.bf16 %v1993
    %v1996 = vunpack.c.h.bf16 %v1993
    %v1997 = vunpack.c.l.bf16 %v1994
    %v1998 = vunpack.c.h.bf16 %v1994
    %v1999 = vld [vmem:[#allocation2] sm:$0xff]
    %v2000 = vpack.c.bf16 %v1999, %v1999
    %v2001 = vld [vmem:[#allocation4] sm:$0xff]
    %v2002 = vld [vmem:[#allocation4 + $0x8] sm:$0xff]
    %v2003 = vld [vmem:[#allocation4 + $0x10] sm:$0xff]
    %v2004 = vld [vmem:[#allocation4 + $0x18] sm:$0xff]
    %v2005 = vld [vmem:[#allocation4 + $0x20] sm:$0xff]
    %v2006 = vld [vmem:[#allocation4 + $0x28] sm:$0xff]
    %v2007 = vld [vmem:[#allocation4 + $0x30] sm:$0xff]
    %v2008 = vld [vmem:[#allocation4 + $0x38] sm:$0xff]
    %v2009 = vld [vmem:[#allocation4 + $0x40] sm:$0xff]
    %v2010 = vld [vmem:[#allocation4 + $0x48] sm:$0xff]
    %v2011 = vld [vmem:[#allocation4 + $0x50] sm:$0xff]
    %v2012 = vld [vmem:[#allocation4 + $0x58] sm:$0xff]
    %v2013 = vld [vmem:[#allocation4 + $0x60] sm:$0xff]
    %v2014 = vld [vmem:[#allocation4 + $0x68] sm:$0xff]
    %v2015 = vld [vmem:[#allocation4 + $0x70] sm:$0xff]
    %v2016 = vld [vmem:[#allocation4 + $0x78] sm:$0xff]
    %v2017 = vld [vmem:[#allocation4 + $0x80] sm:$0xff]
    %v2018 = vld [vmem:[#allocation4 + $0x88] sm:$0xff]
    %v2019 = vld [vmem:[#allocation4 + $0x90] sm:$0xff]
    %v2020 = vld [vmem:[#allocation4 + $0x98] sm:$0xff]
    %v2021 = vld [vmem:[#allocation4 + $0xa0] sm:$0xff]
    %v2022 = vld [vmem:[#allocation4 + $0xa8] sm:$0xff]
    %v2023 = vld [vmem:[#allocation4 + $0xb0] sm:$0xff]
    %v2024 = vld [vmem:[#allocation4 + $0xb8] sm:$0xff]
    %v2025 = vld [vmem:[#allocation4 + $0xc0] sm:$0xff]
    %v2026 = vld [vmem:[#allocation4 + $0xc8] sm:$0xff]
    %v2027 = vld [vmem:[#allocation4 + $0xd0] sm:$0xff]
    %v2028 = vld [vmem:[#allocation4 + $0xd8] sm:$0xff]
    %v2029 = vld [vmem:[#allocation4 + $0xe0] sm:$0xff]
    %v2030 = vld [vmem:[#allocation4 + $0xe8] sm:$0xff]
    %v2031 = vld [vmem:[#allocation4 + $0xf0] sm:$0xff]
    %v2032 = vld [vmem:[#allocation4 + $0xf8] sm:$0xff]
    %v2065 = vunpack.c.l.b16 %v2001
    %v2066 = vunpack.c.h.b16 %v2001
    %v2067 = vunpack.c.l.b16 %v2002
    %v2068 = vunpack.c.h.b16 %v2002
    %v2069 = vunpack.c.l.b16 %v2003
    %v2070 = vunpack.c.h.b16 %v2003
    %v2071 = vunpack.c.l.b16 %v2004
    %v2072 = vunpack.c.h.b16 %v2004
    %v2073 = vunpack.c.l.b16 %v2005
    %v2074 = vunpack.c.h.b16 %v2005
    %v2075 = vunpack.c.l.b16 %v2006
    %v2076 = vunpack.c.h.b16 %v2006
    %v2077 = vunpack.c.l.b16 %v2007
    %v2078 = vunpack.c.h.b16 %v2007
    %v2079 = vunpack.c.l.b16 %v2008
    %v2080 = vunpack.c.h.b16 %v2008
    %v2081 = vunpack.c.l.b16 %v2009
    %v2082 = vunpack.c.h.b16 %v2009
    %v2083 = vunpack.c.l.b16 %v2010
    %v2084 = vunpack.c.h.b16 %v2010
    %v2085 = vunpack.c.l.b16 %v2011
    %v2086 = vunpack.c.h.b16 %v2011
    %v2087 = vunpack.c.l.b16 %v2012
    %v2088 = vunpack.c.h.b16 %v2012
    %v2089 = vunpack.c.l.b16 %v2013
    %v2090 = vunpack.c.h.b16 %v2013
    %v2091 = vunpack.c.l.b16 %v2014
    %v2092 = vunpack.c.h.b16 %v2014
    %v2093 = vunpack.c.l.b16 %v2015
    %v2094 = vunpack.c.h.b16 %v2015
    %v2095 = vunpack.c.l.b16 %v2016
    %v2096 = vunpack.c.h.b16 %v2016
    %v2097 = vunpack.c.l.b16 %v2017
    %v2098 = vunpack.c.h.b16 %v2017
    %v2099 = vunpack.c.l.b16 %v2018
    %v2100 = vunpack.c.h.b16 %v2018
    %v2101 = vunpack.c.l.b16 %v2019
    %v2102 = vunpack.c.h.b16 %v2019
    %v2103 = vunpack.c.l.b16 %v2020
    %v2104 = vunpack.c.h.b16 %v2020
    %v2105 = vunpack.c.l.b16 %v2021
    %v2106 = vunpack.c.h.b16 %v2021
    %v2107 = vunpack.c.l.b16 %v2022
    %v2108 = vunpack.c.h.b16 %v2022
    %v2109 = vunpack.c.l.b16 %v2023
    %v2110 = vunpack.c.h.b16 %v2023
    %v2111 = vunpack.c.l.b16 %v2024
    %v2112 = vunpack.c.h.b16 %v2024
    %v2113 = vunpack.c.l.b16 %v2025
    %v2114 = vunpack.c.h.b16 %v2025
    %v2115 = vunpack.c.l.b16 %v2026
    %v2116 = vunpack.c.h.b16 %v2026
    %v2117 = vunpack.c.l.b16 %v2027
    %v2118 = vunpack.c.h.b16 %v2027
    %v2119 = vunpack.c.l.b16 %v2028
    %v2120 = vunpack.c.h.b16 %v2028
    %v2121 = vunpack.c.l.b16 %v2029
    %v2122 = vunpack.c.h.b16 %v2029
    %v2123 = vunpack.c.l.b16 %v2030
    %v2124 = vunpack.c.h.b16 %v2030
    %v2125 = vunpack.c.l.b16 %v2031
    %v2126 = vunpack.c.h.b16 %v2031
    %v2127 = vunpack.c.l.b16 %v2032
    %v2128 = vunpack.c.h.b16 %v2032
    %v2129 = vpack.c.b16 %v2069, %v2065
    %v2130 = vpack.c.b16 %v2070, %v2066
    %v2131 = vpack.c.b16 %v2071, %v2067
    %v2132 = vpack.c.b16 %v2072, %v2068
    %v2133 = vpack.c.b16 %v2077, %v2073
    %v2134 = vpack.c.b16 %v2078, %v2074
    %v2135 = vpack.c.b16 %v2079, %v2075
    %v2136 = vpack.c.b16 %v2080, %v2076
    %v2137 = vpack.c.b16 %v2085, %v2081
    %v2138 = vpack.c.b16 %v2086, %v2082
    %v2139 = vpack.c.b16 %v2087, %v2083
    %v2140 = vpack.c.b16 %v2088, %v2084
    %v2141 = vpack.c.b16 %v2093, %v2089
    %v2142 = vpack.c.b16 %v2094, %v2090
    %v2143 = vpack.c.b16 %v2095, %v2091
    %v2144 = vpack.c.b16 %v2096, %v2092
    %v2145 = vpack.c.b16 %v2101, %v2097
    %v2146 = vpack.c.b16 %v2102, %v2098
    %v2147 = vpack.c.b16 %v2103, %v2099
    %v2148 = vpack.c.b16 %v2104, %v2100
    %v2149 = vpack.c.b16 %v2109, %v2105
    %v2150 = vpack.c.b16 %v2110, %v2106
    %v2151 = vpack.c.b16 %v2111, %v2107
    %v2152 = vpack.c.b16 %v2112, %v2108
    %v2153 = vpack.c.b16 %v2117, %v2113
    %v2154 = vpack.c.b16 %v2118, %v2114
    %v2155 = vpack.c.b16 %v2119, %v2115
    %v2156 = vpack.c.b16 %v2120, %v2116
    %v2157 = vpack.c.b16 %v2125, %v2121
    %v2158 = vpack.c.b16 %v2126, %v2122
    %v2159 = vpack.c.b16 %v2127, %v2123
    %v2160 = vpack.c.b16 %v2128, %v2124
    %2193 = vmatpush.bf16.msra.mxu0 %v2157
    %2194 = vmatpush.bf16.msra.mxu0 %v2153
    %2195 = vmatpush.bf16.msra.mxu0 %v2149
    %2196 = vmatpush.bf16.msra.mxu0 %v2145
    %2197 = vmatpush.bf16.msra.mxu0 %v2141
    %2198 = vmatpush.bf16.msra.mxu0 %v2137
    %2199 = vmatpush.bf16.msra.mxu0 %v2133
    %2200 = vmatpush.bf16.msra.mxu0 %v2129
    %2201 = vmatmul.bf16.gmra.mxu0 %v2000
    %v2202 = vpop.f32.mrf.mxu0
    %v2203 = vadd.f32 0.0, %v2202
    %v2204 = vpop.f32.mrf.mxu0
    %2205 = vdwg.mxu0
    %2206 = vmatpush.bf16.msra.mxu0 %v2158
    %2207 = vmatpush.bf16.msra.mxu0 %v2154
    %2208 = vmatpush.bf16.msra.mxu0 %v2150
    %2209 = vmatpush.bf16.msra.mxu0 %v2146
    %2210 = vmatpush.bf16.msra.mxu0 %v2142
    %2211 = vmatpush.bf16.msra.mxu0 %v2138
    %2212 = vmatpush.bf16.msra.mxu0 %v2134
    %2213 = vmatpush.bf16.msra.mxu0 %v2130
    %2214 = vmatmul.bf16.gmra.mxu0 %v2000
    %v2215 = vpop.f32.mrf.mxu0
    %v2216 = vadd.f32 0.0, %v2215
    %v2217 = vpop.f32.mrf.mxu0
    %2218 = vdwg.mxu0
    %2219 = vmatpush.bf16.msra.mxu0 %v2159
    %2220 = vmatpush.bf16.msra.mxu0 %v2155
    %2221 = vmatpush.bf16.msra.mxu0 %v2151
    %2222 = vmatpush.bf16.msra.mxu0 %v2147
    %2223 = vmatpush.bf16.msra.mxu0 %v2143
    %2224 = vmatpush.bf16.msra.mxu0 %v2139
    %2225 = vmatpush.bf16.msra.mxu0 %v2135
    %2226 = vmatpush.bf16.msra.mxu0 %v2131
    %2227 = vmatmul.bf16.gmra.mxu0 %v2000
    %v2228 = vpop.f32.mrf.mxu0
    %v2229 = vadd.f32 0.0, %v2228
    %v2230 = vpop.f32.mrf.mxu0
    %2231 = vdwg.mxu0
    %2232 = vmatpush.bf16.msra.mxu0 %v2160
    %2233 = vmatpush.bf16.msra.mxu0 %v2156
    %2234 = vmatpush.bf16.msra.mxu0 %v2152
    %2235 = vmatpush.bf16.msra.mxu0 %v2148
    %2236 = vmatpush.bf16.msra.mxu0 %v2144
    %2237 = vmatpush.bf16.msra.mxu0 %v2140
    %2238 = vmatpush.bf16.msra.mxu0 %v2136
    %2239 = vmatpush.bf16.msra.mxu0 %v2132
    %2240 = vmatmul.bf16.gmra.mxu0 %v2000
    %v2241 = vpop.f32.mrf.mxu0
    %v2242 = vadd.f32 0.0, %v2241
    %v2243 = vpop.f32.mrf.mxu0
    %2244 = vdwg.mxu0
    %v2245 = vadd.f32 %v1995, %v2203
    %v2246 = vadd.f32 %v1996, %v2216
    %v2247 = vadd.f32 %v1997, %v2229
    %v2248 = vadd.f32 %v1998, %v2242
    %v2249 = vxor.u32 %v2245, 2147483648
    %v2250 = vmul.f32 %v2249, 1.442695
    %v2251 = vpow.pop %v2250
    %v2252 = vadd.f32 %v2251, 1.0
    %v2253 = vrcp.pop %v2252
    %v2254 = vmul.f32 %v2252, %v2253
    %v2255 = vsub.f32 1.0, %v2254
    %v2256 = vmul.f32 %v2253, %v2255
    %v2257 = vadd.f32 %v2253, %v2256
    %vm2258 = vweird.f32 %v2252
    %vm2259 = vweird.f32 %v2253
    %vm2260 = vmor %vm2258, %vm2259
    %v2261 = vsel %vm2260, %v2253, %v2257
    %v2262 = vand.u32 2147483647, %v2252
    %vm2263 = vcmp.eq.f32.partialorder %v2262, 8.507059e+37
    %v2264 = vand.u32 %v2252, 2147483648
    %v2265 = vor.u32 1.1754944e-38, %v2264
    %v2266 = vsel %vm2263, %v2265, %v2261
    %v2267 = vmul.f32 1.0, %v2266
    %v2268 = vxor.u32 %v2246, 2147483648
    %v2269 = vmul.f32 %v2268, 1.442695
    %v2270 = vpow.pop %v2269
    %v2271 = vadd.f32 %v2270, 1.0
    %v2272 = vrcp.pop %v2271
    %v2273 = vmul.f32 %v2271, %v2272
    %v2274 = vsub.f32 1.0, %v2273
    %v2275 = vmul.f32 %v2272, %v2274
    %v2276 = vadd.f32 %v2272, %v2275
    %vm2277 = vweird.f32 %v2271
    %vm2278 = vweird.f32 %v2272
    %vm2279 = vmor %vm2277, %vm2278
    %v2280 = vsel %vm2279, %v2272, %v2276
    %v2281 = vand.u32 2147483647, %v2271
    %vm2282 = vcmp.eq.f32.partialorder %v2281, 8.507059e+37
    %v2283 = vand.u32 %v2271, 2147483648
    %v2284 = vor.u32 1.1754944e-38, %v2283
    %v2285 = vsel %vm2282, %v2284, %v2280
    %v2286 = vmul.f32 1.0, %v2285
    %v2287 = vtanh.pop %v2247
    %v2288 = vxor.u32 %v2248, 2147483648
    %v2289 = vmul.f32 %v2288, 1.442695
    %v2290 = vpow.pop %v2289
    %v2291 = vadd.f32 %v2290, 1.0
    %v2292 = vrcp.pop %v2291
    %v2293 = vmul.f32 %v2291, %v2292
    %v2294 = vsub.f32 1.0, %v2293
    %v2295 = vmul.f32 %v2292, %v2294
    %v2296 = vadd.f32 %v2292, %v2295
    %vm2297 = vweird.f32 %v2291
    %vm2298 = vweird.f32 %v2292
    %vm2299 = vmor %vm2297, %vm2298
    %v2300 = vsel %vm2299, %v2292, %v2296
    %v2301 = vand.u32 2147483647, %v2291
    %vm2302 = vcmp.eq.f32.partialorder %v2301, 8.507059e+37
    %v2303 = vand.u32 %v2291, 2147483648
    %v2304 = vor.u32 1.1754944e-38, %v2303
    %v2305 = vsel %vm2302, %v2304, %v2300
    %v2306 = vmul.f32 1.0, %v2305
    %v2307 = vld [vmem:[#allocation3] sm:$0xff]
    %v2308 = vmul.f32 %v2286, %v2307
    %v2309 = vmul.f32 %v2267, %v2287
    %v2310 = vadd.f32 %v2308, %v2309
    %v2311 = vtanh.pop %v2310
    %v2312 = vmul.f32 %v2306, %v2311
    %2313 = vst [vmem:[#allocation3] sm:$0xff] %v2310
    %2314 = vst [vmem:[#allocation2] sm:$0xff] %v2312
    %s2315 = scalar_lea.vmem %s4, 48
    %2316 = vst [vmem:[%s2315] sm:$0xff] %v2312
    %s2317 = scalar_lea.vmem %s0, 112
    %v2318 = vld [vmem:[%s2317] sm:$0xff]
    %v2319 = vld [vmem:[%s2317 + $0x8] sm:$0xff]
    %v2320 = vunpack.c.l.bf16 %v2318
    %v2321 = vunpack.c.h.bf16 %v2318
    %v2322 = vunpack.c.l.bf16 %v2319
    %v2323 = vunpack.c.h.bf16 %v2319
    %v2324 = vld [vmem:[#allocation2] sm:$0xff]
    %v2325 = vpack.c.bf16 %v2324, %v2324
    %v2326 = vld [vmem:[#allocation4] sm:$0xff]
    %v2327 = vld [vmem:[#allocation4 + $0x8] sm:$0xff]
    %v2328 = vld [vmem:[#allocation4 + $0x10] sm:$0xff]
    %v2329 = vld [vmem:[#allocation4 + $0x18] sm:$0xff]
    %v2330 = vld [vmem:[#allocation4 + $0x20] sm:$0xff]
    %v2331 = vld [vmem:[#allocation4 + $0x28] sm:$0xff]
    %v2332 = vld [vmem:[#allocation4 + $0x30] sm:$0xff]
    %v2333 = vld [vmem:[#allocation4 + $0x38] sm:$0xff]
    %v2334 = vld [vmem:[#allocation4 + $0x40] sm:$0xff]
    %v2335 = vld [vmem:[#allocation4 + $0x48] sm:$0xff]
    %v2336 = vld [vmem:[#allocation4 + $0x50] sm:$0xff]
    %v2337 = vld [vmem:[#allocation4 + $0x58] sm:$0xff]
    %v2338 = vld [vmem:[#allocation4 + $0x60] sm:$0xff]
    %v2339 = vld [vmem:[#allocation4 + $0x68] sm:$0xff]
    %v2340 = vld [vmem:[#allocation4 + $0x70] sm:$0xff]
    %v2341 = vld [vmem:[#allocation4 + $0x78] sm:$0xff]
    %v2342 = vld [vmem:[#allocation4 + $0x80] sm:$0xff]
    %v2343 = vld [vmem:[#allocation4 + $0x88] sm:$0xff]
    %v2344 = vld [vmem:[#allocation4 + $0x90] sm:$0xff]
    %v2345 = vld [vmem:[#allocation4 + $0x98] sm:$0xff]
    %v2346 = vld [vmem:[#allocation4 + $0xa0] sm:$0xff]
    %v2347 = vld [vmem:[#allocation4 + $0xa8] sm:$0xff]
    %v2348 = vld [vmem:[#allocation4 + $0xb0] sm:$0xff]
    %v2349 = vld [vmem:[#allocation4 + $0xb8] sm:$0xff]
    %v2350 = vld [vmem:[#allocation4 + $0xc0] sm:$0xff]
    %v2351 = vld [vmem:[#allocation4 + $0xc8] sm:$0xff]
    %v2352 = vld [vmem:[#allocation4 + $0xd0] sm:$0xff]
    %v2353 = vld [vmem:[#allocation4 + $0xd8] sm:$0xff]
    %v2354 = vld [vmem:[#allocation4 + $0xe0] sm:$0xff]
    %v2355 = vld [vmem:[#allocation4 + $0xe8] sm:$0xff]
    %v2356 = vld [vmem:[#allocation4 + $0xf0] sm:$0xff]
    %v2357 = vld [vmem:[#allocation4 + $0xf8] sm:$0xff]
    %v2390 = vunpack.c.l.b16 %v2326
    %v2391 = vunpack.c.h.b16 %v2326
    %v2392 = vunpack.c.l.b16 %v2327
    %v2393 = vunpack.c.h.b16 %v2327
    %v2394 = vunpack.c.l.b16 %v2328
    %v2395 = vunpack.c.h.b16 %v2328
    %v2396 = vunpack.c.l.b16 %v2329
    %v2397 = vunpack.c.h.b16 %v2329
    %v2398 = vunpack.c.l.b16 %v2330
    %v2399 = vunpack.c.h.b16 %v2330
    %v2400 = vunpack.c.l.b16 %v2331
    %v2401 = vunpack.c.h.b16 %v2331
    %v2402 = vunpack.c.l.b16 %v2332
    %v2403 = vunpack.c.h.b16 %v2332
    %v2404 = vunpack.c.l.b16 %v2333
    %v2405 = vunpack.c.h.b16 %v2333
    %v2406 = vunpack.c.l.b16 %v2334
    %v2407 = vunpack.c.h.b16 %v2334
    %v2408 = vunpack.c.l.b16 %v2335
    %v2409 = vunpack.c.h.b16 %v2335
    %v2410 = vunpack.c.l.b16 %v2336
    %v2411 = vunpack.c.h.b16 %v2336
    %v2412 = vunpack.c.l.b16 %v2337
    %v2413 = vunpack.c.h.b16 %v2337
    %v2414 = vunpack.c.l.b16 %v2338
    %v2415 = vunpack.c.h.b16 %v2338
    %v2416 = vunpack.c.l.b16 %v2339
    %v2417 = vunpack.c.h.b16 %v2339
    %v2418 = vunpack.c.l.b16 %v2340
    %v2419 = vunpack.c.h.b16 %v2340
    %v2420 = vunpack.c.l.b16 %v2341
    %v2421 = vunpack.c.h.b16 %v2341
    %v2422 = vunpack.c.l.b16 %v2342
    %v2423 = vunpack.c.h.b16 %v2342
    %v2424 = vunpack.c.l.b16 %v2343
    %v2425 = vunpack.c.h.b16 %v2343
    %v2426 = vunpack.c.l.b16 %v2344
    %v2427 = vunpack.c.h.b16 %v2344
    %v2428 = vunpack.c.l.b16 %v2345
    %v2429 = vunpack.c.h.b16 %v2345
    %v2430 = vunpack.c.l.b16 %v2346
    %v2431 = vunpack.c.h.b16 %v2346
    %v2432 = vunpack.c.l.b16 %v2347
    %v2433 = vunpack.c.h.b16 %v2347
    %v2434 = vunpack.c.l.b16 %v2348
    %v2435 = vunpack.c.h.b16 %v2348
    %v2436 = vunpack.c.l.b16 %v2349
    %v2437 = vunpack.c.h.b16 %v2349
    %v2438 = vunpack.c.l.b16 %v2350
    %v2439 = vunpack.c.h.b16 %v2350
    %v2440 = vunpack.c.l.b16 %v2351
    %v2441 = vunpack.c.h.b16 %v2351
    %v2442 = vunpack.c.l.b16 %v2352
    %v2443 = vunpack.c.h.b16 %v2352
    %v2444 = vunpack.c.l.b16 %v2353
    %v2445 = vunpack.c.h.b16 %v2353
    %v2446 = vunpack.c.l.b16 %v2354
    %v2447 = vunpack.c.h.b16 %v2354
    %v2448 = vunpack.c.l.b16 %v2355
    %v2449 = vunpack.c.h.b16 %v2355
    %v2450 = vunpack.c.l.b16 %v2356
    %v2451 = vunpack.c.h.b16 %v2356
    %v2452 = vunpack.c.l.b16 %v2357
    %v2453 = vunpack.c.h.b16 %v2357
    %v2454 = vpack.c.b16 %v2394, %v2390
    %v2455 = vpack.c.b16 %v2395, %v2391
    %v2456 = vpack.c.b16 %v2396, %v2392
    %v2457 = vpack.c.b16 %v2397, %v2393
    %v2458 = vpack.c.b16 %v2402, %v2398
    %v2459 = vpack.c.b16 %v2403, %v2399
    %v2460 = vpack.c.b16 %v2404, %v2400
    %v2461 = vpack.c.b16 %v2405, %v2401
    %v2462 = vpack.c.b16 %v2410, %v2406
    %v2463 = vpack.c.b16 %v2411, %v2407
    %v2464 = vpack.c.b16 %v2412, %v2408
    %v2465 = vpack.c.b16 %v2413, %v2409
    %v2466 = vpack.c.b16 %v2418, %v2414
    %v2467 = vpack.c.b16 %v2419, %v2415
    %v2468 = vpack.c.b16 %v2420, %v2416
    %v2469 = vpack.c.b16 %v2421, %v2417
    %v2470 = vpack.c.b16 %v2426, %v2422
    %v2471 = vpack.c.b16 %v2427, %v2423
    %v2472 = vpack.c.b16 %v2428, %v2424
    %v2473 = vpack.c.b16 %v2429, %v2425
    %v2474 = vpack.c.b16 %v2434, %v2430
    %v2475 = vpack.c.b16 %v2435, %v2431
    %v2476 = vpack.c.b16 %v2436, %v2432
    %v2477 = vpack.c.b16 %v2437, %v2433
    %v2478 = vpack.c.b16 %v2442, %v2438
    %v2479 = vpack.c.b16 %v2443, %v2439
    %v2480 = vpack.c.b16 %v2444, %v2440
    %v2481 = vpack.c.b16 %v2445, %v2441
    %v2482 = vpack.c.b16 %v2450, %v2446
    %v2483 = vpack.c.b16 %v2451, %v2447
    %v2484 = vpack.c.b16 %v2452, %v2448
    %v2485 = vpack.c.b16 %v2453, %v2449
    %2518 = vmatpush.bf16.msra.mxu0 %v2482
    %2519 = vmatpush.bf16.msra.mxu0 %v2478
    %2520 = vmatpush.bf16.msra.mxu0 %v2474
    %2521 = vmatpush.bf16.msra.mxu0 %v2470
    %2522 = vmatpush.bf16.msra.mxu0 %v2466
    %2523 = vmatpush.bf16.msra.mxu0 %v2462
    %2524 = vmatpush.bf16.msra.mxu0 %v2458
    %2525 = vmatpush.bf16.msra.mxu0 %v2454
    %2526 = vmatmul.bf16.gmra.mxu0 %v2325
    %v2527 = vpop.f32.mrf.mxu0
    %v2528 = vadd.f32 0.0, %v2527
    %v2529 = vpop.f32.mrf.mxu0
    %2530 = vdwg.mxu0
    %2531 = vmatpush.bf16.msra.mxu0 %v2483
    %2532 = vmatpush.bf16.msra.mxu0 %v2479
    %2533 = vmatpush.bf16.msra.mxu0 %v2475
    %2534 = vmatpush.bf16.msra.mxu0 %v2471
    %2535 = vmatpush.bf16.msra.mxu0 %v2467
    %2536 = vmatpush.bf16.msra.mxu0 %v2463
    %2537 = vmatpush.bf16.msra.mxu0 %v2459
    %2538 = vmatpush.bf16.msra.mxu0 %v2455
    %2539 = vmatmul.bf16.gmra.mxu0 %v2325
    %v2540 = vpop.f32.mrf.mxu0
    %v2541 = vadd.f32 0.0, %v2540
    %v2542 = vpop.f32.mrf.mxu0
    %2543 = vdwg.mxu0
    %2544 = vmatpush.bf16.msra.mxu0 %v2484
    %2545 = vmatpush.bf16.msra.mxu0 %v2480
    %2546 = vmatpush.bf16.msra.mxu0 %v2476
    %2547 = vmatpush.bf16.msra.mxu0 %v2472
    %2548 = vmatpush.bf16.msra.mxu0 %v2468
    %2549 = vmatpush.bf16.msra.mxu0 %v2464
    %2550 = vmatpush.bf16.msra.mxu0 %v2460
    %2551 = vmatpush.bf16.msra.mxu0 %v2456
    %2552 = vmatmul.bf16.gmra.mxu0 %v2325
    %v2553 = vpop.f32.mrf.mxu0
    %v2554 = vadd.f32 0.0, %v2553
    %v2555 = vpop.f32.mrf.mxu0
    %2556 = vdwg.mxu0
    %2557 = vmatpush.bf16.msra.mxu0 %v2485
    %2558 = vmatpush.bf16.msra.mxu0 %v2481
    %2559 = vmatpush.bf16.msra.mxu0 %v2477
    %2560 = vmatpush.bf16.msra.mxu0 %v2473
    %2561 = vmatpush.bf16.msra.mxu0 %v2469
    %2562 = vmatpush.bf16.msra.mxu0 %v2465
    %2563 = vmatpush.bf16.msra.mxu0 %v2461
    %2564 = vmatpush.bf16.msra.mxu0 %v2457
    %2565 = vmatmul.bf16.gmra.mxu0 %v2325
    %v2566 = vpop.f32.mrf.mxu0
    %v2567 = vadd.f32 0.0, %v2566
    %v2568 = vpop.f32.mrf.mxu0
    %2569 = vdwg.mxu0
    %v2570 = vadd.f32 %v2320, %v2528
    %v2571 = vadd.f32 %v2321, %v2541
    %v2572 = vadd.f32 %v2322, %v2554
    %v2573 = vadd.f32 %v2323, %v2567
    %v2574 = vxor.u32 %v2570, 2147483648
    %v2575 = vmul.f32 %v2574, 1.442695
    %v2576 = vpow.pop %v2575
    %v2577 = vadd.f32 %v2576, 1.0
    %v2578 = vrcp.pop %v2577
    %v2579 = vmul.f32 %v2577, %v2578
    %v2580 = vsub.f32 1.0, %v2579
    %v2581 = vmul.f32 %v2578, %v2580
    %v2582 = vadd.f32 %v2578, %v2581
    %vm2583 = vweird.f32 %v2577
    %vm2584 = vweird.f32 %v2578
    %vm2585 = vmor %vm2583, %vm2584
    %v2586 = vsel %vm2585, %v2578, %v2582
    %v2587 = vand.u32 2147483647, %v2577
    %vm2588 = vcmp.eq.f32.partialorder %v2587, 8.507059e+37
    %v2589 = vand.u32 %v2577, 2147483648
    %v2590 = vor.u32 1.1754944e-38, %v2589
    %v2591 = vsel %vm2588, %v2590, %v2586
    %v2592 = vmul.f32 1.0, %v2591
    %v2593 = vxor.u32 %v2571, 2147483648
    %v2594 = vmul.f32 %v2593, 1.442695
    %v2595 = vpow.pop %v2594
    %v2596 = vadd.f32 %v2595, 1.0
    %v2597 = vrcp.pop %v2596
    %v2598 = vmul.f32 %v2596, %v2597
    %v2599 = vsub.f32 1.0, %v2598
    %v2600 = vmul.f32 %v2597, %v2599
    %v2601 = vadd.f32 %v2597, %v2600
    %vm2602 = vweird.f32 %v2596
    %vm2603 = vweird.f32 %v2597
    %vm2604 = vmor %vm2602, %vm2603
    %v2605 = vsel %vm2604, %v2597, %v2601
    %v2606 = vand.u32 2147483647, %v2596
    %vm2607 = vcmp.eq.f32.partialorder %v2606, 8.507059e+37
    %v2608 = vand.u32 %v2596, 2147483648
    %v2609 = vor.u32 1.1754944e-38, %v2608
    %v2610 = vsel %vm2607, %v2609, %v2605
    %v2611 = vmul.f32 1.0, %v2610
    %v2612 = vtanh.pop %v2572
    %v2613 = vxor.u32 %v2573, 2147483648
    %v2614 = vmul.f32 %v2613, 1.442695
    %v2615 = vpow.pop %v2614
    %v2616 = vadd.f32 %v2615, 1.0
    %v2617 = vrcp.pop %v2616
    %v2618 = vmul.f32 %v2616, %v2617
    %v2619 = vsub.f32 1.0, %v2618
    %v2620 = vmul.f32 %v2617, %v2619
    %v2621 = vadd.f32 %v2617, %v2620
    %vm2622 = vweird.f32 %v2616
    %vm2623 = vweird.f32 %v2617
    %vm2624 = vmor %vm2622, %vm2623
    %v2625 = vsel %vm2624, %v2617, %v2621
    %v2626 = vand.u32 2147483647, %v2616
    %vm2627 = vcmp.eq.f32.partialorder %v2626, 8.507059e+37
    %v2628 = vand.u32 %v2616, 2147483648
    %v2629 = vor.u32 1.1754944e-38, %v2628
    %v2630 = vsel %vm2627, %v2629, %v2625
    %v2631 = vmul.f32 1.0, %v2630
    %v2632 = vld [vmem:[#allocation3] sm:$0xff]
    %v2633 = vmul.f32 %v2611, %v2632
    %v2634 = vmul.f32 %v2592, %v2612
    %v2635 = vadd.f32 %v2633, %v2634
    %v2636 = vtanh.pop %v2635
    %v2637 = vmul.f32 %v2631, %v2636
    %2638 = vst [vmem:[#allocation3] sm:$0xff] %v2635
    %2639 = vst [vmem:[#allocation2] sm:$0xff] %v2637
    %s2640 = scalar_lea.vmem %s4, 56
    %2641 = vst [vmem:[%s2640] sm:$0xff] %v2637
    // Predicated region
    $region26: #{lstm_module_forward.6} parent=1 // pred_check
      %p2642 = pneg %p36
    $region27: #{lstm_module_forward.6} parent=1 // pred_check_branch
      %2644 = sbr.rel (%p2642) target = $region29
    $region28: #{lstm_module_forward.6} parent=1 // pred_region
      %v2645 = vld [vmem:[#allocation2] sm:$0xff]
      %2646 = vst [vmem:[%s5] sm:$0xff] %v2645
      %v2647 = vld [vmem:[#allocation3] sm:$0xff]
      %2648 = vst [vmem:[%s6] sm:$0xff] %v2647
    $region29: #{lstm_module_forward.6} parent=1 // pred_fallthru
      _
    // Predicated region
    $region30: #{lstm_module_forward.6} parent=1 // pred_check
      _
    $region31: #{lstm_module_forward.6} parent=1 // pred_check_branch
      %2650 = sbr.rel (0) target = $region33
    $region32: #{lstm_module_forward.6} parent=1 // pred_region
      _
    $region33: #{lstm_module_forward.6} parent=1 // pred_fallthru
      _
    // Predicated region
    $region34: #{lstm_module_forward.6} parent=1 // pred_check
      _
    $region35: #{lstm_module_forward.6} parent=1 // pred_check_branch
      %2652 = sbr.rel (0) target = $region37
    $region36: #{lstm_module_forward.6} parent=1 // pred_region
      _
    $region37: #{lstm_module_forward.6} parent=1 // pred_fallthru
      _
    // Predicated region
    $region38: #{lstm_module_forward.6} parent=1 // pred_check
      _
    $region39: #{lstm_module_forward.6} parent=1 // pred_check_branch
      %2654 = sbr.rel (0) target = $region41
    $region40: #{lstm_module_forward.6} parent=1 // pred_region
      _
    $region41: #{lstm_module_forward.6} parent=1 // pred_fallthru
      _
    // Predicated region
    $region42: #{lstm_module_forward.6} parent=1 // pred_check
      _
    $region43: #{lstm_module_forward.6} parent=1 // pred_check_branch
      %2656 = sbr.rel (0) target = $region45
    $region44: #{lstm_module_forward.6} parent=1 // pred_region
      _
    $region45: #{lstm_module_forward.6} parent=1 // pred_fallthru
      _
    // Predicated region
    $region46: #{lstm_module_forward.6} parent=1 // pred_check
      _
    $region47: #{lstm_module_forward.6} parent=1 // pred_check_branch
      %2658 = sbr.rel (0) target = $region49
    $region48: #{lstm_module_forward.6} parent=1 // pred_region
      _
    $region49: #{lstm_module_forward.6} parent=1 // pred_fallthru
      _
    // Predicated region
    $region50: #{lstm_module_forward.6} parent=1 // pred_check
      _
    $region51: #{lstm_module_forward.6} parent=1 // pred_check_branch
      %2660 = sbr.rel (0) target = $region53
    $region52: #{lstm_module_forward.6} parent=1 // pred_region
      _
    $region53: #{lstm_module_forward.6} parent=1 // pred_fallthru
      _
    %2661 = vsyncpa [#allocation5], 1

</llo_original>
